<compile_context>
chip_gen: v7x
topology: tpu7x:2x2x1
jax: 0.10.0
libtpu: 0.0.40
codegen_flags: <defaults>
</compile_context>

<pallas_src>
import functools

import numpy as np
import jax
import jax.numpy as jnp
from jax.experimental import pallas as pl
from jax.experimental.pallas import tpu as pltpu

OUT_D, OUT_H, OUT_W = 3, 224, 224  # fixed AdaptiveAvgPool3d target


def _adaptive_windows(in_size, out_size):
    """PyTorch adaptive-pool windows: [floor(i*in/out), ceil((i+1)*in/out))."""
    wins = []
    for i in range(out_size):
        s = (i * in_size) // out_size
        e = -((-(i + 1) * in_size) // out_size)  # ceil((i+1)*in/out)
        wins.append((s, e - s))
    return tuple(wins)


def _pool_matrix(in_size, out_size):
    """(out_size, in_size) matrix; row i holds 1/len over its adaptive window."""
    m = np.zeros((out_size, in_size), dtype=np.float32)
    for i, (s, l) in enumerate(_adaptive_windows(in_size, out_size)):
        m[i, s:s + l] = 1.0 / l
    return m


def _depth_pool_kernel(x_ref, o_ref, *, d_windows):
    """H/W already at target; average over (static) adaptive depth windows.

    x_ref: (bt, d_span, H, W)   VMEM
    o_ref: (bt, n_out_d, H, W)  VMEM
    """
    for od, (ds, dl) in enumerate(d_windows):
        if dl == 1:
            # Pure pass-through slice: single slab copy, no casts / scales.
            o_ref[:, od] = x_ref[:, ds].astype(o_ref.dtype)
        else:
            acc = x_ref[:, ds].astype(jnp.float32)
            for k in range(1, dl):
                acc = acc + x_ref[:, ds + k].astype(jnp.float32)
            o_ref[:, od] = (acc * (1.0 / dl)).astype(o_ref.dtype)


def _spatial_pool_kernel(x_ref, ph_ref, pw_ref, o_ref, *, d_windows):
    """General case: depth windows + H/W pooling as  P_h @ X @ P_w  matmuls.

    x_ref:  (bt, d_span, h_in, w_in)
    ph_ref: (out_h, h_in)   rows hold 1/len_h  (VMEM-resident across steps)
    pw_ref: (w_in, out_w)   cols hold 1/len_w
    o_ref:  (bt, n_out_d, out_h, out_w)
    """
    bt = x_ref.shape[0]
    p_h = ph_ref[...]
    p_w = pw_ref[...]
    for od, (ds, dl) in enumerate(d_windows):
        acc = x_ref[:, ds].astype(jnp.float32)
        for k in range(1, dl):
            acc = acc + x_ref[:, ds + k].astype(jnp.float32)
        inv_d = 1.0 / dl
        for b in range(bt):
            t = jnp.dot(acc[b], p_w,
                        precision=jax.lax.Precision.HIGHEST,
                        preferred_element_type=jnp.float32)   # (h_in, out_w)
            z = jnp.dot(p_h, t,
                        precision=jax.lax.Precision.HIGHEST,
                        preferred_element_type=jnp.float32)   # (out_h, out_w)
            if dl > 1:
                z = z * inv_d
            o_ref[b, od] = z.astype(o_ref.dtype)


def adaptive_avg_pool3d_pallas(x, out_dhw=(OUT_D, OUT_H, OUT_W)):
    """x: (N, C, D_in, H_in, W_in) -> (N, C, out_d, out_h, out_w)."""
    n, c, d_in, h_in, w_in = x.shape
    out_d, out_h, out_w = out_dhw
    nc = n * c
    x_flat = x.reshape(nc, d_in, h_in, w_in)       # leading-dim merge: free

    spatial = (h_in != out_h) or (w_in != out_w)
    d_windows_all = _adaptive_windows(d_in, out_d)

    # --- Tile sizing: largest (n*c) group whose input+output blocks fit a
    #     ~12 MiB per-copy budget (x2 double-buffered -> ~24 MiB, safe even on
    #     v7x's 64 MiB physical VMEM). ---
    itemsize = jnp.dtype(x.dtype).itemsize

    def tile_bytes(rows, cols):
        return (pl.cdiv(rows, 8) * 8) * (pl.cdiv(cols, 128) * 128) * itemsize

    in_row = d_in * tile_bytes(h_in, w_in)
    out_row = out_d * tile_bytes(out_h, out_w)
    budget = 12 * 1024 * 1024

    if in_row + out_row <= budget:
        bt = 1
        for g in range(1, nc + 1):
            if nc % g == 0 and g * (in_row + out_row) <= budget:
                bt = g
        d_steps, d_span, d_out_blk = 1, d_in, out_d
        blk_windows = d_windows_all
    else:
        # Very large spatial extents: one output-depth slab per grid step
        # (needs a uniform depth split so a static block covers each window).
        if d_in % out_d:
            # TODO(synk): huge-spatial + non-uniform depth windows needs a
            #             manual-DMA (pl.ANY) path; not implemented.
            raise NotImplementedError(
                "huge-spatial inputs with non-uniform depth windows")
        # TODO(synk): a single (rd, H, W) slab may still exceed VMEM for
        #             extremely large D or H*W.
        rd = d_in // out_d
        bt, d_steps, d_span, d_out_blk = 1, out_d, rd, 1
        blk_windows = ((0, rd),)

    x_spec = pl.BlockSpec((bt, d_span, h_in, w_in), lambda i, j: (i, j, 0, 0))
    o_spec = pl.BlockSpec((bt, d_out_blk, out_h, out_w),
                          lambda i, j: (i, j, 0, 0))
    out_shape = jax.ShapeDtypeStruct((nc, out_d, out_h, out_w), x.dtype)
    cparams = pltpu.CompilerParams(
        dimension_semantics=("parallel", "parallel"),
        vmem_limit_bytes=48 * 1024 * 1024,
    )

    if not spatial:
        kernel = functools.partial(_depth_pool_kernel, d_windows=blk_windows)
        out_flat = pl.pallas_call(
            kernel,
            out_shape=out_shape,
            grid=(nc // bt, d_steps),
            in_specs=[x_spec],
            out_specs=o_spec,
            compiler_params=cparams,
        )(x_flat)
    else:
        p_h = jnp.asarray(_pool_matrix(h_in, out_h))       # (out_h, h_in)
        p_w = jnp.asarray(_pool_matrix(w_in, out_w).T)     # (w_in, out_w)
        kernel = functools.partial(_spatial_pool_kernel, d_windows=blk_windows)
        out_flat = pl.pallas_call(
            kernel,
            out_shape=out_shape,
            grid=(nc // bt, d_steps),
            in_specs=[
                x_spec,
                pl.BlockSpec((out_h, h_in), lambda i, j: (0, 0)),
                pl.BlockSpec((w_in, out_w), lambda i, j: (0, 0)),
            ],
            out_specs=o_spec,
            compiler_params=cparams,
        )(x_flat, p_h, p_w)

    return out_flat.reshape(n, c, out_d, out_h, out_w)


def custom_net_forward(x, base_net=None):
    """Mirrors CustomNet.forward: pool, then base_net (eval / no-grad)."""
    x_mod = adaptive_avg_pool3d_pallas(x)
    # TODO(synk): base_net is an arbitrary user-supplied module (None by
    #             default); treated as identity since no architecture is given.
    if base_net is not None:
        return base_net(x_mod)
    return x_mod


if __name__ == "__main__":
    key = jax.random.PRNGKey(0)
    k1, k2, k3, k4 = jax.random.split(key, 4)

    # Case 1 (hot path): depth-only pooling 6 -> 3, H/W already at 224.
    x1 = jax.random.normal(k1, (2, 4, 6, 224, 224), dtype=jnp.float32)
    o1 = jax.block_until_ready(custom_net_forward(x1))
    r1 = x1.reshape(2, 4, 3, 2, 224, 224).mean(axis=3)
    assert o1.shape == (2, 4, 3, 224, 224)
    assert jnp.allclose(o1, r1, atol=1e-5, rtol=1e-5)

    # Case 2: uniform 2x2 spatial pooling via pooling-matrix MXU matmuls.
    x2 = jax.random.normal(k2, (1, 2, 3, 448, 448), dtype=jnp.float32)
    o2 = jax.block_until_ready(custom_net_forward(x2))
    r2 = x2.reshape(1, 2, 3, 1, 224, 2, 224, 2).mean(axis=(3, 5, 7))
    assert o2.shape == (1, 2, 3, 224, 224)
    assert jnp.allclose(o2, r2, atol=1e-3, rtol=1e-3)

    # Case 3: non-divisible (overlapping) adaptive depth windows, 7 -> 3.
    x3 = jax.random.normal(k3, (1, 2, 7, 224, 224), dtype=jnp.float32)
    o3 = jax.block_until_ready(custom_net_forward(x3))
    r3 = jnp.stack([x3[:, :, s:s + l].mean(axis=2)
                    for (s, l) in ((0, 3), (2, 3), (4, 3))], axis=2)
    assert o3.shape == (1, 2, 3, 224, 224)
    assert jnp.allclose(o3, r3, atol=1e-5, rtol=1e-5)

    # Case 4: full identity (input already 3x224x224) -> pure pass-through.
    x4 = jax.random.normal(k4, (1, 1, 3, 224, 224), dtype=jnp.float32)
    o4 = jax.block_until_ready(custom_net_forward(x4))
    assert jnp.array_equal(o4, x4)

    print("KERNEL_OK")
</pallas_src>

<mosaic_0001>
module attributes {stable_mosaic.version = 11 : i64} {
  func.func @_depth_pool_kernel(%arg0: i32, %arg1: i32, %arg2: memref<4x6x224x224xf32, #tpu.memory_space<vmem>>, %arg3: memref<4x3x224x224xf32, #tpu.memory_space<vmem>>) attributes {dimension_semantics = [#tpu.dimension_semantics<parallel>, #tpu.dimension_semantics<parallel>], iteration_bounds = array<i64: 2, 1>, scalar_prefetch = 0 : i64, scratch_operands = 0 : i64, tpu.core_type = #tpu.core_type<tc>, window_params = [{transform_indices = @transform_0, window_bounds = array<i64: 4, 6, 224, 224>}, {transform_indices = @transform_1, window_bounds = array<i64: 4, 3, 224, 224>}]} {
    %c0 = arith.constant 0 : index
    %c0_0 = arith.constant 0 : index
    %c0_1 = arith.constant 0 : index
    %c0_2 = arith.constant 0 : index
    %0 = vector.load %arg2[%c0, %c0_0, %c0_1, %c0_2] : memref<4x6x224x224xf32, #tpu.memory_space<vmem>>, vector<4x1x224x224xf32>
    %1 = vector.shape_cast %0 : vector<4x1x224x224xf32> to vector<4x224x224xf32>
    %c0_3 = arith.constant 0 : index
    %c1 = arith.constant 1 : index
    %c0_4 = arith.constant 0 : index
    %c0_5 = arith.constant 0 : index
    %2 = vector.load %arg2[%c0_3, %c1, %c0_4, %c0_5] : memref<4x6x224x224xf32, #tpu.memory_space<vmem>>, vector<4x1x224x224xf32>
    %3 = vector.shape_cast %2 : vector<4x1x224x224xf32> to vector<4x224x224xf32>
    %4 = arith.addf %1, %3 : vector<4x224x224xf32>
    %cst = arith.constant 5.000000e-01 : f32
    %5 = vector.broadcast %cst : f32 to vector<4x224x224xf32>
    %6 = arith.mulf %4, %5 : vector<4x224x224xf32>
    %c0_6 = arith.constant 0 : index
    %c0_7 = arith.constant 0 : index
    %c0_8 = arith.constant 0 : index
    %c0_9 = arith.constant 0 : index
    %7 = vector.load %arg3[%c0_6, %c0_7, %c0_8, %c0_9] : memref<4x3x224x224xf32, #tpu.memory_space<vmem>>, vector<4x1x224x224xf32>
    %8 = vector.shape_cast %7 : vector<4x1x224x224xf32> to vector<4x224x224xf32>
    %9 = vector.shape_cast %6 : vector<4x224x224xf32> to vector<4x1x224x224xf32>
    tpu.vector_store %arg3[%c0_6, %c0_7, %c0_8, %c0_9], %9 {strides = array<i32>} : memref<4x3x224x224xf32, #tpu.memory_space<vmem>>, vector<4x1x224x224xf32>,
    %c0_10 = arith.constant 0 : index
    %c2 = arith.constant 2 : index
    %c0_11 = arith.constant 0 : index
    %c0_12 = arith.constant 0 : index
    %10 = vector.load %arg2[%c0_10, %c2, %c0_11, %c0_12] : memref<4x6x224x224xf32, #tpu.memory_space<vmem>>, vector<4x1x224x224xf32>
    %11 = vector.shape_cast %10 : vector<4x1x224x224xf32> to vector<4x224x224xf32>
    %c0_13 = arith.constant 0 : index
    %c3 = arith.constant 3 : index
    %c0_14 = arith.constant 0 : index
    %c0_15 = arith.constant 0 : index
    %12 = vector.load %arg2[%c0_13, %c3, %c0_14, %c0_15] : memref<4x6x224x224xf32, #tpu.memory_space<vmem>>, vector<4x1x224x224xf32>
    %13 = vector.shape_cast %12 : vector<4x1x224x224xf32> to vector<4x224x224xf32>
    %14 = arith.addf %11, %13 : vector<4x224x224xf32>
    %cst_16 = arith.constant 5.000000e-01 : f32
    %15 = vector.broadcast %cst_16 : f32 to vector<4x224x224xf32>
    %16 = arith.mulf %14, %15 : vector<4x224x224xf32>
    %c0_17 = arith.constant 0 : index
    %c1_18 = arith.constant 1 : index
    %c0_19 = arith.constant 0 : index
    %c0_20 = arith.constant 0 : index
    %17 = vector.load %arg3[%c0_17, %c1_18, %c0_19, %c0_20] : memref<4x3x224x224xf32, #tpu.memory_space<vmem>>, vector<4x1x224x224xf32>
    %18 = vector.shape_cast %17 : vector<4x1x224x224xf32> to vector<4x224x224xf32>
    %19 = vector.shape_cast %16 : vector<4x224x224xf32> to vector<4x1x224x224xf32>
    tpu.vector_store %arg3[%c0_17, %c1_18, %c0_19, %c0_20], %19 {strides = array<i32>} : memref<4x3x224x224xf32, #tpu.memory_space<vmem>>, vector<4x1x224x224xf32>,
    %c0_21 = arith.constant 0 : index
    %c4 = arith.constant 4 : index
    %c0_22 = arith.constant 0 : index
    %c0_23 = arith.constant 0 : index
    %20 = vector.load %arg2[%c0_21, %c4, %c0_22, %c0_23] : memref<4x6x224x224xf32, #tpu.memory_space<vmem>>, vector<4x1x224x224xf32>
    %21 = vector.shape_cast %20 : vector<4x1x224x224xf32> to vector<4x224x224xf32>
    %c0_24 = arith.constant 0 : index
    %c5 = arith.constant 5 : index
    %c0_25 = arith.constant 0 : index
    %c0_26 = arith.constant 0 : index
    %22 = vector.load %arg2[%c0_24, %c5, %c0_25, %c0_26] : memref<4x6x224x224xf32, #tpu.memory_space<vmem>>, vector<4x1x224x224xf32>
    %23 = vector.shape_cast %22 : vector<4x1x224x224xf32> to vector<4x224x224xf32>
    %24 = arith.addf %21, %23 : vector<4x224x224xf32>
    %cst_27 = arith.constant 5.000000e-01 : f32
    %25 = vector.broadcast %cst_27 : f32 to vector<4x224x224xf32>
    %26 = arith.mulf %24, %25 : vector<4x224x224xf32>
    %c0_28 = arith.constant 0 : index
    %c2_29 = arith.constant 2 : index
    %c0_30 = arith.constant 0 : index
    %c0_31 = arith.constant 0 : index
    %27 = vector.load %arg3[%c0_28, %c2_29, %c0_30, %c0_31] : memref<4x3x224x224xf32, #tpu.memory_space<vmem>>, vector<4x1x224x224xf32>
    %28 = vector.shape_cast %27 : vector<4x1x224x224xf32> to vector<4x224x224xf32>
    %29 = vector.shape_cast %26 : vector<4x224x224xf32> to vector<4x1x224x224xf32>
    tpu.vector_store %arg3[%c0_28, %c2_29, %c0_30, %c0_31], %29 {strides = array<i32>} : memref<4x3x224x224xf32, #tpu.memory_space<vmem>>, vector<4x1x224x224xf32>,
    return
  }
  func.func @transform_0(%arg0: i32, %arg1: i32) -> (i32, i32, i32, i32) {
    %c0_i32 = arith.constant 0 : i32
    %c0_i32_0 = arith.constant 0 : i32
    %c0_i32_1 = arith.constant 0 : i32
    return %arg0, %arg1, %c0_i32, %c0_i32_0 : i32, i32, i32, i32
  }
  func.func @transform_1(%arg0: i32, %arg1: i32) -> (i32, i32, i32, i32) {
    %c0_i32 = arith.constant 0 : i32
    %c0_i32_0 = arith.constant 0 : i32
    %c0_i32_1 = arith.constant 0 : i32
    return %arg0, %arg1, %c0_i32, %c0_i32_0 : i32, i32, i32, i32
  }
}

</mosaic_0001>

<llo_original>
// kernel: tpu_custom_call.1
$region0: #{tpu_custom_call.1}
  #allocation0 [shape = 'u32[]', space=smem, size = 0x4, offset = 0x4, fixed_abs, tag = 'smem constant byte address 0x4 - core index']
  #allocation1 [shape = 'u32[144,128]{1,0:T(1,128)}', space=vmem, size = 0x12000, scoped, tag = 'internal scratch']
  %s0 = inlined_call_operand.hbm [shape: f32[8,6,224,224], index: 0, kind: input, shape index: {}]
  %s1 = inlined_call_operand.hbm [shape: f32[8,3,224,224], index: 1, kind: output, shape index: {}]
  %s2 = sld [smem:[#allocation0]]
  $region41: #{tpu_custom_call.1} parent=0
    _
  %s4 = ssub.s32 1, %s2
  %s5 = scalar_select 0, %s4, %s2
  $region1: #{tpu_custom_call.1} parent=0
    #allocation2 [shape = 'u8[11010048]{0}', space=vmem, size = 0xa80000, scoped, tag = 'input window, operand 0']
    #allocation3 [shape = 's32[2]{0}', space=sflag, size = 0x8, scoped, tag = 'scoped memory for tpu_custom_call.1']
    #allocation4 [shape = 's32[2]{0}', space=sflag, size = 0x8, scoped, tag = 'scoped memory for tpu_custom_call.1']
    #allocation5 [shape = 'u8[5505024]{0}', space=vmem, size = 0x540000, scoped, tag = 'output window, operand 0']
    %6 = vsyncpa [#allocation3], 0
    %s7 = scalar_lea.sflag [#allocation3], 1
    %8 = vsyncpa %s7, 0
    %9 = vsyncpa [#allocation4], 0
    %s10 = scalar_lea.sflag [#allocation4], 1
    %11 = vsyncpa %s10, 0
    loop: start=0, step=1, limit=4
    $region2: #{tpu_custom_call.1} parent=1 // loop_pre_header
      _
    $region3: #{tpu_custom_call.1} parent=1 // loop_header
      %s13 = sphi 0, %s17
      %p14 = scmp.ge.s32.totalorder %s13, 4
      %s20 = sphi 0, %s32
      %s21 = sphi 0, %s28
      %s22 = sphi 0, %s20
      %s23 = sphi 0, %s21
      %s24 = sphi 0, %s22
      %s25 = sphi 0, %s23
      %s37 = sphi 0, %s39
      %s40 = sphi 0, %s37
      %s41 = sphi 0, %s40
      %s57 = sphi 0, %s41
      %s65 = sphi 0, %s67
      %s68 = sphi 0, %s65
      %s69 = sphi 0, %s68
      %s85 = sphi 0, %s69
    $region4: #{tpu_custom_call.1} parent=1 // loop_header_branch
      %16 = sbr.rel (%p14) target = $region8
    $region5: #{tpu_custom_call.1} parent=1 // loop_body
      %s18 = ssub.s32 %s13, 1
      %s19 = ssub.s32 %s13, 2
      %s26 = sadd.s32 1, %s21
      %p27 = scmp.ge.s32.totalorder %s26, 1
      %s28 = scalar_select %p27, 0, %s26
      %s29 = sadd.s32 1, %s20
      %s30 = scalar_select %p27, %s29, %s20
      %p31 = scmp.ge.s32.totalorder %s30, 2
      %s32 = scalar_select %p31, 0, %s30
      %s33 = ssub.s32 %s20, %s32
      %s34 = ssub.s32 %s21, %s28
      %s35 = sor.u32 %s33, %s34
      %p36 = scmp.eq.s32.totalorder %s35, 0
      %s38 = sadd.s32 %s37, 1
      %s39 = scalar_select %p36, %s37, %s38
      %p42 = pneg %p36
      %p43 = scmp.eq.s32.totalorder %s13, 1
      %p44 = por %p42, %p43
      %p45 = scmp.ne.s32.totalorder %s37, %s40
      %p46 = scmp.eq.s32.totalorder %s13, 0
      %p47 = por %p45, %p46
      %p48 = scmp.ne.s32.totalorder %s37, %s40
      %p49 = scmp.eq.s32.totalorder %s18, 1
      %p50 = por %p48, %p49
      %p51 = scmp.ne.s32.totalorder %s40, %s41
      %p52 = scmp.eq.s32.totalorder %s18, 0
      %p53 = por %p51, %p52
      %p54 = scmp.ne.s32.totalorder %s40, %s41
      %p55 = scmp.eq.s32.totalorder %s19, 1
      %p56 = por %p54, %p55
      %p58 = scmp.ne.s32.totalorder %s41, %s57
      %p59 = scmp.eq.s32.totalorder %s19, 0
      %p60 = por %p58, %p59
      %s61 = ssub.s32 %s20, %s32
      %s62 = ssub.s32 %s21, %s28
      %s63 = sor.u32 %s61, %s62
      %p64 = scmp.eq.s32.totalorder %s63, 0
      %s66 = sadd.s32 %s65, 1
      %s67 = scalar_select %p64, %s65, %s66
      %p70 = pneg %p64
      %p71 = scmp.eq.s32.totalorder %s13, 1
      %p72 = por %p70, %p71
      %p73 = scmp.ne.s32.totalorder %s65, %s68
      %p74 = scmp.eq.s32.totalorder %s13, 0
      %p75 = por %p73, %p74
      %p76 = scmp.ne.s32.totalorder %s65, %s68
      %p77 = scmp.eq.s32.totalorder %s18, 1
      %p78 = por %p76, %p77
      %p79 = scmp.ne.s32.totalorder %s68, %s69
      %p80 = scmp.eq.s32.totalorder %s18, 0
      %p81 = por %p79, %p80
      %p82 = scmp.ne.s32.totalorder %s68, %s69
      %p83 = scmp.eq.s32.totalorder %s19, 1
      %p84 = por %p82, %p83
      %p86 = scmp.ne.s32.totalorder %s69, %s85
      %p87 = scmp.eq.s32.totalorder %s19, 0
      %p88 = por %p86, %p87
      %p89 = scmp.le.s32.totalorder 1, %s13
      %p90 = scmp.lt.s32.totalorder %s13, 3
      %p91 = pnand %p89, %p90
      %p92 = pneg %p91
      // Predicated region
      $region9: #{tpu_custom_call.1} parent=5 // pred_check
        _
      $region10: #{tpu_custom_call.1} parent=5 // pred_check_branch
        %94 = sbr.rel (%p91) target = $region12
      $region11: #{tpu_custom_call.1} parent=5 // pred_region
        %s95 = ssub.s32 %s13, 1
      $region12: #{tpu_custom_call.1} parent=5 // pred_fallthru
        _
      %p96 = scmp.lt.s32.totalorder %s13, 2
      // Predicated region
      $region13: #{tpu_custom_call.1} parent=5 // pred_check
        %p97 = pneg %p96
      $region14: #{tpu_custom_call.1} parent=5 // pred_check_branch
        %99 = sbr.rel (%p97) target = $region16
      $region15: #{tpu_custom_call.1} parent=5 // pred_region
        // Predicated region
        $region17: #{tpu_custom_call.1} parent=15 // pred_check
          %p100 = pneg %p47
        $region18: #{tpu_custom_call.1} parent=15 // pred_check_branch
          %102 = sbr.rel (%p100) target = $region20
        $region19: #{tpu_custom_call.1} parent=15 // pred_region
          %s103 = sand.u32 %s37, 1
          %s104 = scalar_lea.sflag [#allocation3], %s103
          %s105 = sand.u32 %s37, 1
          %s106 = smul.addr %s105, 10752
          %s107 = scalar_lea.vmem [#allocation2], %s106
          %s108 = smul.u32 4, %s20
          %s109 = smul.u32 6, %s21
          %s111 = ssub.s32 172032, 172032
          %112 = vsyncadd %s104, %s111
          %s113 = smul.addr %s109, 56
          %s114 = smul.addr %s108, 336
          %s115 = sadd.s32 %s113, %s114
          %s116 = smul.addr %s115, 128
          %s117 = scalar_lea.hbm %s0, %s116
          %s118 = sshll.u32 %s107, 4
          %s119 = int_to_ptr.vmem [resolvable:$true] %s118
          %124 = dma.hbm_to_vmem [thread:$0]  %s117, 172032, %s119, %s104, 256, 256, 16
        $region20: #{tpu_custom_call.1} parent=15 // pred_fallthru
          _
      $region16: #{tpu_custom_call.1} parent=5 // pred_fallthru
        _
      %p125 = scmp.le.s32.totalorder 1, %s13
      %p126 = scmp.lt.s32.totalorder %s13, 3
      %p127 = pnand %p125, %p126
      %p128 = pneg %p127
      // Predicated region
      $region21: #{tpu_custom_call.1} parent=5 // pred_check
        _
      $region22: #{tpu_custom_call.1} parent=5 // pred_check_branch
        %130 = sbr.rel (%p127) target = $region24
      $region23: #{tpu_custom_call.1} parent=5 // pred_region
        %s131 = ssub.s32 %s13, 1
        %s132 = sand.u32 %s40, 1
        %s133 = scalar_lea.sflag [#allocation3], %s132
        %s134 = sand.u32 %s40, 1
        %s135 = smul.addr %s134, 10752
        %s136 = scalar_lea.vmem [#allocation2], %s135
        // Predicated region
        $region25: #{tpu_custom_call.1} parent=23 // pred_check
          %p137 = pneg %p53
        $region26: #{tpu_custom_call.1} parent=23 // pred_check_branch
          %139 = sbr.rel (%p137) target = $region28
        $region27: #{tpu_custom_call.1} parent=23 // pred_region
          %140 = dma.done %s133, 172032
        $region28: #{tpu_custom_call.1} parent=23 // pred_fallthru
          _
        %s141 = sand.u32 %s40, 1
        %s142 = scalar_lea.sflag [#allocation3], %s141
        %s143 = sand.u32 %s40, 1
        %s144 = smul.addr %s143, 10752
        %s145 = scalar_lea.vmem [#allocation2], %s144
        %p146 = pneg %p53
        %p147 = pneg %p50
        %p148 = pneg %p81
        %p149 = pneg %p78
        %s150 = sand.u32 %s68, 1
        %s151 = scalar_lea.sflag [#allocation4], %s150
        %s152 = sand.u32 %s68, 1
        %s153 = smul.addr %s152, 5376
        %s154 = scalar_lea.vmem [#allocation5], %s153
        %s155 = smul.u32 4, %s22
        %s156 = smul.u32 6, %s23
        %s157 = smul.u32 4, %s22
        %s158 = smul.u32 3, %s23
        %v159 = vld [vmem:[%s136] sm:$0xff]
        %v160 = vld [vmem:[%s136 + $0x8] sm:$0xff]
        %v161 = vld [vmem:[%s136 + $0x10] sm:$0xff]
        %v162 = vld [vmem:[%s136 + $0x18] sm:$0xff]
        %v163 = vld [vmem:[%s136 + $0x20] sm:$0xff]
        %v164 = vld [vmem:[%s136 + $0x28] sm:$0xff]
        %v165 = vld [vmem:[%s136 + $0x30] sm:$0xff]
        %v166 = vld [vmem:[%s136 + $0x38] sm:$0xff]
        %v167 = vld [vmem:[%s136 + $0x40] sm:$0xff]
        %v168 = vld [vmem:[%s136 + $0x48] sm:$0xff]
        %v169 = vld [vmem:[%s136 + $0x50] sm:$0xff]
        %v170 = vld [vmem:[%s136 + $0x58] sm:$0xff]
        %v171 = vld [vmem:[%s136 + $0x60] sm:$0xff]
        %v172 = vld [vmem:[%s136 + $0x68] sm:$0xff]
        %v173 = vld [vmem:[%s136 + $0x70] sm:$0xff]
        %v174 = vld [vmem:[%s136 + $0x78] sm:$0xff]
        %v175 = vld [vmem:[%s136 + $0x80] sm:$0xff]
        %v176 = vld [vmem:[%s136 + $0x88] sm:$0xff]
        %v177 = vld [vmem:[%s136 + $0x90] sm:$0xff]
        %v178 = vld [vmem:[%s136 + $0x98] sm:$0xff]
        %v179 = vld [vmem:[%s136 + $0xa0] sm:$0xff]
        %v180 = vld [vmem:[%s136 + $0xa8] sm:$0xff]
        %v181 = vld [vmem:[%s136 + $0xb0] sm:$0xff]
        %v182 = vld [vmem:[%s136 + $0xb8] sm:$0xff]
        %v183 = vld [vmem:[%s136 + $0xc0] sm:$0xff]
        %v184 = vld [vmem:[%s136 + $0xc8] sm:$0xff]
        %v185 = vld [vmem:[%s136 + $0xd0] sm:$0xff]
        %v186 = vld [vmem:[%s136 + $0xd8] sm:$0xff]
        %v187 = vld [vmem:[%s136 + $0xe0] sm:$0xff]
        %v188 = vld [vmem:[%s136 + $0xe8] sm:$0xff]
        %v189 = vld [vmem:[%s136 + $0xf0] sm:$0xff]
        %v190 = vld [vmem:[%s136 + $0xf8] sm:$0xff]
        %v191 = vld [vmem:[%s136 + $0x100] sm:$0xff]
        %v192 = vld [vmem:[%s136 + $0x108] sm:$0xff]
        %v193 = vld [vmem:[%s136 + $0x110] sm:$0xff]
        %v194 = vld [vmem:[%s136 + $0x118] sm:$0xff]
        %v195 = vld [vmem:[%s136 + $0x120] sm:$0xff]
        %v196 = vld [vmem:[%s136 + $0x128] sm:$0xff]
        %v197 = vld [vmem:[%s136 + $0x130] sm:$0xff]
        %v198 = vld [vmem:[%s136 + $0x138] sm:$0xff]
        %v199 = vld [vmem:[%s136 + $0x140] sm:$0xff]
        %v200 = vld [vmem:[%s136 + $0x148] sm:$0xff]
        %v201 = vld [vmem:[%s136 + $0x150] sm:$0xff]
        %v202 = vld [vmem:[%s136 + $0x158] sm:$0xff]
        %v203 = vld [vmem:[%s136 + $0x160] sm:$0xff]
        %v204 = vld [vmem:[%s136 + $0x168] sm:$0xff]
        %v205 = vld [vmem:[%s136 + $0x170] sm:$0xff]
        %v206 = vld [vmem:[%s136 + $0x178] sm:$0xff]
        %v207 = vld [vmem:[%s136 + $0x180] sm:$0xff]
        %v208 = vld [vmem:[%s136 + $0x188] sm:$0xff]
        %v209 = vld [vmem:[%s136 + $0x190] sm:$0xff]
        %v210 = vld [vmem:[%s136 + $0x198] sm:$0xff]
        %v211 = vld [vmem:[%s136 + $0x1a0] sm:$0xff]
        %v212 = vld [vmem:[%s136 + $0x1a8] sm:$0xff]
        %v213 = vld [vmem:[%s136 + $0x1b0] sm:$0xff]
        %v214 = vld [vmem:[%s136 + $0x1b8] sm:$0xff]
        %v215 = vld [vmem:[%s136 + $0xa80] sm:$0xff]
        %v216 = vld [vmem:[%s136 + $0xa88] sm:$0xff]
        %v217 = vld [vmem:[%s136 + $0xa90] sm:$0xff]
        %v218 = vld [vmem:[%s136 + $0xa98] sm:$0xff]
        %v219 = vld [vmem:[%s136 + $0xaa0] sm:$0xff]
        %v220 = vld [vmem:[%s136 + $0xaa8] sm:$0xff]
        %v221 = vld [vmem:[%s136 + $0xab0] sm:$0xff]
        %v222 = vld [vmem:[%s136 + $0xab8] sm:$0xff]
        %v223 = vld [vmem:[%s136 + $0xac0] sm:$0xff]
        %v224 = vld [vmem:[%s136 + $0xac8] sm:$0xff]
        %v225 = vld [vmem:[%s136 + $0xad0] sm:$0xff]
        %v226 = vld [vmem:[%s136 + $0xad8] sm:$0xff]
        %v227 = vld [vmem:[%s136 + $0xae0] sm:$0xff]
        %v228 = vld [vmem:[%s136 + $0xae8] sm:$0xff]
        %v229 = vld [vmem:[%s136 + $0xaf0] sm:$0xff]
        %v230 = vld [vmem:[%s136 + $0xaf8] sm:$0xff]
        %v231 = vld [vmem:[%s136 + $0xb00] sm:$0xff]
        %v232 = vld [vmem:[%s136 + $0xb08] sm:$0xff]
        %v233 = vld [vmem:[%s136 + $0xb10] sm:$0xff]
        %v234 = vld [vmem:[%s136 + $0xb18] sm:$0xff]
        %v235 = vld [vmem:[%s136 + $0xb20] sm:$0xff]
        %v236 = vld [vmem:[%s136 + $0xb28] sm:$0xff]
        %v237 = vld [vmem:[%s136 + $0xb30] sm:$0xff]
        %v238 = vld [vmem:[%s136 + $0xb38] sm:$0xff]
        %v239 = vld [vmem:[%s136 + $0xb40] sm:$0xff]
        %v240 = vld [vmem:[%s136 + $0xb48] sm:$0xff]
        %v241 = vld [vmem:[%s136 + $0xb50] sm:$0xff]
        %v242 = vld [vmem:[%s136 + $0xb58] sm:$0xff]
        %v243 = vld [vmem:[%s136 + $0xb60] sm:$0xff]
        %v244 = vld [vmem:[%s136 + $0xb68] sm:$0xff]
        %v245 = vld [vmem:[%s136 + $0xb70] sm:$0xff]
        %v246 = vld [vmem:[%s136 + $0xb78] sm:$0xff]
        %v247 = vld [vmem:[%s136 + $0xb80] sm:$0xff]
        %v248 = vld [vmem:[%s136 + $0xb88] sm:$0xff]
        %v249 = vld [vmem:[%s136 + $0xb90] sm:$0xff]
        %v250 = vld [vmem:[%s136 + $0xb98] sm:$0xff]
        %v251 = vld [vmem:[%s136 + $0xba0] sm:$0xff]
        %v252 = vld [vmem:[%s136 + $0xba8] sm:$0xff]
        %v253 = vld [vmem:[%s136 + $0xbb0] sm:$0xff]
        %v254 = vld [vmem:[%s136 + $0xbb8] sm:$0xff]
        %v255 = vld [vmem:[%s136 + $0xbc0] sm:$0xff]
        %v256 = vld [vmem:[%s136 + $0xbc8] sm:$0xff]
        %v257 = vld [vmem:[%s136 + $0xbd0] sm:$0xff]
        %v258 = vld [vmem:[%s136 + $0xbd8] sm:$0xff]
        %v259 = vld [vmem:[%s136 + $0xbe0] sm:$0xff]
        %v260 = vld [vmem:[%s136 + $0xbe8] sm:$0xff]
        %v261 = vld [vmem:[%s136 + $0xbf0] sm:$0xff]
        %v262 = vld [vmem:[%s136 + $0xbf8] sm:$0xff]
        %v263 = vld [vmem:[%s136 + $0xc00] sm:$0xff]
        %v264 = vld [vmem:[%s136 + $0xc08] sm:$0xff]
        %v265 = vld [vmem:[%s136 + $0xc10] sm:$0xff]
        %v266 = vld [vmem:[%s136 + $0xc18] sm:$0xff]
        %v267 = vld [vmem:[%s136 + $0xc20] sm:$0xff]
        %v268 = vld [vmem:[%s136 + $0xc28] sm:$0xff]
        %v269 = vld [vmem:[%s136 + $0xc30] sm:$0xff]
        %v270 = vld [vmem:[%s136 + $0xc38] sm:$0xff]
        %v271 = vld [vmem:[%s136 + $0x1500] sm:$0xff]
        %v272 = vld [vmem:[%s136 + $0x1508] sm:$0xff]
        %v273 = vld [vmem:[%s136 + $0x1510] sm:$0xff]
        %v274 = vld [vmem:[%s136 + $0x1518] sm:$0xff]
        %v275 = vld [vmem:[%s136 + $0x1520] sm:$0xff]
        %v276 = vld [vmem:[%s136 + $0x1528] sm:$0xff]
        %v277 = vld [vmem:[%s136 + $0x1530] sm:$0xff]
        %v278 = vld [vmem:[%s136 + $0x1538] sm:$0xff]
        %v279 = vld [vmem:[%s136 + $0x1540] sm:$0xff]
        %v280 = vld [vmem:[%s136 + $0x1548] sm:$0xff]
        %v281 = vld [vmem:[%s136 + $0x1550] sm:$0xff]
        %v282 = vld [vmem:[%s136 + $0x1558] sm:$0xff]
        %v283 = vld [vmem:[%s136 + $0x1560] sm:$0xff]
        %v284 = vld [vmem:[%s136 + $0x1568] sm:$0xff]
        %v285 = vld [vmem:[%s136 + $0x1570] sm:$0xff]
        %v286 = vld [vmem:[%s136 + $0x1578] sm:$0xff]
        %v287 = vld [vmem:[%s136 + $0x1580] sm:$0xff]
        %v288 = vld [vmem:[%s136 + $0x1588] sm:$0xff]
        %v289 = vld [vmem:[%s136 + $0x1590] sm:$0xff]
        %v290 = vld [vmem:[%s136 + $0x1598] sm:$0xff]
        %v291 = vld [vmem:[%s136 + $0x15a0] sm:$0xff]
        %v292 = vld [vmem:[%s136 + $0x15a8] sm:$0xff]
        %v293 = vld [vmem:[%s136 + $0x15b0] sm:$0xff]
        %v294 = vld [vmem:[%s136 + $0x15b8] sm:$0xff]
        %v295 = vld [vmem:[%s136 + $0x15c0] sm:$0xff]
        %v296 = vld [vmem:[%s136 + $0x15c8] sm:$0xff]
        %v297 = vld [vmem:[%s136 + $0x15d0] sm:$0xff]
        %v298 = vld [vmem:[%s136 + $0x15d8] sm:$0xff]
        %v299 = vld [vmem:[%s136 + $0x15e0] sm:$0xff]
        %v300 = vld [vmem:[%s136 + $0x15e8] sm:$0xff]
        %v301 = vld [vmem:[%s136 + $0x15f0] sm:$0xff]
        %v302 = vld [vmem:[%s136 + $0x15f8] sm:$0xff]
        %v303 = vld [vmem:[%s136 + $0x1600] sm:$0xff]
        %v304 = vld [vmem:[%s136 + $0x1608] sm:$0xff]
        %v305 = vld [vmem:[%s136 + $0x1610] sm:$0xff]
        %v306 = vld [vmem:[%s136 + $0x1618] sm:$0xff]
        %v307 = vld [vmem:[%s136 + $0x1620] sm:$0xff]
        %v308 = vld [vmem:[%s136 + $0x1628] sm:$0xff]
        %v309 = vld [vmem:[%s136 + $0x1630] sm:$0xff]
        %v310 = vld [vmem:[%s136 + $0x1638] sm:$0xff]
        %v311 = vld [vmem:[%s136 + $0x1640] sm:$0xff]
        %v312 = vld [vmem:[%s136 + $0x1648] sm:$0xff]
        %v313 = vld [vmem:[%s136 + $0x1650] sm:$0xff]
        %v314 = vld [vmem:[%s136 + $0x1658] sm:$0xff]
        %v315 = vld [vmem:[%s136 + $0x1660] sm:$0xff]
        %v316 = vld [vmem:[%s136 + $0x1668] sm:$0xff]
        %v317 = vld [vmem:[%s136 + $0x1670] sm:$0xff]
        %v318 = vld [vmem:[%s136 + $0x1678] sm:$0xff]
        %v319 = vld [vmem:[%s136 + $0x1680] sm:$0xff]
        %v320 = vld [vmem:[%s136 + $0x1688] sm:$0xff]
        %v321 = vld [vmem:[%s136 + $0x1690] sm:$0xff]
        %v322 = vld [vmem:[%s136 + $0x1698] sm:$0xff]
        %v323 = vld [vmem:[%s136 + $0x16a0] sm:$0xff]
        %v324 = vld [vmem:[%s136 + $0x16a8] sm:$0xff]
        %v325 = vld [vmem:[%s136 + $0x16b0] sm:$0xff]
        %v326 = vld [vmem:[%s136 + $0x16b8] sm:$0xff]
        %v327 = vld [vmem:[%s136 + $0x1f80] sm:$0xff]
        %v328 = vld [vmem:[%s136 + $0x1f88] sm:$0xff]
        %v329 = vld [vmem:[%s136 + $0x1f90] sm:$0xff]
        %v330 = vld [vmem:[%s136 + $0x1f98] sm:$0xff]
        %v331 = vld [vmem:[%s136 + $0x1fa0] sm:$0xff]
        %v332 = vld [vmem:[%s136 + $0x1fa8] sm:$0xff]
        %v333 = vld [vmem:[%s136 + $0x1fb0] sm:$0xff]
        %v334 = vld [vmem:[%s136 + $0x1fb8] sm:$0xff]
        %v335 = vld [vmem:[%s136 + $0x1fc0] sm:$0xff]
        %v336 = vld [vmem:[%s136 + $0x1fc8] sm:$0xff]
        %v337 = vld [vmem:[%s136 + $0x1fd0] sm:$0xff]
        %v338 = vld [vmem:[%s136 + $0x1fd8] sm:$0xff]
        %v339 = vld [vmem:[%s136 + $0x1fe0] sm:$0xff]
        %v340 = vld [vmem:[%s136 + $0x1fe8] sm:$0xff]
        %v341 = vld [vmem:[%s136 + $0x1ff0] sm:$0xff]
        %v342 = vld [vmem:[%s136 + $0x1ff8] sm:$0xff]
        %v343 = vld [vmem:[%s136 + $0x2000] sm:$0xff]
        %v344 = vld [vmem:[%s136 + $0x2008] sm:$0xff]
        %v345 = vld [vmem:[%s136 + $0x2010] sm:$0xff]
        %v346 = vld [vmem:[%s136 + $0x2018] sm:$0xff]
        %v347 = vld [vmem:[%s136 + $0x2020] sm:$0xff]
        %v348 = vld [vmem:[%s136 + $0x2028] sm:$0xff]
        %v349 = vld [vmem:[%s136 + $0x2030] sm:$0xff]
        %v350 = vld [vmem:[%s136 + $0x2038] sm:$0xff]
        %v351 = vld [vmem:[%s136 + $0x2040] sm:$0xff]
        %v352 = vld [vmem:[%s136 + $0x2048] sm:$0xff]
        %v353 = vld [vmem:[%s136 + $0x2050] sm:$0xff]
        %v354 = vld [vmem:[%s136 + $0x2058] sm:$0xff]
        %v355 = vld [vmem:[%s136 + $0x2060] sm:$0xff]
        %v356 = vld [vmem:[%s136 + $0x2068] sm:$0xff]
        %v357 = vld [vmem:[%s136 + $0x2070] sm:$0xff]
        %v358 = vld [vmem:[%s136 + $0x2078] sm:$0xff]
        %v359 = vld [vmem:[%s136 + $0x2080] sm:$0xff]
        %v360 = vld [vmem:[%s136 + $0x2088] sm:$0xff]
        %v361 = vld [vmem:[%s136 + $0x2090] sm:$0xff]
        %v362 = vld [vmem:[%s136 + $0x2098] sm:$0xff]
        %v363 = vld [vmem:[%s136 + $0x20a0] sm:$0xff]
        %v364 = vld [vmem:[%s136 + $0x20a8] sm:$0xff]
        %v365 = vld [vmem:[%s136 + $0x20b0] sm:$0xff]
        %v366 = vld [vmem:[%s136 + $0x20b8] sm:$0xff]
        %v367 = vld [vmem:[%s136 + $0x20c0] sm:$0xff]
        %v368 = vld [vmem:[%s136 + $0x20c8] sm:$0xff]
        %v369 = vld [vmem:[%s136 + $0x20d0] sm:$0xff]
        %v370 = vld [vmem:[%s136 + $0x20d8] sm:$0xff]
        %v371 = vld [vmem:[%s136 + $0x20e0] sm:$0xff]
        %v372 = vld [vmem:[%s136 + $0x20e8] sm:$0xff]
        %v373 = vld [vmem:[%s136 + $0x20f0] sm:$0xff]
        %v374 = vld [vmem:[%s136 + $0x20f8] sm:$0xff]
        %v375 = vld [vmem:[%s136 + $0x2100] sm:$0xff]
        %v376 = vld [vmem:[%s136 + $0x2108] sm:$0xff]
        %v377 = vld [vmem:[%s136 + $0x2110] sm:$0xff]
        %v378 = vld [vmem:[%s136 + $0x2118] sm:$0xff]
        %v379 = vld [vmem:[%s136 + $0x2120] sm:$0xff]
        %v380 = vld [vmem:[%s136 + $0x2128] sm:$0xff]
        %v381 = vld [vmem:[%s136 + $0x2130] sm:$0xff]
        %v382 = vld [vmem:[%s136 + $0x2138] sm:$0xff]
        %s383 = scalar_lea.vmem %s136, 448 [#allocation2]
        %v384 = vld [vmem:[%s383] sm:$0xff]
        %v385 = vld [vmem:[%s383 + $0x8] sm:$0xff]
        %v386 = vld [vmem:[%s383 + $0x10] sm:$0xff]
        %v387 = vld [vmem:[%s383 + $0x18] sm:$0xff]
        %v388 = vld [vmem:[%s383 + $0x20] sm:$0xff]
        %v389 = vld [vmem:[%s383 + $0x28] sm:$0xff]
        %v390 = vld [vmem:[%s383 + $0x30] sm:$0xff]
        %v391 = vld [vmem:[%s383 + $0x38] sm:$0xff]
        %v392 = vld [vmem:[%s383 + $0x40] sm:$0xff]
        %v393 = vld [vmem:[%s383 + $0x48] sm:$0xff]
        %v394 = vld [vmem:[%s383 + $0x50] sm:$0xff]
        %v395 = vld [vmem:[%s383 + $0x58] sm:$0xff]
        %v396 = vld [vmem:[%s383 + $0x60] sm:$0xff]
        %v397 = vld [vmem:[%s383 + $0x68] sm:$0xff]
        %v398 = vld [vmem:[%s383 + $0x70] sm:$0xff]
        %v399 = vld [vmem:[%s383 + $0x78] sm:$0xff]
        %v400 = vld [vmem:[%s383 + $0x80] sm:$0xff]
        %v401 = vld [vmem:[%s383 + $0x88] sm:$0xff]
        %v402 = vld [vmem:[%s383 + $0x90] sm:$0xff]
        %v403 = vld [vmem:[%s383 + $0x98] sm:$0xff]
        %v404 = vld [vmem:[%s383 + $0xa0] sm:$0xff]
        %v405 = vld [vmem:[%s383 + $0xa8] sm:$0xff]
        %v406 = vld [vmem:[%s383 + $0xb0] sm:$0xff]
        %v407 = vld [vmem:[%s383 + $0xb8] sm:$0xff]
        %v408 = vld [vmem:[%s383 + $0xc0] sm:$0xff]
        %v409 = vld [vmem:[%s383 + $0xc8] sm:$0xff]
        %v410 = vld [vmem:[%s383 + $0xd0] sm:$0xff]
        %v411 = vld [vmem:[%s383 + $0xd8] sm:$0xff]
        %v412 = vld [vmem:[%s383 + $0xe0] sm:$0xff]
        %v413 = vld [vmem:[%s383 + $0xe8] sm:$0xff]
        %v414 = vld [vmem:[%s383 + $0xf0] sm:$0xff]
        %v415 = vld [vmem:[%s383 + $0xf8] sm:$0xff]
        %v416 = vld [vmem:[%s383 + $0x100] sm:$0xff]
        %v417 = vld [vmem:[%s383 + $0x108] sm:$0xff]
        %v418 = vld [vmem:[%s383 + $0x110] sm:$0xff]
        %v419 = vld [vmem:[%s383 + $0x118] sm:$0xff]
        %v420 = vld [vmem:[%s383 + $0x120] sm:$0xff]
        %v421 = vld [vmem:[%s383 + $0x128] sm:$0xff]
        %v422 = vld [vmem:[%s383 + $0x130] sm:$0xff]
        %v423 = vld [vmem:[%s383 + $0x138] sm:$0xff]
        %v424 = vld [vmem:[%s383 + $0x140] sm:$0xff]
        %v425 = vld [vmem:[%s383 + $0x148] sm:$0xff]
        %v426 = vld [vmem:[%s383 + $0x150] sm:$0xff]
        %v427 = vld [vmem:[%s383 + $0x158] sm:$0xff]
        %v428 = vld [vmem:[%s383 + $0x160] sm:$0xff]
        %v429 = vld [vmem:[%s383 + $0x168] sm:$0xff]
        %v430 = vld [vmem:[%s383 + $0x170] sm:$0xff]
        %v431 = vld [vmem:[%s383 + $0x178] sm:$0xff]
        %v432 = vld [vmem:[%s383 + $0x180] sm:$0xff]
        %v433 = vld [vmem:[%s383 + $0x188] sm:$0xff]
        %v434 = vld [vmem:[%s383 + $0x190] sm:$0xff]
        %v435 = vld [vmem:[%s383 + $0x198] sm:$0xff]
        %v436 = vld [vmem:[%s383 + $0x1a0] sm:$0xff]
        %v437 = vld [vmem:[%s383 + $0x1a8] sm:$0xff]
        %v438 = vld [vmem:[%s383 + $0x1b0] sm:$0xff]
        %v439 = vld [vmem:[%s383 + $0x1b8] sm:$0xff]
        %v440 = vld [vmem:[%s383 + $0xa80] sm:$0xff]
        %v441 = vld [vmem:[%s383 + $0xa88] sm:$0xff]
        %v442 = vld [vmem:[%s383 + $0xa90] sm:$0xff]
        %v443 = vld [vmem:[%s383 + $0xa98] sm:$0xff]
        %v444 = vld [vmem:[%s383 + $0xaa0] sm:$0xff]
        %v445 = vld [vmem:[%s383 + $0xaa8] sm:$0xff]
        %v446 = vld [vmem:[%s383 + $0xab0] sm:$0xff]
        %v447 = vld [vmem:[%s383 + $0xab8] sm:$0xff]
        %v448 = vld [vmem:[%s383 + $0xac0] sm:$0xff]
        %v449 = vld [vmem:[%s383 + $0xac8] sm:$0xff]
        %v450 = vld [vmem:[%s383 + $0xad0] sm:$0xff]
        %v451 = vld [vmem:[%s383 + $0xad8] sm:$0xff]
        %v452 = vld [vmem:[%s383 + $0xae0] sm:$0xff]
        %v453 = vld [vmem:[%s383 + $0xae8] sm:$0xff]
        %v454 = vld [vmem:[%s383 + $0xaf0] sm:$0xff]
        %v455 = vld [vmem:[%s383 + $0xaf8] sm:$0xff]
        %v456 = vld [vmem:[%s383 + $0xb00] sm:$0xff]
        %v457 = vld [vmem:[%s383 + $0xb08] sm:$0xff]
        %v458 = vld [vmem:[%s383 + $0xb10] sm:$0xff]
        %v459 = vld [vmem:[%s383 + $0xb18] sm:$0xff]
        %v460 = vld [vmem:[%s383 + $0xb20] sm:$0xff]
        %v461 = vld [vmem:[%s383 + $0xb28] sm:$0xff]
        %v462 = vld [vmem:[%s383 + $0xb30] sm:$0xff]
        %v463 = vld [vmem:[%s383 + $0xb38] sm:$0xff]
        %v464 = vld [vmem:[%s383 + $0xb40] sm:$0xff]
        %v465 = vld [vmem:[%s383 + $0xb48] sm:$0xff]
        %v466 = vld [vmem:[%s383 + $0xb50] sm:$0xff]
        %v467 = vld [vmem:[%s383 + $0xb58] sm:$0xff]
        %v468 = vld [vmem:[%s383 + $0xb60] sm:$0xff]
        %v469 = vld [vmem:[%s383 + $0xb68] sm:$0xff]
        %v470 = vld [vmem:[%s383 + $0xb70] sm:$0xff]
        %v471 = vld [vmem:[%s383 + $0xb78] sm:$0xff]
        %v472 = vld [vmem:[%s383 + $0xb80] sm:$0xff]
        %v473 = vld [vmem:[%s383 + $0xb88] sm:$0xff]
        %v474 = vld [vmem:[%s383 + $0xb90] sm:$0xff]
        %v475 = vld [vmem:[%s383 + $0xb98] sm:$0xff]
        %v476 = vld [vmem:[%s383 + $0xba0] sm:$0xff]
        %v477 = vld [vmem:[%s383 + $0xba8] sm:$0xff]
        %v478 = vld [vmem:[%s383 + $0xbb0] sm:$0xff]
        %v479 = vld [vmem:[%s383 + $0xbb8] sm:$0xff]
        %v480 = vld [vmem:[%s383 + $0xbc0] sm:$0xff]
        %v481 = vld [vmem:[%s383 + $0xbc8] sm:$0xff]
        %v482 = vld [vmem:[%s383 + $0xbd0] sm:$0xff]
        %v483 = vld [vmem:[%s383 + $0xbd8] sm:$0xff]
        %v484 = vld [vmem:[%s383 + $0xbe0] sm:$0xff]
        %v485 = vld [vmem:[%s383 + $0xbe8] sm:$0xff]
        %v486 = vld [vmem:[%s383 + $0xbf0] sm:$0xff]
        %v487 = vld [vmem:[%s383 + $0xbf8] sm:$0xff]
        %v488 = vld [vmem:[%s383 + $0xc00] sm:$0xff]
        %v489 = vld [vmem:[%s383 + $0xc08] sm:$0xff]
        %v490 = vld [vmem:[%s383 + $0xc10] sm:$0xff]
        %v491 = vld [vmem:[%s383 + $0xc18] sm:$0xff]
        %v492 = vld [vmem:[%s383 + $0xc20] sm:$0xff]
        %v493 = vld [vmem:[%s383 + $0xc28] sm:$0xff]
        %v494 = vld [vmem:[%s383 + $0xc30] sm:$0xff]
        %v495 = vld [vmem:[%s383 + $0xc38] sm:$0xff]
        %v496 = vld [vmem:[%s383 + $0x1500] sm:$0xff]
        %v497 = vld [vmem:[%s383 + $0x1508] sm:$0xff]
        %v498 = vld [vmem:[%s383 + $0x1510] sm:$0xff]
        %v499 = vld [vmem:[%s383 + $0x1518] sm:$0xff]
        %v500 = vld [vmem:[%s383 + $0x1520] sm:$0xff]
        %v501 = vld [vmem:[%s383 + $0x1528] sm:$0xff]
        %v502 = vld [vmem:[%s383 + $0x1530] sm:$0xff]
        %v503 = vld [vmem:[%s383 + $0x1538] sm:$0xff]
        %v504 = vld [vmem:[%s383 + $0x1540] sm:$0xff]
        %v505 = vld [vmem:[%s383 + $0x1548] sm:$0xff]
        %v506 = vld [vmem:[%s383 + $0x1550] sm:$0xff]
        %v507 = vld [vmem:[%s383 + $0x1558] sm:$0xff]
        %v508 = vld [vmem:[%s383 + $0x1560] sm:$0xff]
        %v509 = vld [vmem:[%s383 + $0x1568] sm:$0xff]
        %v510 = vld [vmem:[%s383 + $0x1570] sm:$0xff]
        %v511 = vld [vmem:[%s383 + $0x1578] sm:$0xff]
        %v512 = vld [vmem:[%s383 + $0x1580] sm:$0xff]
        %v513 = vld [vmem:[%s383 + $0x1588] sm:$0xff]
        %v514 = vld [vmem:[%s383 + $0x1590] sm:$0xff]
        %v515 = vld [vmem:[%s383 + $0x1598] sm:$0xff]
        %v516 = vld [vmem:[%s383 + $0x15a0] sm:$0xff]
        %v517 = vld [vmem:[%s383 + $0x15a8] sm:$0xff]
        %v518 = vld [vmem:[%s383 + $0x15b0] sm:$0xff]
        %v519 = vld [vmem:[%s383 + $0x15b8] sm:$0xff]
        %v520 = vld [vmem:[%s383 + $0x15c0] sm:$0xff]
        %v521 = vld [vmem:[%s383 + $0x15c8] sm:$0xff]
        %v522 = vld [vmem:[%s383 + $0x15d0] sm:$0xff]
        %v523 = vld [vmem:[%s383 + $0x15d8] sm:$0xff]
        %v524 = vld [vmem:[%s383 + $0x15e0] sm:$0xff]
        %v525 = vld [vmem:[%s383 + $0x15e8] sm:$0xff]
        %v526 = vld [vmem:[%s383 + $0x15f0] sm:$0xff]
        %v527 = vld [vmem:[%s383 + $0x15f8] sm:$0xff]
        %v528 = vld [vmem:[%s383 + $0x1600] sm:$0xff]
        %v529 = vld [vmem:[%s383 + $0x1608] sm:$0xff]
        %v530 = vld [vmem:[%s383 + $0x1610] sm:$0xff]
        %v531 = vld [vmem:[%s383 + $0x1618] sm:$0xff]
        %v532 = vld [vmem:[%s383 + $0x1620] sm:$0xff]
        %v533 = vld [vmem:[%s383 + $0x1628] sm:$0xff]
        %v534 = vld [vmem:[%s383 + $0x1630] sm:$0xff]
        %v535 = vld [vmem:[%s383 + $0x1638] sm:$0xff]
        %v536 = vld [vmem:[%s383 + $0x1640] sm:$0xff]
        %v537 = vld [vmem:[%s383 + $0x1648] sm:$0xff]
        %v538 = vld [vmem:[%s383 + $0x1650] sm:$0xff]
        %v539 = vld [vmem:[%s383 + $0x1658] sm:$0xff]
        %v540 = vld [vmem:[%s383 + $0x1660] sm:$0xff]
        %v541 = vld [vmem:[%s383 + $0x1668] sm:$0xff]
        %v542 = vld [vmem:[%s383 + $0x1670] sm:$0xff]
        %v543 = vld [vmem:[%s383 + $0x1678] sm:$0xff]
        %v544 = vld [vmem:[%s383 + $0x1680] sm:$0xff]
        %v545 = vld [vmem:[%s383 + $0x1688] sm:$0xff]
        %v546 = vld [vmem:[%s383 + $0x1690] sm:$0xff]
        %v547 = vld [vmem:[%s383 + $0x1698] sm:$0xff]
        %v548 = vld [vmem:[%s383 + $0x16a0] sm:$0xff]
        %v549 = vld [vmem:[%s383 + $0x16a8] sm:$0xff]
        %v550 = vld [vmem:[%s383 + $0x16b0] sm:$0xff]
        %v551 = vld [vmem:[%s383 + $0x16b8] sm:$0xff]
        %v552 = vld [vmem:[%s383 + $0x1f80] sm:$0xff]
        %v553 = vld [vmem:[%s383 + $0x1f88] sm:$0xff]
        %v554 = vld [vmem:[%s383 + $0x1f90] sm:$0xff]
        %v555 = vld [vmem:[%s383 + $0x1f98] sm:$0xff]
        %v556 = vld [vmem:[%s383 + $0x1fa0] sm:$0xff]
        %v557 = vld [vmem:[%s383 + $0x1fa8] sm:$0xff]
        %v558 = vld [vmem:[%s383 + $0x1fb0] sm:$0xff]
        %v559 = vld [vmem:[%s383 + $0x1fb8] sm:$0xff]
        %v560 = vld [vmem:[%s383 + $0x1fc0] sm:$0xff]
        %v561 = vld [vmem:[%s383 + $0x1fc8] sm:$0xff]
        %v562 = vld [vmem:[%s383 + $0x1fd0] sm:$0xff]
        %v563 = vld [vmem:[%s383 + $0x1fd8] sm:$0xff]
        %v564 = vld [vmem:[%s383 + $0x1fe0] sm:$0xff]
        %v565 = vld [vmem:[%s383 + $0x1fe8] sm:$0xff]
        %v566 = vld [vmem:[%s383 + $0x1ff0] sm:$0xff]
        %v567 = vld [vmem:[%s383 + $0x1ff8] sm:$0xff]
        %v568 = vld [vmem:[%s383 + $0x2000] sm:$0xff]
        %v569 = vld [vmem:[%s383 + $0x2008] sm:$0xff]
        %v570 = vld [vmem:[%s383 + $0x2010] sm:$0xff]
        %v571 = vld [vmem:[%s383 + $0x2018] sm:$0xff]
        %v572 = vld [vmem:[%s383 + $0x2020] sm:$0xff]
        %v573 = vld [vmem:[%s383 + $0x2028] sm:$0xff]
        %v574 = vld [vmem:[%s383 + $0x2030] sm:$0xff]
        %v575 = vld [vmem:[%s383 + $0x2038] sm:$0xff]
        %v576 = vld [vmem:[%s383 + $0x2040] sm:$0xff]
        %v577 = vld [vmem:[%s383 + $0x2048] sm:$0xff]
        %v578 = vld [vmem:[%s383 + $0x2050] sm:$0xff]
        %v579 = vld [vmem:[%s383 + $0x2058] sm:$0xff]
        %v580 = vld [vmem:[%s383 + $0x2060] sm:$0xff]
        %v581 = vld [vmem:[%s383 + $0x2068] sm:$0xff]
        %v582 = vld [vmem:[%s383 + $0x2070] sm:$0xff]
        %v583 = vld [vmem:[%s383 + $0x2078] sm:$0xff]
        %v584 = vld [vmem:[%s383 + $0x2080] sm:$0xff]
        %v585 = vld [vmem:[%s383 + $0x2088] sm:$0xff]
        %v586 = vld [vmem:[%s383 + $0x2090] sm:$0xff]
        %v587 = vld [vmem:[%s383 + $0x2098] sm:$0xff]
        %v588 = vld [vmem:[%s383 + $0x20a0] sm:$0xff]
        %v589 = vld [vmem:[%s383 + $0x20a8] sm:$0xff]
        %v590 = vld [vmem:[%s383 + $0x20b0] sm:$0xff]
        %v591 = vld [vmem:[%s383 + $0x20b8] sm:$0xff]
        %v592 = vld [vmem:[%s383 + $0x20c0] sm:$0xff]
        %v593 = vld [vmem:[%s383 + $0x20c8] sm:$0xff]
        %v594 = vld [vmem:[%s383 + $0x20d0] sm:$0xff]
        %v595 = vld [vmem:[%s383 + $0x20d8] sm:$0xff]
        %v596 = vld [vmem:[%s383 + $0x20e0] sm:$0xff]
        %v597 = vld [vmem:[%s383 + $0x20e8] sm:$0xff]
        %v598 = vld [vmem:[%s383 + $0x20f0] sm:$0xff]
        %v599 = vld [vmem:[%s383 + $0x20f8] sm:$0xff]
        %v600 = vld [vmem:[%s383 + $0x2100] sm:$0xff]
        %v601 = vld [vmem:[%s383 + $0x2108] sm:$0xff]
        %v602 = vld [vmem:[%s383 + $0x2110] sm:$0xff]
        %v603 = vld [vmem:[%s383 + $0x2118] sm:$0xff]
        %v604 = vld [vmem:[%s383 + $0x2120] sm:$0xff]
        %v605 = vld [vmem:[%s383 + $0x2128] sm:$0xff]
        %v606 = vld [vmem:[%s383 + $0x2130] sm:$0xff]
        %v607 = vld [vmem:[%s383 + $0x2138] sm:$0xff]
        %v608 = vadd.f32 %v159, %v384
        %v609 = vadd.f32 %v160, %v385
        %v610 = vadd.f32 %v161, %v386
        %v611 = vadd.f32 %v162, %v387
        %v612 = vadd.f32 %v163, %v388
        %v613 = vadd.f32 %v164, %v389
        %v614 = vadd.f32 %v165, %v390
        %v615 = vadd.f32 %v166, %v391
        %v616 = vadd.f32 %v167, %v392
        %v617 = vadd.f32 %v168, %v393
        %v618 = vadd.f32 %v169, %v394
        %v619 = vadd.f32 %v170, %v395
        %v620 = vadd.f32 %v171, %v396
        %v621 = vadd.f32 %v172, %v397
        %v622 = vadd.f32 %v173, %v398
        %v623 = vadd.f32 %v174, %v399
        %v624 = vadd.f32 %v175, %v400
        %v625 = vadd.f32 %v176, %v401
        %v626 = vadd.f32 %v177, %v402
        %v627 = vadd.f32 %v178, %v403
        %v628 = vadd.f32 %v179, %v404
        %v629 = vadd.f32 %v180, %v405
        %v630 = vadd.f32 %v181, %v406
        %v631 = vadd.f32 %v182, %v407
        %v632 = vadd.f32 %v183, %v408
        %v633 = vadd.f32 %v184, %v409
        %v634 = vadd.f32 %v185, %v410
        %v635 = vadd.f32 %v186, %v411
        %v636 = vadd.f32 %v187, %v412
        %v637 = vadd.f32 %v188, %v413
        %v638 = vadd.f32 %v189, %v414
        %v639 = vadd.f32 %v190, %v415
        %v640 = vadd.f32 %v191, %v416
        %v641 = vadd.f32 %v192, %v417
        %v642 = vadd.f32 %v193, %v418
        %v643 = vadd.f32 %v194, %v419
        %v644 = vadd.f32 %v195, %v420
        %v645 = vadd.f32 %v196, %v421
        %v646 = vadd.f32 %v197, %v422
        %v647 = vadd.f32 %v198, %v423
        %v648 = vadd.f32 %v199, %v424
        %v649 = vadd.f32 %v200, %v425
        %v650 = vadd.f32 %v201, %v426
        %v651 = vadd.f32 %v202, %v427
        %v652 = vadd.f32 %v203, %v428
        %v653 = vadd.f32 %v204, %v429
        %v654 = vadd.f32 %v205, %v430
        %v655 = vadd.f32 %v206, %v431
        %v656 = vadd.f32 %v207, %v432
        %v657 = vadd.f32 %v208, %v433
        %v658 = vadd.f32 %v209, %v434
        %v659 = vadd.f32 %v210, %v435
        %v660 = vadd.f32 %v211, %v436
        %v661 = vadd.f32 %v212, %v437
        %v662 = vadd.f32 %v213, %v438
        %v663 = vadd.f32 %v214, %v439
        %v664 = vadd.f32 %v215, %v440
        %v665 = vadd.f32 %v216, %v441
        %v666 = vadd.f32 %v217, %v442
        %v667 = vadd.f32 %v218, %v443
        %v668 = vadd.f32 %v219, %v444
        %v669 = vadd.f32 %v220, %v445
        %v670 = vadd.f32 %v221, %v446
        %v671 = vadd.f32 %v222, %v447
        %v672 = vadd.f32 %v223, %v448
        %v673 = vadd.f32 %v224, %v449
        %v674 = vadd.f32 %v225, %v450
        %v675 = vadd.f32 %v226, %v451
        %v676 = vadd.f32 %v227, %v452
        %v677 = vadd.f32 %v228, %v453
        %v678 = vadd.f32 %v229, %v454
        %v679 = vadd.f32 %v230, %v455
        %v680 = vadd.f32 %v231, %v456
        %v681 = vadd.f32 %v232, %v457
        %v682 = vadd.f32 %v233, %v458
        %v683 = vadd.f32 %v234, %v459
        %v684 = vadd.f32 %v235, %v460
        %v685 = vadd.f32 %v236, %v461
        %v686 = vadd.f32 %v237, %v462
        %v687 = vadd.f32 %v238, %v463
        %v688 = vadd.f32 %v239, %v464
        %v689 = vadd.f32 %v240, %v465
        %v690 = vadd.f32 %v241, %v466
        %v691 = vadd.f32 %v242, %v467
        %v692 = vadd.f32 %v243, %v468
        %v693 = vadd.f32 %v244, %v469
        %v694 = vadd.f32 %v245, %v470
        %v695 = vadd.f32 %v246, %v471
        %v696 = vadd.f32 %v247, %v472
        %v697 = vadd.f32 %v248, %v473
        %v698 = vadd.f32 %v249, %v474
        %v699 = vadd.f32 %v250, %v475
        %v700 = vadd.f32 %v251, %v476
        %v701 = vadd.f32 %v252, %v477
        %v702 = vadd.f32 %v253, %v478
        %v703 = vadd.f32 %v254, %v479
        %v704 = vadd.f32 %v255, %v480
        %v705 = vadd.f32 %v256, %v481
        %v706 = vadd.f32 %v257, %v482
        %v707 = vadd.f32 %v258, %v483
        %v708 = vadd.f32 %v259, %v484
        %v709 = vadd.f32 %v260, %v485
        %v710 = vadd.f32 %v261, %v486
        %v711 = vadd.f32 %v262, %v487
        %v712 = vadd.f32 %v263, %v488
        %v713 = vadd.f32 %v264, %v489
        %v714 = vadd.f32 %v265, %v490
        %v715 = vadd.f32 %v266, %v491
        %v716 = vadd.f32 %v267, %v492
        %v717 = vadd.f32 %v268, %v493
        %v718 = vadd.f32 %v269, %v494
        %v719 = vadd.f32 %v270, %v495
        %v720 = vadd.f32 %v271, %v496
        %v721 = vadd.f32 %v272, %v497
        %v722 = vadd.f32 %v273, %v498
        %v723 = vadd.f32 %v274, %v499
        %v724 = vadd.f32 %v275, %v500
        %v725 = vadd.f32 %v276, %v501
        %v726 = vadd.f32 %v277, %v502
        %v727 = vadd.f32 %v278, %v503
        %v728 = vadd.f32 %v279, %v504
        %v729 = vadd.f32 %v280, %v505
        %v730 = vadd.f32 %v281, %v506
        %v731 = vadd.f32 %v282, %v507
        %v732 = vadd.f32 %v283, %v508
        %v733 = vadd.f32 %v284, %v509
        %v734 = vadd.f32 %v285, %v510
        %v735 = vadd.f32 %v286, %v511
        %v736 = vadd.f32 %v287, %v512
        %v737 = vadd.f32 %v288, %v513
        %v738 = vadd.f32 %v289, %v514
        %v739 = vadd.f32 %v290, %v515
        %v740 = vadd.f32 %v291, %v516
        %v741 = vadd.f32 %v292, %v517
        %v742 = vadd.f32 %v293, %v518
        %v743 = vadd.f32 %v294, %v519
        %v744 = vadd.f32 %v295, %v520
        %v745 = vadd.f32 %v296, %v521
        %v746 = vadd.f32 %v297, %v522
        %v747 = vadd.f32 %v298, %v523
        %v748 = vadd.f32 %v299, %v524
        %v749 = vadd.f32 %v300, %v525
        %v750 = vadd.f32 %v301, %v526
        %v751 = vadd.f32 %v302, %v527
        %v752 = vadd.f32 %v303, %v528
        %v753 = vadd.f32 %v304, %v529
        %v754 = vadd.f32 %v305, %v530
        %v755 = vadd.f32 %v306, %v531
        %v756 = vadd.f32 %v307, %v532
        %v757 = vadd.f32 %v308, %v533
        %v758 = vadd.f32 %v309, %v534
        %v759 = vadd.f32 %v310, %v535
        %v760 = vadd.f32 %v311, %v536
        %v761 = vadd.f32 %v312, %v537
        %v762 = vadd.f32 %v313, %v538
        %v763 = vadd.f32 %v314, %v539
        %v764 = vadd.f32 %v315, %v540
        %v765 = vadd.f32 %v316, %v541
        %v766 = vadd.f32 %v317, %v542
        %v767 = vadd.f32 %v318, %v543
        %v768 = vadd.f32 %v319, %v544
        %v769 = vadd.f32 %v320, %v545
        %v770 = vadd.f32 %v321, %v546
        %v771 = vadd.f32 %v322, %v547
        %v772 = vadd.f32 %v323, %v548
        %v773 = vadd.f32 %v324, %v549
        %v774 = vadd.f32 %v325, %v550
        %v775 = vadd.f32 %v326, %v551
        %v776 = vadd.f32 %v327, %v552
        %v777 = vadd.f32 %v328, %v553
        %v778 = vadd.f32 %v329, %v554
        %v779 = vadd.f32 %v330, %v555
        %v780 = vadd.f32 %v331, %v556
        %v781 = vadd.f32 %v332, %v557
        %v782 = vadd.f32 %v333, %v558
        %v783 = vadd.f32 %v334, %v559
        %v784 = vadd.f32 %v335, %v560
        %v785 = vadd.f32 %v336, %v561
        %v786 = vadd.f32 %v337, %v562
        %v787 = vadd.f32 %v338, %v563
        %v788 = vadd.f32 %v339, %v564
        %v789 = vadd.f32 %v340, %v565
        %v790 = vadd.f32 %v341, %v566
        %v791 = vadd.f32 %v342, %v567
        %v792 = vadd.f32 %v343, %v568
        %v793 = vadd.f32 %v344, %v569
        %v794 = vadd.f32 %v345, %v570
        %v795 = vadd.f32 %v346, %v571
        %v796 = vadd.f32 %v347, %v572
        %v797 = vadd.f32 %v348, %v573
        %v798 = vadd.f32 %v349, %v574
        %v799 = vadd.f32 %v350, %v575
        %v800 = vadd.f32 %v351, %v576
        %v801 = vadd.f32 %v352, %v577
        %v802 = vadd.f32 %v353, %v578
        %v803 = vadd.f32 %v354, %v579
        %v804 = vadd.f32 %v355, %v580
        %v805 = vadd.f32 %v356, %v581
        %v806 = vadd.f32 %v357, %v582
        %v807 = vadd.f32 %v358, %v583
        %v808 = vadd.f32 %v359, %v584
        %v809 = vadd.f32 %v360, %v585
        %v810 = vadd.f32 %v361, %v586
        %v811 = vadd.f32 %v362, %v587
        %v812 = vadd.f32 %v363, %v588
        %v813 = vadd.f32 %v364, %v589
        %v814 = vadd.f32 %v365, %v590
        %v815 = vadd.f32 %v366, %v591
        %v816 = vadd.f32 %v367, %v592
        %v817 = vadd.f32 %v368, %v593
        %v818 = vadd.f32 %v369, %v594
        %v819 = vadd.f32 %v370, %v595
        %v820 = vadd.f32 %v371, %v596
        %v821 = vadd.f32 %v372, %v597
        %v822 = vadd.f32 %v373, %v598
        %v823 = vadd.f32 %v374, %v599
        %v824 = vadd.f32 %v375, %v600
        %v825 = vadd.f32 %v376, %v601
        %v826 = vadd.f32 %v377, %v602
        %v827 = vadd.f32 %v378, %v603
        %v828 = vadd.f32 %v379, %v604
        %v829 = vadd.f32 %v380, %v605
        %v830 = vadd.f32 %v381, %v606
        %v831 = vadd.f32 %v382, %v607
        %v832 = vmul.f32 %v608, 0.5
        %v833 = vmul.f32 %v609, 0.5
        %v834 = vmul.f32 %v610, 0.5
        %v835 = vmul.f32 %v611, 0.5
        %v836 = vmul.f32 %v612, 0.5
        %v837 = vmul.f32 %v613, 0.5
        %v838 = vmul.f32 %v614, 0.5
        %v839 = vmul.f32 %v615, 0.5
        %v840 = vmul.f32 %v616, 0.5
        %v841 = vmul.f32 %v617, 0.5
        %v842 = vmul.f32 %v618, 0.5
        %v843 = vmul.f32 %v619, 0.5
        %v844 = vmul.f32 %v620, 0.5
        %v845 = vmul.f32 %v621, 0.5
        %v846 = vmul.f32 %v622, 0.5
        %v847 = vmul.f32 %v623, 0.5
        %v848 = vmul.f32 %v624, 0.5
        %v849 = vmul.f32 %v625, 0.5
        %v850 = vmul.f32 %v626, 0.5
        %v851 = vmul.f32 %v627, 0.5
        %v852 = vmul.f32 %v628, 0.5
        %v853 = vmul.f32 %v629, 0.5
        %v854 = vmul.f32 %v630, 0.5
        %v855 = vmul.f32 %v631, 0.5
        %v856 = vmul.f32 %v632, 0.5
        %v857 = vmul.f32 %v633, 0.5
        %v858 = vmul.f32 %v634, 0.5
        %v859 = vmul.f32 %v635, 0.5
        %v860 = vmul.f32 %v636, 0.5
        %v861 = vmul.f32 %v637, 0.5
        %v862 = vmul.f32 %v638, 0.5
        %v863 = vmul.f32 %v639, 0.5
        %v864 = vmul.f32 %v640, 0.5
        %v865 = vmul.f32 %v641, 0.5
        %v866 = vmul.f32 %v642, 0.5
        %v867 = vmul.f32 %v643, 0.5
        %v868 = vmul.f32 %v644, 0.5
        %v869 = vmul.f32 %v645, 0.5
        %v870 = vmul.f32 %v646, 0.5
        %v871 = vmul.f32 %v647, 0.5
        %v872 = vmul.f32 %v648, 0.5
        %v873 = vmul.f32 %v649, 0.5
        %v874 = vmul.f32 %v650, 0.5
        %v875 = vmul.f32 %v651, 0.5
        %v876 = vmul.f32 %v652, 0.5
        %v877 = vmul.f32 %v653, 0.5
        %v878 = vmul.f32 %v654, 0.5
        %v879 = vmul.f32 %v655, 0.5
        %v880 = vmul.f32 %v656, 0.5
        %v881 = vmul.f32 %v657, 0.5
        %v882 = vmul.f32 %v658, 0.5
        %v883 = vmul.f32 %v659, 0.5
        %v884 = vmul.f32 %v660, 0.5
        %v885 = vmul.f32 %v661, 0.5
        %v886 = vmul.f32 %v662, 0.5
        %v887 = vmul.f32 %v663, 0.5
        %v888 = vmul.f32 %v664, 0.5
        %v889 = vmul.f32 %v665, 0.5
        %v890 = vmul.f32 %v666, 0.5
        %v891 = vmul.f32 %v667, 0.5
        %v892 = vmul.f32 %v668, 0.5
        %v893 = vmul.f32 %v669, 0.5
        %v894 = vmul.f32 %v670, 0.5
        %v895 = vmul.f32 %v671, 0.5
        %v896 = vmul.f32 %v672, 0.5
        %v897 = vmul.f32 %v673, 0.5
        %v898 = vmul.f32 %v674, 0.5
        %v899 = vmul.f32 %v675, 0.5
        %v900 = vmul.f32 %v676, 0.5
        %v901 = vmul.f32 %v677, 0.5
        %v902 = vmul.f32 %v678, 0.5
        %v903 = vmul.f32 %v679, 0.5
        %v904 = vmul.f32 %v680, 0.5
        %v905 = vmul.f32 %v681, 0.5
        %v906 = vmul.f32 %v682, 0.5
        %v907 = vmul.f32 %v683, 0.5
        %v908 = vmul.f32 %v684, 0.5
        %v909 = vmul.f32 %v685, 0.5
        %v910 = vmul.f32 %v686, 0.5
        %v911 = vmul.f32 %v687, 0.5
        %v912 = vmul.f32 %v688, 0.5
        %v913 = vmul.f32 %v689, 0.5
        %v914 = vmul.f32 %v690, 0.5
        %v915 = vmul.f32 %v691, 0.5
        %v916 = vmul.f32 %v692, 0.5
        %v917 = vmul.f32 %v693, 0.5
        %v918 = vmul.f32 %v694, 0.5
        %v919 = vmul.f32 %v695, 0.5
        %v920 = vmul.f32 %v696, 0.5
        %v921 = vmul.f32 %v697, 0.5
        %v922 = vmul.f32 %v698, 0.5
        %v923 = vmul.f32 %v699, 0.5
        %v924 = vmul.f32 %v700, 0.5
        %v925 = vmul.f32 %v701, 0.5
        %v926 = vmul.f32 %v702, 0.5
        %v927 = vmul.f32 %v703, 0.5
        %v928 = vmul.f32 %v704, 0.5
        %v929 = vmul.f32 %v705, 0.5
        %v930 = vmul.f32 %v706, 0.5
        %v931 = vmul.f32 %v707, 0.5
        %v932 = vmul.f32 %v708, 0.5
        %v933 = vmul.f32 %v709, 0.5
        %v934 = vmul.f32 %v710, 0.5
        %v935 = vmul.f32 %v711, 0.5
        %v936 = vmul.f32 %v712, 0.5
        %v937 = vmul.f32 %v713, 0.5
        %v938 = vmul.f32 %v714, 0.5
        %v939 = vmul.f32 %v715, 0.5
        %v940 = vmul.f32 %v716, 0.5
        %v941 = vmul.f32 %v717, 0.5
        %v942 = vmul.f32 %v718, 0.5
        %v943 = vmul.f32 %v719, 0.5
        %v944 = vmul.f32 %v720, 0.5
        %v945 = vmul.f32 %v721, 0.5
        %v946 = vmul.f32 %v722, 0.5
        %v947 = vmul.f32 %v723, 0.5
        %v948 = vmul.f32 %v724, 0.5
        %v949 = vmul.f32 %v725, 0.5
        %v950 = vmul.f32 %v726, 0.5
        %v951 = vmul.f32 %v727, 0.5
        %v952 = vmul.f32 %v728, 0.5
        %v953 = vmul.f32 %v729, 0.5
        %v954 = vmul.f32 %v730, 0.5
        %v955 = vmul.f32 %v731, 0.5
        %v956 = vmul.f32 %v732, 0.5
        %v957 = vmul.f32 %v733, 0.5
        %v958 = vmul.f32 %v734, 0.5
        %v959 = vmul.f32 %v735, 0.5
        %v960 = vmul.f32 %v736, 0.5
        %v961 = vmul.f32 %v737, 0.5
        %v962 = vmul.f32 %v738, 0.5
        %v963 = vmul.f32 %v739, 0.5
        %v964 = vmul.f32 %v740, 0.5
        %v965 = vmul.f32 %v741, 0.5
        %v966 = vmul.f32 %v742, 0.5
        %v967 = vmul.f32 %v743, 0.5
        %v968 = vmul.f32 %v744, 0.5
        %v969 = vmul.f32 %v745, 0.5
        %v970 = vmul.f32 %v746, 0.5
        %v971 = vmul.f32 %v747, 0.5
        %v972 = vmul.f32 %v748, 0.5
        %v973 = vmul.f32 %v749, 0.5
        %v974 = vmul.f32 %v750, 0.5
        %v975 = vmul.f32 %v751, 0.5
        %v976 = vmul.f32 %v752, 0.5
        %v977 = vmul.f32 %v753, 0.5
        %v978 = vmul.f32 %v754, 0.5
        %v979 = vmul.f32 %v755, 0.5
        %v980 = vmul.f32 %v756, 0.5
        %v981 = vmul.f32 %v757, 0.5
        %v982 = vmul.f32 %v758, 0.5
        %v983 = vmul.f32 %v759, 0.5
        %v984 = vmul.f32 %v760, 0.5
        %v985 = vmul.f32 %v761, 0.5
        %v986 = vmul.f32 %v762, 0.5
        %v987 = vmul.f32 %v763, 0.5
        %v988 = vmul.f32 %v764, 0.5
        %v989 = vmul.f32 %v765, 0.5
        %v990 = vmul.f32 %v766, 0.5
        %v991 = vmul.f32 %v767, 0.5
        %v992 = vmul.f32 %v768, 0.5
        %v993 = vmul.f32 %v769, 0.5
        %v994 = vmul.f32 %v770, 0.5
        %v995 = vmul.f32 %v771, 0.5
        %v996 = vmul.f32 %v772, 0.5
        %v997 = vmul.f32 %v773, 0.5
        %v998 = vmul.f32 %v774, 0.5
        %v999 = vmul.f32 %v775, 0.5
        %v1000 = vmul.f32 %v776, 0.5
        %v1001 = vmul.f32 %v777, 0.5
        %v1002 = vmul.f32 %v778, 0.5
        %v1003 = vmul.f32 %v779, 0.5
        %v1004 = vmul.f32 %v780, 0.5
        %v1005 = vmul.f32 %v781, 0.5
        %v1006 = vmul.f32 %v782, 0.5
        %v1007 = vmul.f32 %v783, 0.5
        %v1008 = vmul.f32 %v784, 0.5
        %v1009 = vmul.f32 %v785, 0.5
        %v1010 = vmul.f32 %v786, 0.5
        %v1011 = vmul.f32 %v787, 0.5
        %v1012 = vmul.f32 %v788, 0.5
        %v1013 = vmul.f32 %v789, 0.5
        %v1014 = vmul.f32 %v790, 0.5
        %v1015 = vmul.f32 %v791, 0.5
        %v1016 = vmul.f32 %v792, 0.5
        %v1017 = vmul.f32 %v793, 0.5
        %v1018 = vmul.f32 %v794, 0.5
        %v1019 = vmul.f32 %v795, 0.5
        %v1020 = vmul.f32 %v796, 0.5
        %v1021 = vmul.f32 %v797, 0.5
        %v1022 = vmul.f32 %v798, 0.5
        %v1023 = vmul.f32 %v799, 0.5
        %v1024 = vmul.f32 %v800, 0.5
        %v1025 = vmul.f32 %v801, 0.5
        %v1026 = vmul.f32 %v802, 0.5
        %v1027 = vmul.f32 %v803, 0.5
        %v1028 = vmul.f32 %v804, 0.5
        %v1029 = vmul.f32 %v805, 0.5
        %v1030 = vmul.f32 %v806, 0.5
        %v1031 = vmul.f32 %v807, 0.5
        %v1032 = vmul.f32 %v808, 0.5
        %v1033 = vmul.f32 %v809, 0.5
        %v1034 = vmul.f32 %v810, 0.5
        %v1035 = vmul.f32 %v811, 0.5
        %v1036 = vmul.f32 %v812, 0.5
        %v1037 = vmul.f32 %v813, 0.5
        %v1038 = vmul.f32 %v814, 0.5
        %v1039 = vmul.f32 %v815, 0.5
        %v1040 = vmul.f32 %v816, 0.5
        %v1041 = vmul.f32 %v817, 0.5
        %v1042 = vmul.f32 %v818, 0.5
        %v1043 = vmul.f32 %v819, 0.5
        %v1044 = vmul.f32 %v820, 0.5
        %v1045 = vmul.f32 %v821, 0.5
        %v1046 = vmul.f32 %v822, 0.5
        %v1047 = vmul.f32 %v823, 0.5
        %v1048 = vmul.f32 %v824, 0.5
        %v1049 = vmul.f32 %v825, 0.5
        %v1050 = vmul.f32 %v826, 0.5
        %v1051 = vmul.f32 %v827, 0.5
        %v1052 = vmul.f32 %v828, 0.5
        %v1053 = vmul.f32 %v829, 0.5
        %v1054 = vmul.f32 %v830, 0.5
        %v1055 = vmul.f32 %v831, 0.5
        %1056 = vst [vmem:[%s154] sm:$0xff] %v832
        %vm1057 = vcmask 785408
        %1058 = vst.msk [vmem:[%s154 + $0x8] sm:$0xff] %vm1057, %v833
        %1059 = vst [vmem:[%s154 + $0x10] sm:$0xff] %v834
        %1060 = vst.msk [vmem:[%s154 + $0x18] sm:$0xff] %vm1057, %v835
        %1061 = vst [vmem:[%s154 + $0x20] sm:$0xff] %v836
        %1062 = vst.msk [vmem:[%s154 + $0x28] sm:$0xff] %vm1057, %v837
        %1063 = vst [vmem:[%s154 + $0x30] sm:$0xff] %v838
        %1064 = vst.msk [vmem:[%s154 + $0x38] sm:$0xff] %vm1057, %v839
        %1065 = vst [vmem:[%s154 + $0x40] sm:$0xff] %v840
        %1066 = vst.msk [vmem:[%s154 + $0x48] sm:$0xff] %vm1057, %v841
        %1067 = vst [vmem:[%s154 + $0x50] sm:$0xff] %v842
        %1068 = vst.msk [vmem:[%s154 + $0x58] sm:$0xff] %vm1057, %v843
        %1069 = vst [vmem:[%s154 + $0x60] sm:$0xff] %v844
        %1070 = vst.msk [vmem:[%s154 + $0x68] sm:$0xff] %vm1057, %v845
        %1071 = vst [vmem:[%s154 + $0x70] sm:$0xff] %v846
        %1072 = vst.msk [vmem:[%s154 + $0x78] sm:$0xff] %vm1057, %v847
        %1073 = vst [vmem:[%s154 + $0x80] sm:$0xff] %v848
        %1074 = vst.msk [vmem:[%s154 + $0x88] sm:$0xff] %vm1057, %v849
        %1075 = vst [vmem:[%s154 + $0x90] sm:$0xff] %v850
        %1076 = vst.msk [vmem:[%s154 + $0x98] sm:$0xff] %vm1057, %v851
        %1077 = vst [vmem:[%s154 + $0xa0] sm:$0xff] %v852
        %1078 = vst.msk [vmem:[%s154 + $0xa8] sm:$0xff] %vm1057, %v853
        %1079 = vst [vmem:[%s154 + $0xb0] sm:$0xff] %v854
        %1080 = vst.msk [vmem:[%s154 + $0xb8] sm:$0xff] %vm1057, %v855
        %1081 = vst [vmem:[%s154 + $0xc0] sm:$0xff] %v856
        %1082 = vst.msk [vmem:[%s154 + $0xc8] sm:$0xff] %vm1057, %v857
        %1083 = vst [vmem:[%s154 + $0xd0] sm:$0xff] %v858
        %1084 = vst.msk [vmem:[%s154 + $0xd8] sm:$0xff] %vm1057, %v859
        %1085 = vst [vmem:[%s154 + $0xe0] sm:$0xff] %v860
        %1086 = vst.msk [vmem:[%s154 + $0xe8] sm:$0xff] %vm1057, %v861
        %1087 = vst [vmem:[%s154 + $0xf0] sm:$0xff] %v862
        %1088 = vst.msk [vmem:[%s154 + $0xf8] sm:$0xff] %vm1057, %v863
        %1089 = vst [vmem:[%s154 + $0x100] sm:$0xff] %v864
        %1090 = vst.msk [vmem:[%s154 + $0x108] sm:$0xff] %vm1057, %v865
        %1091 = vst [vmem:[%s154 + $0x110] sm:$0xff] %v866
        %1092 = vst.msk [vmem:[%s154 + $0x118] sm:$0xff] %vm1057, %v867
        %1093 = vst [vmem:[%s154 + $0x120] sm:$0xff] %v868
        %1094 = vst.msk [vmem:[%s154 + $0x128] sm:$0xff] %vm1057, %v869
        %1095 = vst [vmem:[%s154 + $0x130] sm:$0xff] %v870
        %1096 = vst.msk [vmem:[%s154 + $0x138] sm:$0xff] %vm1057, %v871
        %1097 = vst [vmem:[%s154 + $0x140] sm:$0xff] %v872
        %1098 = vst.msk [vmem:[%s154 + $0x148] sm:$0xff] %vm1057, %v873
        %1099 = vst [vmem:[%s154 + $0x150] sm:$0xff] %v874
        %1100 = vst.msk [vmem:[%s154 + $0x158] sm:$0xff] %vm1057, %v875
        %1101 = vst [vmem:[%s154 + $0x160] sm:$0xff] %v876
        %1102 = vst.msk [vmem:[%s154 + $0x168] sm:$0xff] %vm1057, %v877
        %1103 = vst [vmem:[%s154 + $0x170] sm:$0xff] %v878
        %1104 = vst.msk [vmem:[%s154 + $0x178] sm:$0xff] %vm1057, %v879
        %1105 = vst [vmem:[%s154 + $0x180] sm:$0xff] %v880
        %1106 = vst.msk [vmem:[%s154 + $0x188] sm:$0xff] %vm1057, %v881
        %1107 = vst [vmem:[%s154 + $0x190] sm:$0xff] %v882
        %1108 = vst.msk [vmem:[%s154 + $0x198] sm:$0xff] %vm1057, %v883
        %1109 = vst [vmem:[%s154 + $0x1a0] sm:$0xff] %v884
        %1110 = vst.msk [vmem:[%s154 + $0x1a8] sm:$0xff] %vm1057, %v885
        %1111 = vst [vmem:[%s154 + $0x1b0] sm:$0xff] %v886
        %1112 = vst.msk [vmem:[%s154 + $0x1b8] sm:$0xff] %vm1057, %v887
        %1113 = vst [vmem:[%s154 + $0x540] sm:$0xff] %v888
        %1114 = vst.msk [vmem:[%s154 + $0x548] sm:$0xff] %vm1057, %v889
        %1115 = vst [vmem:[%s154 + $0x550] sm:$0xff] %v890
        %1116 = vst.msk [vmem:[%s154 + $0x558] sm:$0xff] %vm1057, %v891
        %1117 = vst [vmem:[%s154 + $0x560] sm:$0xff] %v892
        %1118 = vst.msk [vmem:[%s154 + $0x568] sm:$0xff] %vm1057, %v893
        %1119 = vst [vmem:[%s154 + $0x570] sm:$0xff] %v894
        %1120 = vst.msk [vmem:[%s154 + $0x578] sm:$0xff] %vm1057, %v895
        %1121 = vst [vmem:[%s154 + $0x580] sm:$0xff] %v896
        %1122 = vst.msk [vmem:[%s154 + $0x588] sm:$0xff] %vm1057, %v897
        %1123 = vst [vmem:[%s154 + $0x590] sm:$0xff] %v898
        %1124 = vst.msk [vmem:[%s154 + $0x598] sm:$0xff] %vm1057, %v899
        %1125 = vst [vmem:[%s154 + $0x5a0] sm:$0xff] %v900
        %1126 = vst.msk [vmem:[%s154 + $0x5a8] sm:$0xff] %vm1057, %v901
        %1127 = vst [vmem:[%s154 + $0x5b0] sm:$0xff] %v902
        %1128 = vst.msk [vmem:[%s154 + $0x5b8] sm:$0xff] %vm1057, %v903
        %1129 = vst [vmem:[%s154 + $0x5c0] sm:$0xff] %v904
        %1130 = vst.msk [vmem:[%s154 + $0x5c8] sm:$0xff] %vm1057, %v905
        %1131 = vst [vmem:[%s154 + $0x5d0] sm:$0xff] %v906
        %1132 = vst.msk [vmem:[%s154 + $0x5d8] sm:$0xff] %vm1057, %v907
        %1133 = vst [vmem:[%s154 + $0x5e0] sm:$0xff] %v908
        %1134 = vst.msk [vmem:[%s154 + $0x5e8] sm:$0xff] %vm1057, %v909
        %1135 = vst [vmem:[%s154 + $0x5f0] sm:$0xff] %v910
        %1136 = vst.msk [vmem:[%s154 + $0x5f8] sm:$0xff] %vm1057, %v911
        %1137 = vst [vmem:[%s154 + $0x600] sm:$0xff] %v912
        %1138 = vst.msk [vmem:[%s154 + $0x608] sm:$0xff] %vm1057, %v913
        %1139 = vst [vmem:[%s154 + $0x610] sm:$0xff] %v914
        %1140 = vst.msk [vmem:[%s154 + $0x618] sm:$0xff] %vm1057, %v915
        %1141 = vst [vmem:[%s154 + $0x620] sm:$0xff] %v916
        %1142 = vst.msk [vmem:[%s154 + $0x628] sm:$0xff] %vm1057, %v917
        %1143 = vst [vmem:[%s154 + $0x630] sm:$0xff] %v918
        %1144 = vst.msk [vmem:[%s154 + $0x638] sm:$0xff] %vm1057, %v919
        %1145 = vst [vmem:[%s154 + $0x640] sm:$0xff] %v920
        %1146 = vst.msk [vmem:[%s154 + $0x648] sm:$0xff] %vm1057, %v921
        %1147 = vst [vmem:[%s154 + $0x650] sm:$0xff] %v922
        %1148 = vst.msk [vmem:[%s154 + $0x658] sm:$0xff] %vm1057, %v923
        %1149 = vst [vmem:[%s154 + $0x660] sm:$0xff] %v924
        %1150 = vst.msk [vmem:[%s154 + $0x668] sm:$0xff] %vm1057, %v925
        %1151 = vst [vmem:[%s154 + $0x670] sm:$0xff] %v926
        %1152 = vst.msk [vmem:[%s154 + $0x678] sm:$0xff] %vm1057, %v927
        %1153 = vst [vmem:[%s154 + $0x680] sm:$0xff] %v928
        %1154 = vst.msk [vmem:[%s154 + $0x688] sm:$0xff] %vm1057, %v929
        %1155 = vst [vmem:[%s154 + $0x690] sm:$0xff] %v930
        %1156 = vst.msk [vmem:[%s154 + $0x698] sm:$0xff] %vm1057, %v931
        %1157 = vst [vmem:[%s154 + $0x6a0] sm:$0xff] %v932
        %1158 = vst.msk [vmem:[%s154 + $0x6a8] sm:$0xff] %vm1057, %v933
        %1159 = vst [vmem:[%s154 + $0x6b0] sm:$0xff] %v934
        %1160 = vst.msk [vmem:[%s154 + $0x6b8] sm:$0xff] %vm1057, %v935
        %1161 = vst [vmem:[%s154 + $0x6c0] sm:$0xff] %v936
        %1162 = vst.msk [vmem:[%s154 + $0x6c8] sm:$0xff] %vm1057, %v937
        %1163 = vst [vmem:[%s154 + $0x6d0] sm:$0xff] %v938
        %1164 = vst.msk [vmem:[%s154 + $0x6d8] sm:$0xff] %vm1057, %v939
        %1165 = vst [vmem:[%s154 + $0x6e0] sm:$0xff] %v940
        %1166 = vst.msk [vmem:[%s154 + $0x6e8] sm:$0xff] %vm1057, %v941
        %1167 = vst [vmem:[%s154 + $0x6f0] sm:$0xff] %v942
        %1168 = vst.msk [vmem:[%s154 + $0x6f8] sm:$0xff] %vm1057, %v943
        %1169 = vst [vmem:[%s154 + $0xa80] sm:$0xff] %v944
        %1170 = vst.msk [vmem:[%s154 + $0xa88] sm:$0xff] %vm1057, %v945
        %1171 = vst [vmem:[%s154 + $0xa90] sm:$0xff] %v946
        %1172 = vst.msk [vmem:[%s154 + $0xa98] sm:$0xff] %vm1057, %v947
        %1173 = vst [vmem:[%s154 + $0xaa0] sm:$0xff] %v948
        %1174 = vst.msk [vmem:[%s154 + $0xaa8] sm:$0xff] %vm1057, %v949
        %1175 = vst [vmem:[%s154 + $0xab0] sm:$0xff] %v950
        %1176 = vst.msk [vmem:[%s154 + $0xab8] sm:$0xff] %vm1057, %v951
        %1177 = vst [vmem:[%s154 + $0xac0] sm:$0xff] %v952
        %1178 = vst.msk [vmem:[%s154 + $0xac8] sm:$0xff] %vm1057, %v953
        %1179 = vst [vmem:[%s154 + $0xad0] sm:$0xff] %v954
        %1180 = vst.msk [vmem:[%s154 + $0xad8] sm:$0xff] %vm1057, %v955
        %1181 = vst [vmem:[%s154 + $0xae0] sm:$0xff] %v956
        %1182 = vst.msk [vmem:[%s154 + $0xae8] sm:$0xff] %vm1057, %v957
        %1183 = vst [vmem:[%s154 + $0xaf0] sm:$0xff] %v958
        %1184 = vst.msk [vmem:[%s154 + $0xaf8] sm:$0xff] %vm1057, %v959
        %1185 = vst [vmem:[%s154 + $0xb00] sm:$0xff] %v960
        %1186 = vst.msk [vmem:[%s154 + $0xb08] sm:$0xff] %vm1057, %v961
        %1187 = vst [vmem:[%s154 + $0xb10] sm:$0xff] %v962
        %1188 = vst.msk [vmem:[%s154 + $0xb18] sm:$0xff] %vm1057, %v963
        %1189 = vst [vmem:[%s154 + $0xb20] sm:$0xff] %v964
        %1190 = vst.msk [vmem:[%s154 + $0xb28] sm:$0xff] %vm1057, %v965
        %1191 = vst [vmem:[%s154 + $0xb30] sm:$0xff] %v966
        %1192 = vst.msk [vmem:[%s154 + $0xb38] sm:$0xff] %vm1057, %v967
        %1193 = vst [vmem:[%s154 + $0xb40] sm:$0xff] %v968
        %1194 = vst.msk [vmem:[%s154 + $0xb48] sm:$0xff] %vm1057, %v969
        %1195 = vst [vmem:[%s154 + $0xb50] sm:$0xff] %v970
        %1196 = vst.msk [vmem:[%s154 + $0xb58] sm:$0xff] %vm1057, %v971
        %1197 = vst [vmem:[%s154 + $0xb60] sm:$0xff] %v972
        %1198 = vst.msk [vmem:[%s154 + $0xb68] sm:$0xff] %vm1057, %v973
        %1199 = vst [vmem:[%s154 + $0xb70] sm:$0xff] %v974
        %1200 = vst.msk [vmem:[%s154 + $0xb78] sm:$0xff] %vm1057, %v975
        %1201 = vst [vmem:[%s154 + $0xb80] sm:$0xff] %v976
        %1202 = vst.msk [vmem:[%s154 + $0xb88] sm:$0xff] %vm1057, %v977
        %1203 = vst [vmem:[%s154 + $0xb90] sm:$0xff] %v978
        %1204 = vst.msk [vmem:[%s154 + $0xb98] sm:$0xff] %vm1057, %v979
        %1205 = vst [vmem:[%s154 + $0xba0] sm:$0xff] %v980
        %1206 = vst.msk [vmem:[%s154 + $0xba8] sm:$0xff] %vm1057, %v981
        %1207 = vst [vmem:[%s154 + $0xbb0] sm:$0xff] %v982
        %1208 = vst.msk [vmem:[%s154 + $0xbb8] sm:$0xff] %vm1057, %v983
        %1209 = vst [vmem:[%s154 + $0xbc0] sm:$0xff] %v984
        %1210 = vst.msk [vmem:[%s154 + $0xbc8] sm:$0xff] %vm1057, %v985
        %1211 = vst [vmem:[%s154 + $0xbd0] sm:$0xff] %v986
        %1212 = vst.msk [vmem:[%s154 + $0xbd8] sm:$0xff] %vm1057, %v987
        %1213 = vst [vmem:[%s154 + $0xbe0] sm:$0xff] %v988
        %1214 = vst.msk [vmem:[%s154 + $0xbe8] sm:$0xff] %vm1057, %v989
        %1215 = vst [vmem:[%s154 + $0xbf0] sm:$0xff] %v990
        %1216 = vst.msk [vmem:[%s154 + $0xbf8] sm:$0xff] %vm1057, %v991
        %1217 = vst [vmem:[%s154 + $0xc00] sm:$0xff] %v992
        %1218 = vst.msk [vmem:[%s154 + $0xc08] sm:$0xff] %vm1057, %v993
        %1219 = vst [vmem:[%s154 + $0xc10] sm:$0xff] %v994
        %1220 = vst.msk [vmem:[%s154 + $0xc18] sm:$0xff] %vm1057, %v995
        %1221 = vst [vmem:[%s154 + $0xc20] sm:$0xff] %v996
        %1222 = vst.msk [vmem:[%s154 + $0xc28] sm:$0xff] %vm1057, %v997
        %1223 = vst [vmem:[%s154 + $0xc30] sm:$0xff] %v998
        %1224 = vst.msk [vmem:[%s154 + $0xc38] sm:$0xff] %vm1057, %v999
        %1225 = vst [vmem:[%s154 + $0xfc0] sm:$0xff] %v1000
        %1226 = vst.msk [vmem:[%s154 + $0xfc8] sm:$0xff] %vm1057, %v1001
        %1227 = vst [vmem:[%s154 + $0xfd0] sm:$0xff] %v1002
        %1228 = vst.msk [vmem:[%s154 + $0xfd8] sm:$0xff] %vm1057, %v1003
        %1229 = vst [vmem:[%s154 + $0xfe0] sm:$0xff] %v1004
        %1230 = vst.msk [vmem:[%s154 + $0xfe8] sm:$0xff] %vm1057, %v1005
        %1231 = vst [vmem:[%s154 + $0xff0] sm:$0xff] %v1006
        %1232 = vst.msk [vmem:[%s154 + $0xff8] sm:$0xff] %vm1057, %v1007
        %1233 = vst [vmem:[%s154 + $0x1000] sm:$0xff] %v1008
        %1234 = vst.msk [vmem:[%s154 + $0x1008] sm:$0xff] %vm1057, %v1009
        %1235 = vst [vmem:[%s154 + $0x1010] sm:$0xff] %v1010
        %1236 = vst.msk [vmem:[%s154 + $0x1018] sm:$0xff] %vm1057, %v1011
        %1237 = vst [vmem:[%s154 + $0x1020] sm:$0xff] %v1012
        %1238 = vst.msk [vmem:[%s154 + $0x1028] sm:$0xff] %vm1057, %v1013
        %1239 = vst [vmem:[%s154 + $0x1030] sm:$0xff] %v1014
        %1240 = vst.msk [vmem:[%s154 + $0x1038] sm:$0xff] %vm1057, %v1015
        %1241 = vst [vmem:[%s154 + $0x1040] sm:$0xff] %v1016
        %1242 = vst.msk [vmem:[%s154 + $0x1048] sm:$0xff] %vm1057, %v1017
        %1243 = vst [vmem:[%s154 + $0x1050] sm:$0xff] %v1018
        %1244 = vst.msk [vmem:[%s154 + $0x1058] sm:$0xff] %vm1057, %v1019
        %1245 = vst [vmem:[%s154 + $0x1060] sm:$0xff] %v1020
        %1246 = vst.msk [vmem:[%s154 + $0x1068] sm:$0xff] %vm1057, %v1021
        %1247 = vst [vmem:[%s154 + $0x1070] sm:$0xff] %v1022
        %1248 = vst.msk [vmem:[%s154 + $0x1078] sm:$0xff] %vm1057, %v1023
        %1249 = vst [vmem:[%s154 + $0x1080] sm:$0xff] %v1024
        %1250 = vst.msk [vmem:[%s154 + $0x1088] sm:$0xff] %vm1057, %v1025
        %1251 = vst [vmem:[%s154 + $0x1090] sm:$0xff] %v1026
        %1252 = vst.msk [vmem:[%s154 + $0x1098] sm:$0xff] %vm1057, %v1027
        %1253 = vst [vmem:[%s154 + $0x10a0] sm:$0xff] %v1028
        %1254 = vst.msk [vmem:[%s154 + $0x10a8] sm:$0xff] %vm1057, %v1029
        %1255 = vst [vmem:[%s154 + $0x10b0] sm:$0xff] %v1030
        %1256 = vst.msk [vmem:[%s154 + $0x10b8] sm:$0xff] %vm1057, %v1031
        %1257 = vst [vmem:[%s154 + $0x10c0] sm:$0xff] %v1032
        %1258 = vst.msk [vmem:[%s154 + $0x10c8] sm:$0xff] %vm1057, %v1033
        %1259 = vst [vmem:[%s154 + $0x10d0] sm:$0xff] %v1034
        %1260 = vst.msk [vmem:[%s154 + $0x10d8] sm:$0xff] %vm1057, %v1035
        %1261 = vst [vmem:[%s154 + $0x10e0] sm:$0xff] %v1036
        %1262 = vst.msk [vmem:[%s154 + $0x10e8] sm:$0xff] %vm1057, %v1037
        %1263 = vst [vmem:[%s154 + $0x10f0] sm:$0xff] %v1038
        %1264 = vst.msk [vmem:[%s154 + $0x10f8] sm:$0xff] %vm1057, %v1039
        %1265 = vst [vmem:[%s154 + $0x1100] sm:$0xff] %v1040
        %1266 = vst.msk [vmem:[%s154 + $0x1108] sm:$0xff] %vm1057, %v1041
        %1267 = vst [vmem:[%s154 + $0x1110] sm:$0xff] %v1042
        %1268 = vst.msk [vmem:[%s154 + $0x1118] sm:$0xff] %vm1057, %v1043
        %1269 = vst [vmem:[%s154 + $0x1120] sm:$0xff] %v1044
        %1270 = vst.msk [vmem:[%s154 + $0x1128] sm:$0xff] %vm1057, %v1045
        %1271 = vst [vmem:[%s154 + $0x1130] sm:$0xff] %v1046
        %1272 = vst.msk [vmem:[%s154 + $0x1138] sm:$0xff] %vm1057, %v1047
        %1273 = vst [vmem:[%s154 + $0x1140] sm:$0xff] %v1048
        %1274 = vst.msk [vmem:[%s154 + $0x1148] sm:$0xff] %vm1057, %v1049
        %1275 = vst [vmem:[%s154 + $0x1150] sm:$0xff] %v1050
        %1276 = vst.msk [vmem:[%s154 + $0x1158] sm:$0xff] %vm1057, %v1051
        %1277 = vst [vmem:[%s154 + $0x1160] sm:$0xff] %v1052
        %1278 = vst.msk [vmem:[%s154 + $0x1168] sm:$0xff] %vm1057, %v1053
        %1279 = vst [vmem:[%s154 + $0x1170] sm:$0xff] %v1054
        %1280 = vst.msk [vmem:[%s154 + $0x1178] sm:$0xff] %vm1057, %v1055
        %s1281 = scalar_lea.vmem %s136, 896 [#allocation2]
        %v1282 = vld [vmem:[%s1281] sm:$0xff]
        %v1283 = vld [vmem:[%s1281 + $0x8] sm:$0xff]
        %v1284 = vld [vmem:[%s1281 + $0x10] sm:$0xff]
        %v1285 = vld [vmem:[%s1281 + $0x18] sm:$0xff]
        %v1286 = vld [vmem:[%s1281 + $0x20] sm:$0xff]
        %v1287 = vld [vmem:[%s1281 + $0x28] sm:$0xff]
        %v1288 = vld [vmem:[%s1281 + $0x30] sm:$0xff]
        %v1289 = vld [vmem:[%s1281 + $0x38] sm:$0xff]
        %v1290 = vld [vmem:[%s1281 + $0x40] sm:$0xff]
        %v1291 = vld [vmem:[%s1281 + $0x48] sm:$0xff]
        %v1292 = vld [vmem:[%s1281 + $0x50] sm:$0xff]
        %v1293 = vld [vmem:[%s1281 + $0x58] sm:$0xff]
        %v1294 = vld [vmem:[%s1281 + $0x60] sm:$0xff]
        %v1295 = vld [vmem:[%s1281 + $0x68] sm:$0xff]
        %v1296 = vld [vmem:[%s1281 + $0x70] sm:$0xff]
        %v1297 = vld [vmem:[%s1281 + $0x78] sm:$0xff]
        %v1298 = vld [vmem:[%s1281 + $0x80] sm:$0xff]
        %v1299 = vld [vmem:[%s1281 + $0x88] sm:$0xff]
        %v1300 = vld [vmem:[%s1281 + $0x90] sm:$0xff]
        %v1301 = vld [vmem:[%s1281 + $0x98] sm:$0xff]
        %v1302 = vld [vmem:[%s1281 + $0xa0] sm:$0xff]
        %v1303 = vld [vmem:[%s1281 + $0xa8] sm:$0xff]
        %v1304 = vld [vmem:[%s1281 + $0xb0] sm:$0xff]
        %v1305 = vld [vmem:[%s1281 + $0xb8] sm:$0xff]
        %v1306 = vld [vmem:[%s1281 + $0xc0] sm:$0xff]
        %v1307 = vld [vmem:[%s1281 + $0xc8] sm:$0xff]
        %v1308 = vld [vmem:[%s1281 + $0xd0] sm:$0xff]
        %v1309 = vld [vmem:[%s1281 + $0xd8] sm:$0xff]
        %v1310 = vld [vmem:[%s1281 + $0xe0] sm:$0xff]
        %v1311 = vld [vmem:[%s1281 + $0xe8] sm:$0xff]
        %v1312 = vld [vmem:[%s1281 + $0xf0] sm:$0xff]
        %v1313 = vld [vmem:[%s1281 + $0xf8] sm:$0xff]
        %v1314 = vld [vmem:[%s1281 + $0x100] sm:$0xff]
        %v1315 = vld [vmem:[%s1281 + $0x108] sm:$0xff]
        %v1316 = vld [vmem:[%s1281 + $0x110] sm:$0xff]
        %v1317 = vld [vmem:[%s1281 + $0x118] sm:$0xff]
        %v1318 = vld [vmem:[%s1281 + $0x120] sm:$0xff]
        %v1319 = vld [vmem:[%s1281 + $0x128] sm:$0xff]
        %v1320 = vld [vmem:[%s1281 + $0x130] sm:$0xff]
        %v1321 = vld [vmem:[%s1281 + $0x138] sm:$0xff]
        %v1322 = vld [vmem:[%s1281 + $0x140] sm:$0xff]
        %v1323 = vld [vmem:[%s1281 + $0x148] sm:$0xff]
        %v1324 = vld [vmem:[%s1281 + $0x150] sm:$0xff]
        %v1325 = vld [vmem:[%s1281 + $0x158] sm:$0xff]
        %v1326 = vld [vmem:[%s1281 + $0x160] sm:$0xff]
        %v1327 = vld [vmem:[%s1281 + $0x168] sm:$0xff]
        %v1328 = vld [vmem:[%s1281 + $0x170] sm:$0xff]
        %v1329 = vld [vmem:[%s1281 + $0x178] sm:$0xff]
        %v1330 = vld [vmem:[%s1281 + $0x180] sm:$0xff]
        %v1331 = vld [vmem:[%s1281 + $0x188] sm:$0xff]
        %v1332 = vld [vmem:[%s1281 + $0x190] sm:$0xff]
        %v1333 = vld [vmem:[%s1281 + $0x198] sm:$0xff]
        %v1334 = vld [vmem:[%s1281 + $0x1a0] sm:$0xff]
        %v1335 = vld [vmem:[%s1281 + $0x1a8] sm:$0xff]
        %v1336 = vld [vmem:[%s1281 + $0x1b0] sm:$0xff]
        %v1337 = vld [vmem:[%s1281 + $0x1b8] sm:$0xff]
        %v1338 = vld [vmem:[%s1281 + $0xa80] sm:$0xff]
        %v1339 = vld [vmem:[%s1281 + $0xa88] sm:$0xff]
        %v1340 = vld [vmem:[%s1281 + $0xa90] sm:$0xff]
        %v1341 = vld [vmem:[%s1281 + $0xa98] sm:$0xff]
        %v1342 = vld [vmem:[%s1281 + $0xaa0] sm:$0xff]
        %v1343 = vld [vmem:[%s1281 + $0xaa8] sm:$0xff]
        %v1344 = vld [vmem:[%s1281 + $0xab0] sm:$0xff]
        %v1345 = vld [vmem:[%s1281 + $0xab8] sm:$0xff]
        %v1346 = vld [vmem:[%s1281 + $0xac0] sm:$0xff]
        %v1347 = vld [vmem:[%s1281 + $0xac8] sm:$0xff]
        %v1348 = vld [vmem:[%s1281 + $0xad0] sm:$0xff]
        %v1349 = vld [vmem:[%s1281 + $0xad8] sm:$0xff]
        %v1350 = vld [vmem:[%s1281 + $0xae0] sm:$0xff]
        %v1351 = vld [vmem:[%s1281 + $0xae8] sm:$0xff]
        %v1352 = vld [vmem:[%s1281 + $0xaf0] sm:$0xff]
        %v1353 = vld [vmem:[%s1281 + $0xaf8] sm:$0xff]
        %v1354 = vld [vmem:[%s1281 + $0xb00] sm:$0xff]
        %v1355 = vld [vmem:[%s1281 + $0xb08] sm:$0xff]
        %v1356 = vld [vmem:[%s1281 + $0xb10] sm:$0xff]
        %v1357 = vld [vmem:[%s1281 + $0xb18] sm:$0xff]
        %v1358 = vld [vmem:[%s1281 + $0xb20] sm:$0xff]
        %v1359 = vld [vmem:[%s1281 + $0xb28] sm:$0xff]
        %v1360 = vld [vmem:[%s1281 + $0xb30] sm:$0xff]
        %v1361 = vld [vmem:[%s1281 + $0xb38] sm:$0xff]
        %v1362 = vld [vmem:[%s1281 + $0xb40] sm:$0xff]
        %v1363 = vld [vmem:[%s1281 + $0xb48] sm:$0xff]
        %v1364 = vld [vmem:[%s1281 + $0xb50] sm:$0xff]
        %v1365 = vld [vmem:[%s1281 + $0xb58] sm:$0xff]
        %v1366 = vld [vmem:[%s1281 + $0xb60] sm:$0xff]
        %v1367 = vld [vmem:[%s1281 + $0xb68] sm:$0xff]
        %v1368 = vld [vmem:[%s1281 + $0xb70] sm:$0xff]
        %v1369 = vld [vmem:[%s1281 + $0xb78] sm:$0xff]
        %v1370 = vld [vmem:[%s1281 + $0xb80] sm:$0xff]
        %v1371 = vld [vmem:[%s1281 + $0xb88] sm:$0xff]
        %v1372 = vld [vmem:[%s1281 + $0xb90] sm:$0xff]
        %v1373 = vld [vmem:[%s1281 + $0xb98] sm:$0xff]
        %v1374 = vld [vmem:[%s1281 + $0xba0] sm:$0xff]
        %v1375 = vld [vmem:[%s1281 + $0xba8] sm:$0xff]
        %v1376 = vld [vmem:[%s1281 + $0xbb0] sm:$0xff]
        %v1377 = vld [vmem:[%s1281 + $0xbb8] sm:$0xff]
        %v1378 = vld [vmem:[%s1281 + $0xbc0] sm:$0xff]
        %v1379 = vld [vmem:[%s1281 + $0xbc8] sm:$0xff]
        %v1380 = vld [vmem:[%s1281 + $0xbd0] sm:$0xff]
        %v1381 = vld [vmem:[%s1281 + $0xbd8] sm:$0xff]
        %v1382 = vld [vmem:[%s1281 + $0xbe0] sm:$0xff]
        %v1383 = vld [vmem:[%s1281 + $0xbe8] sm:$0xff]
        %v1384 = vld [vmem:[%s1281 + $0xbf0] sm:$0xff]
        %v1385 = vld [vmem:[%s1281 + $0xbf8] sm:$0xff]
        %v1386 = vld [vmem:[%s1281 + $0xc00] sm:$0xff]
        %v1387 = vld [vmem:[%s1281 + $0xc08] sm:$0xff]
        %v1388 = vld [vmem:[%s1281 + $0xc10] sm:$0xff]
        %v1389 = vld [vmem:[%s1281 + $0xc18] sm:$0xff]
        %v1390 = vld [vmem:[%s1281 + $0xc20] sm:$0xff]
        %v1391 = vld [vmem:[%s1281 + $0xc28] sm:$0xff]
        %v1392 = vld [vmem:[%s1281 + $0xc30] sm:$0xff]
        %v1393 = vld [vmem:[%s1281 + $0xc38] sm:$0xff]
        %v1394 = vld [vmem:[%s1281 + $0x1500] sm:$0xff]
        %v1395 = vld [vmem:[%s1281 + $0x1508] sm:$0xff]
        %v1396 = vld [vmem:[%s1281 + $0x1510] sm:$0xff]
        %v1397 = vld [vmem:[%s1281 + $0x1518] sm:$0xff]
        %v1398 = vld [vmem:[%s1281 + $0x1520] sm:$0xff]
        %v1399 = vld [vmem:[%s1281 + $0x1528] sm:$0xff]
        %v1400 = vld [vmem:[%s1281 + $0x1530] sm:$0xff]
        %v1401 = vld [vmem:[%s1281 + $0x1538] sm:$0xff]
        %v1402 = vld [vmem:[%s1281 + $0x1540] sm:$0xff]
        %v1403 = vld [vmem:[%s1281 + $0x1548] sm:$0xff]
        %v1404 = vld [vmem:[%s1281 + $0x1550] sm:$0xff]
        %v1405 = vld [vmem:[%s1281 + $0x1558] sm:$0xff]
        %v1406 = vld [vmem:[%s1281 + $0x1560] sm:$0xff]
        %v1407 = vld [vmem:[%s1281 + $0x1568] sm:$0xff]
        %v1408 = vld [vmem:[%s1281 + $0x1570] sm:$0xff]
        %v1409 = vld [vmem:[%s1281 + $0x1578] sm:$0xff]
        %v1410 = vld [vmem:[%s1281 + $0x1580] sm:$0xff]
        %v1411 = vld [vmem:[%s1281 + $0x1588] sm:$0xff]
        %v1412 = vld [vmem:[%s1281 + $0x1590] sm:$0xff]
        %v1413 = vld [vmem:[%s1281 + $0x1598] sm:$0xff]
        %v1414 = vld [vmem:[%s1281 + $0x15a0] sm:$0xff]
        %v1415 = vld [vmem:[%s1281 + $0x15a8] sm:$0xff]
        %v1416 = vld [vmem:[%s1281 + $0x15b0] sm:$0xff]
        %v1417 = vld [vmem:[%s1281 + $0x15b8] sm:$0xff]
        %v1418 = vld [vmem:[%s1281 + $0x15c0] sm:$0xff]
        %v1419 = vld [vmem:[%s1281 + $0x15c8] sm:$0xff]
        %v1420 = vld [vmem:[%s1281 + $0x15d0] sm:$0xff]
        %v1421 = vld [vmem:[%s1281 + $0x15d8] sm:$0xff]
        %v1422 = vld [vmem:[%s1281 + $0x15e0] sm:$0xff]
        %v1423 = vld [vmem:[%s1281 + $0x15e8] sm:$0xff]
        %v1424 = vld [vmem:[%s1281 + $0x15f0] sm:$0xff]
        %v1425 = vld [vmem:[%s1281 + $0x15f8] sm:$0xff]
        %v1426 = vld [vmem:[%s1281 + $0x1600] sm:$0xff]
        %v1427 = vld [vmem:[%s1281 + $0x1608] sm:$0xff]
        %v1428 = vld [vmem:[%s1281 + $0x1610] sm:$0xff]
        %v1429 = vld [vmem:[%s1281 + $0x1618] sm:$0xff]
        %v1430 = vld [vmem:[%s1281 + $0x1620] sm:$0xff]
        %v1431 = vld [vmem:[%s1281 + $0x1628] sm:$0xff]
        %v1432 = vld [vmem:[%s1281 + $0x1630] sm:$0xff]
        %v1433 = vld [vmem:[%s1281 + $0x1638] sm:$0xff]
        %v1434 = vld [vmem:[%s1281 + $0x1640] sm:$0xff]
        %v1435 = vld [vmem:[%s1281 + $0x1648] sm:$0xff]
        %v1436 = vld [vmem:[%s1281 + $0x1650] sm:$0xff]
        %v1437 = vld [vmem:[%s1281 + $0x1658] sm:$0xff]
        %v1438 = vld [vmem:[%s1281 + $0x1660] sm:$0xff]
        %v1439 = vld [vmem:[%s1281 + $0x1668] sm:$0xff]
        %v1440 = vld [vmem:[%s1281 + $0x1670] sm:$0xff]
        %v1441 = vld [vmem:[%s1281 + $0x1678] sm:$0xff]
        %v1442 = vld [vmem:[%s1281 + $0x1680] sm:$0xff]
        %v1443 = vld [vmem:[%s1281 + $0x1688] sm:$0xff]
        %v1444 = vld [vmem:[%s1281 + $0x1690] sm:$0xff]
        %v1445 = vld [vmem:[%s1281 + $0x1698] sm:$0xff]
        %v1446 = vld [vmem:[%s1281 + $0x16a0] sm:$0xff]
        %v1447 = vld [vmem:[%s1281 + $0x16a8] sm:$0xff]
        %v1448 = vld [vmem:[%s1281 + $0x16b0] sm:$0xff]
        %v1449 = vld [vmem:[%s1281 + $0x16b8] sm:$0xff]
        %v1450 = vld [vmem:[%s1281 + $0x1f80] sm:$0xff]
        %v1451 = vld [vmem:[%s1281 + $0x1f88] sm:$0xff]
        %v1452 = vld [vmem:[%s1281 + $0x1f90] sm:$0xff]
        %v1453 = vld [vmem:[%s1281 + $0x1f98] sm:$0xff]
        %v1454 = vld [vmem:[%s1281 + $0x1fa0] sm:$0xff]
        %v1455 = vld [vmem:[%s1281 + $0x1fa8] sm:$0xff]
        %v1456 = vld [vmem:[%s1281 + $0x1fb0] sm:$0xff]
        %v1457 = vld [vmem:[%s1281 + $0x1fb8] sm:$0xff]
        %v1458 = vld [vmem:[%s1281 + $0x1fc0] sm:$0xff]
        %v1459 = vld [vmem:[%s1281 + $0x1fc8] sm:$0xff]
        %v1460 = vld [vmem:[%s1281 + $0x1fd0] sm:$0xff]
        %v1461 = vld [vmem:[%s1281 + $0x1fd8] sm:$0xff]
        %v1462 = vld [vmem:[%s1281 + $0x1fe0] sm:$0xff]
        %v1463 = vld [vmem:[%s1281 + $0x1fe8] sm:$0xff]
        %v1464 = vld [vmem:[%s1281 + $0x1ff0] sm:$0xff]
        %v1465 = vld [vmem:[%s1281 + $0x1ff8] sm:$0xff]
        %v1466 = vld [vmem:[%s1281 + $0x2000] sm:$0xff]
        %v1467 = vld [vmem:[%s1281 + $0x2008] sm:$0xff]
        %v1468 = vld [vmem:[%s1281 + $0x2010] sm:$0xff]
        %v1469 = vld [vmem:[%s1281 + $0x2018] sm:$0xff]
        %v1470 = vld [vmem:[%s1281 + $0x2020] sm:$0xff]
        %v1471 = vld [vmem:[%s1281 + $0x2028] sm:$0xff]
        %v1472 = vld [vmem:[%s1281 + $0x2030] sm:$0xff]
        %v1473 = vld [vmem:[%s1281 + $0x2038] sm:$0xff]
        %v1474 = vld [vmem:[%s1281 + $0x2040] sm:$0xff]
        %v1475 = vld [vmem:[%s1281 + $0x2048] sm:$0xff]
        %v1476 = vld [vmem:[%s1281 + $0x2050] sm:$0xff]
        %v1477 = vld [vmem:[%s1281 + $0x2058] sm:$0xff]
        %v1478 = vld [vmem:[%s1281 + $0x2060] sm:$0xff]
        %v1479 = vld [vmem:[%s1281 + $0x2068] sm:$0xff]
        %v1480 = vld [vmem:[%s1281 + $0x2070] sm:$0xff]
        %v1481 = vld [vmem:[%s1281 + $0x2078] sm:$0xff]
        %v1482 = vld [vmem:[%s1281 + $0x2080] sm:$0xff]
        %v1483 = vld [vmem:[%s1281 + $0x2088] sm:$0xff]
        %v1484 = vld [vmem:[%s1281 + $0x2090] sm:$0xff]
        %v1485 = vld [vmem:[%s1281 + $0x2098] sm:$0xff]
        %v1486 = vld [vmem:[%s1281 + $0x20a0] sm:$0xff]
        %v1487 = vld [vmem:[%s1281 + $0x20a8] sm:$0xff]
        %v1488 = vld [vmem:[%s1281 + $0x20b0] sm:$0xff]
        %v1489 = vld [vmem:[%s1281 + $0x20b8] sm:$0xff]
        %v1490 = vld [vmem:[%s1281 + $0x20c0] sm:$0xff]
        %v1491 = vld [vmem:[%s1281 + $0x20c8] sm:$0xff]
        %v1492 = vld [vmem:[%s1281 + $0x20d0] sm:$0xff]
        %v1493 = vld [vmem:[%s1281 + $0x20d8] sm:$0xff]
        %v1494 = vld [vmem:[%s1281 + $0x20e0] sm:$0xff]
        %v1495 = vld [vmem:[%s1281 + $0x20e8] sm:$0xff]
        %v1496 = vld [vmem:[%s1281 + $0x20f0] sm:$0xff]
        %v1497 = vld [vmem:[%s1281 + $0x20f8] sm:$0xff]
        %v1498 = vld [vmem:[%s1281 + $0x2100] sm:$0xff]
        %v1499 = vld [vmem:[%s1281 + $0x2108] sm:$0xff]
        %v1500 = vld [vmem:[%s1281 + $0x2110] sm:$0xff]
        %v1501 = vld [vmem:[%s1281 + $0x2118] sm:$0xff]
        %v1502 = vld [vmem:[%s1281 + $0x2120] sm:$0xff]
        %v1503 = vld [vmem:[%s1281 + $0x2128] sm:$0xff]
        %v1504 = vld [vmem:[%s1281 + $0x2130] sm:$0xff]
        %v1505 = vld [vmem:[%s1281 + $0x2138] sm:$0xff]
        %s1506 = scalar_lea.vmem %s136, 1344 [#allocation2]
        %v1507 = vld [vmem:[%s1506] sm:$0xff]
        %v1508 = vld [vmem:[%s1506 + $0x8] sm:$0xff]
        %v1509 = vld [vmem:[%s1506 + $0x10] sm:$0xff]
        %v1510 = vld [vmem:[%s1506 + $0x18] sm:$0xff]
        %v1511 = vld [vmem:[%s1506 + $0x20] sm:$0xff]
        %v1512 = vld [vmem:[%s1506 + $0x28] sm:$0xff]
        %v1513 = vld [vmem:[%s1506 + $0x30] sm:$0xff]
        %v1514 = vld [vmem:[%s1506 + $0x38] sm:$0xff]
        %v1515 = vld [vmem:[%s1506 + $0x40] sm:$0xff]
        %v1516 = vld [vmem:[%s1506 + $0x48] sm:$0xff]
        %v1517 = vld [vmem:[%s1506 + $0x50] sm:$0xff]
        %v1518 = vld [vmem:[%s1506 + $0x58] sm:$0xff]
        %v1519 = vld [vmem:[%s1506 + $0x60] sm:$0xff]
        %v1520 = vld [vmem:[%s1506 + $0x68] sm:$0xff]
        %v1521 = vld [vmem:[%s1506 + $0x70] sm:$0xff]
        %v1522 = vld [vmem:[%s1506 + $0x78] sm:$0xff]
        %v1523 = vld [vmem:[%s1506 + $0x80] sm:$0xff]
        %v1524 = vld [vmem:[%s1506 + $0x88] sm:$0xff]
        %v1525 = vld [vmem:[%s1506 + $0x90] sm:$0xff]
        %v1526 = vld [vmem:[%s1506 + $0x98] sm:$0xff]
        %v1527 = vld [vmem:[%s1506 + $0xa0] sm:$0xff]
        %v1528 = vld [vmem:[%s1506 + $0xa8] sm:$0xff]
        %v1529 = vld [vmem:[%s1506 + $0xb0] sm:$0xff]
        %v1530 = vld [vmem:[%s1506 + $0xb8] sm:$0xff]
        %v1531 = vld [vmem:[%s1506 + $0xc0] sm:$0xff]
        %v1532 = vld [vmem:[%s1506 + $0xc8] sm:$0xff]
        %v1533 = vld [vmem:[%s1506 + $0xd0] sm:$0xff]
        %v1534 = vld [vmem:[%s1506 + $0xd8] sm:$0xff]
        %v1535 = vld [vmem:[%s1506 + $0xe0] sm:$0xff]
        %v1536 = vld [vmem:[%s1506 + $0xe8] sm:$0xff]
        %v1537 = vld [vmem:[%s1506 + $0xf0] sm:$0xff]
        %v1538 = vld [vmem:[%s1506 + $0xf8] sm:$0xff]
        %v1539 = vld [vmem:[%s1506 + $0x100] sm:$0xff]
        %v1540 = vld [vmem:[%s1506 + $0x108] sm:$0xff]
        %v1541 = vld [vmem:[%s1506 + $0x110] sm:$0xff]
        %v1542 = vld [vmem:[%s1506 + $0x118] sm:$0xff]
        %v1543 = vld [vmem:[%s1506 + $0x120] sm:$0xff]
        %v1544 = vld [vmem:[%s1506 + $0x128] sm:$0xff]
        %v1545 = vld [vmem:[%s1506 + $0x130] sm:$0xff]
        %v1546 = vld [vmem:[%s1506 + $0x138] sm:$0xff]
        %v1547 = vld [vmem:[%s1506 + $0x140] sm:$0xff]
        %v1548 = vld [vmem:[%s1506 + $0x148] sm:$0xff]
        %v1549 = vld [vmem:[%s1506 + $0x150] sm:$0xff]
        %v1550 = vld [vmem:[%s1506 + $0x158] sm:$0xff]
        %v1551 = vld [vmem:[%s1506 + $0x160] sm:$0xff]
        %v1552 = vld [vmem:[%s1506 + $0x168] sm:$0xff]
        %v1553 = vld [vmem:[%s1506 + $0x170] sm:$0xff]
        %v1554 = vld [vmem:[%s1506 + $0x178] sm:$0xff]
        %v1555 = vld [vmem:[%s1506 + $0x180] sm:$0xff]
        %v1556 = vld [vmem:[%s1506 + $0x188] sm:$0xff]
        %v1557 = vld [vmem:[%s1506 + $0x190] sm:$0xff]
        %v1558 = vld [vmem:[%s1506 + $0x198] sm:$0xff]
        %v1559 = vld [vmem:[%s1506 + $0x1a0] sm:$0xff]
        %v1560 = vld [vmem:[%s1506 + $0x1a8] sm:$0xff]
        %v1561 = vld [vmem:[%s1506 + $0x1b0] sm:$0xff]
        %v1562 = vld [vmem:[%s1506 + $0x1b8] sm:$0xff]
        %v1563 = vld [vmem:[%s1506 + $0xa80] sm:$0xff]
        %v1564 = vld [vmem:[%s1506 + $0xa88] sm:$0xff]
        %v1565 = vld [vmem:[%s1506 + $0xa90] sm:$0xff]
        %v1566 = vld [vmem:[%s1506 + $0xa98] sm:$0xff]
        %v1567 = vld [vmem:[%s1506 + $0xaa0] sm:$0xff]
        %v1568 = vld [vmem:[%s1506 + $0xaa8] sm:$0xff]
        %v1569 = vld [vmem:[%s1506 + $0xab0] sm:$0xff]
        %v1570 = vld [vmem:[%s1506 + $0xab8] sm:$0xff]
        %v1571 = vld [vmem:[%s1506 + $0xac0] sm:$0xff]
        %v1572 = vld [vmem:[%s1506 + $0xac8] sm:$0xff]
        %v1573 = vld [vmem:[%s1506 + $0xad0] sm:$0xff]
        %v1574 = vld [vmem:[%s1506 + $0xad8] sm:$0xff]
        %v1575 = vld [vmem:[%s1506 + $0xae0] sm:$0xff]
        %v1576 = vld [vmem:[%s1506 + $0xae8] sm:$0xff]
        %v1577 = vld [vmem:[%s1506 + $0xaf0] sm:$0xff]
        %v1578 = vld [vmem:[%s1506 + $0xaf8] sm:$0xff]
        %v1579 = vld [vmem:[%s1506 + $0xb00] sm:$0xff]
        %v1580 = vld [vmem:[%s1506 + $0xb08] sm:$0xff]
        %v1581 = vld [vmem:[%s1506 + $0xb10] sm:$0xff]
        %v1582 = vld [vmem:[%s1506 + $0xb18] sm:$0xff]
        %v1583 = vld [vmem:[%s1506 + $0xb20] sm:$0xff]
        %v1584 = vld [vmem:[%s1506 + $0xb28] sm:$0xff]
        %v1585 = vld [vmem:[%s1506 + $0xb30] sm:$0xff]
        %v1586 = vld [vmem:[%s1506 + $0xb38] sm:$0xff]
        %v1587 = vld [vmem:[%s1506 + $0xb40] sm:$0xff]
        %v1588 = vld [vmem:[%s1506 + $0xb48] sm:$0xff]
        %v1589 = vld [vmem:[%s1506 + $0xb50] sm:$0xff]
        %v1590 = vld [vmem:[%s1506 + $0xb58] sm:$0xff]
        %v1591 = vld [vmem:[%s1506 + $0xb60] sm:$0xff]
        %v1592 = vld [vmem:[%s1506 + $0xb68] sm:$0xff]
        %v1593 = vld [vmem:[%s1506 + $0xb70] sm:$0xff]
        %v1594 = vld [vmem:[%s1506 + $0xb78] sm:$0xff]
        %v1595 = vld [vmem:[%s1506 + $0xb80] sm:$0xff]
        %v1596 = vld [vmem:[%s1506 + $0xb88] sm:$0xff]
        %v1597 = vld [vmem:[%s1506 + $0xb90] sm:$0xff]
        %v1598 = vld [vmem:[%s1506 + $0xb98] sm:$0xff]
        %v1599 = vld [vmem:[%s1506 + $0xba0] sm:$0xff]
        %v1600 = vld [vmem:[%s1506 + $0xba8] sm:$0xff]
        %v1601 = vld [vmem:[%s1506 + $0xbb0] sm:$0xff]
        %v1602 = vld [vmem:[%s1506 + $0xbb8] sm:$0xff]
        %v1603 = vld [vmem:[%s1506 + $0xbc0] sm:$0xff]
        %v1604 = vld [vmem:[%s1506 + $0xbc8] sm:$0xff]
        %v1605 = vld [vmem:[%s1506 + $0xbd0] sm:$0xff]
        %v1606 = vld [vmem:[%s1506 + $0xbd8] sm:$0xff]
        %v1607 = vld [vmem:[%s1506 + $0xbe0] sm:$0xff]
        %v1608 = vld [vmem:[%s1506 + $0xbe8] sm:$0xff]
        %v1609 = vld [vmem:[%s1506 + $0xbf0] sm:$0xff]
        %v1610 = vld [vmem:[%s1506 + $0xbf8] sm:$0xff]
        %v1611 = vld [vmem:[%s1506 + $0xc00] sm:$0xff]
        %v1612 = vld [vmem:[%s1506 + $0xc08] sm:$0xff]
        %v1613 = vld [vmem:[%s1506 + $0xc10] sm:$0xff]
        %v1614 = vld [vmem:[%s1506 + $0xc18] sm:$0xff]
        %v1615 = vld [vmem:[%s1506 + $0xc20] sm:$0xff]
        %v1616 = vld [vmem:[%s1506 + $0xc28] sm:$0xff]
        %v1617 = vld [vmem:[%s1506 + $0xc30] sm:$0xff]
        %v1618 = vld [vmem:[%s1506 + $0xc38] sm:$0xff]
        %v1619 = vld [vmem:[%s1506 + $0x1500] sm:$0xff]
        %v1620 = vld [vmem:[%s1506 + $0x1508] sm:$0xff]
        %v1621 = vld [vmem:[%s1506 + $0x1510] sm:$0xff]
        %v1622 = vld [vmem:[%s1506 + $0x1518] sm:$0xff]
        %v1623 = vld [vmem:[%s1506 + $0x1520] sm:$0xff]
        %v1624 = vld [vmem:[%s1506 + $0x1528] sm:$0xff]
        %v1625 = vld [vmem:[%s1506 + $0x1530] sm:$0xff]
        %v1626 = vld [vmem:[%s1506 + $0x1538] sm:$0xff]
        %v1627 = vld [vmem:[%s1506 + $0x1540] sm:$0xff]
        %v1628 = vld [vmem:[%s1506 + $0x1548] sm:$0xff]
        %v1629 = vld [vmem:[%s1506 + $0x1550] sm:$0xff]
        %v1630 = vld [vmem:[%s1506 + $0x1558] sm:$0xff]
        %v1631 = vld [vmem:[%s1506 + $0x1560] sm:$0xff]
        %v1632 = vld [vmem:[%s1506 + $0x1568] sm:$0xff]
        %v1633 = vld [vmem:[%s1506 + $0x1570] sm:$0xff]
        %v1634 = vld [vmem:[%s1506 + $0x1578] sm:$0xff]
        %v1635 = vld [vmem:[%s1506 + $0x1580] sm:$0xff]
        %v1636 = vld [vmem:[%s1506 + $0x1588] sm:$0xff]
        %v1637 = vld [vmem:[%s1506 + $0x1590] sm:$0xff]
        %v1638 = vld [vmem:[%s1506 + $0x1598] sm:$0xff]
        %v1639 = vld [vmem:[%s1506 + $0x15a0] sm:$0xff]
        %v1640 = vld [vmem:[%s1506 + $0x15a8] sm:$0xff]
        %v1641 = vld [vmem:[%s1506 + $0x15b0] sm:$0xff]
        %v1642 = vld [vmem:[%s1506 + $0x15b8] sm:$0xff]
        %v1643 = vld [vmem:[%s1506 + $0x15c0] sm:$0xff]
        %v1644 = vld [vmem:[%s1506 + $0x15c8] sm:$0xff]
        %v1645 = vld [vmem:[%s1506 + $0x15d0] sm:$0xff]
        %v1646 = vld [vmem:[%s1506 + $0x15d8] sm:$0xff]
        %v1647 = vld [vmem:[%s1506 + $0x15e0] sm:$0xff]
        %v1648 = vld [vmem:[%s1506 + $0x15e8] sm:$0xff]
        %v1649 = vld [vmem:[%s1506 + $0x15f0] sm:$0xff]
        %v1650 = vld [vmem:[%s1506 + $0x15f8] sm:$0xff]
        %v1651 = vld [vmem:[%s1506 + $0x1600] sm:$0xff]
        %v1652 = vld [vmem:[%s1506 + $0x1608] sm:$0xff]
        %v1653 = vld [vmem:[%s1506 + $0x1610] sm:$0xff]
        %v1654 = vld [vmem:[%s1506 + $0x1618] sm:$0xff]
        %v1655 = vld [vmem:[%s1506 + $0x1620] sm:$0xff]
        %v1656 = vld [vmem:[%s1506 + $0x1628] sm:$0xff]
        %v1657 = vld [vmem:[%s1506 + $0x1630] sm:$0xff]
        %v1658 = vld [vmem:[%s1506 + $0x1638] sm:$0xff]
        %v1659 = vld [vmem:[%s1506 + $0x1640] sm:$0xff]
        %v1660 = vld [vmem:[%s1506 + $0x1648] sm:$0xff]
        %v1661 = vld [vmem:[%s1506 + $0x1650] sm:$0xff]
        %v1662 = vld [vmem:[%s1506 + $0x1658] sm:$0xff]
        %v1663 = vld [vmem:[%s1506 + $0x1660] sm:$0xff]
        %v1664 = vld [vmem:[%s1506 + $0x1668] sm:$0xff]
        %v1665 = vld [vmem:[%s1506 + $0x1670] sm:$0xff]
        %v1666 = vld [vmem:[%s1506 + $0x1678] sm:$0xff]
        %v1667 = vld [vmem:[%s1506 + $0x1680] sm:$0xff]
        %v1668 = vld [vmem:[%s1506 + $0x1688] sm:$0xff]
        %v1669 = vld [vmem:[%s1506 + $0x1690] sm:$0xff]
        %v1670 = vld [vmem:[%s1506 + $0x1698] sm:$0xff]
        %v1671 = vld [vmem:[%s1506 + $0x16a0] sm:$0xff]
        %v1672 = vld [vmem:[%s1506 + $0x16a8] sm:$0xff]
        %v1673 = vld [vmem:[%s1506 + $0x16b0] sm:$0xff]
        %v1674 = vld [vmem:[%s1506 + $0x16b8] sm:$0xff]
        %v1675 = vld [vmem:[%s1506 + $0x1f80] sm:$0xff]
        %v1676 = vld [vmem:[%s1506 + $0x1f88] sm:$0xff]
        %v1677 = vld [vmem:[%s1506 + $0x1f90] sm:$0xff]
        %v1678 = vld [vmem:[%s1506 + $0x1f98] sm:$0xff]
        %v1679 = vld [vmem:[%s1506 + $0x1fa0] sm:$0xff]
        %v1680 = vld [vmem:[%s1506 + $0x1fa8] sm:$0xff]
        %v1681 = vld [vmem:[%s1506 + $0x1fb0] sm:$0xff]
        %v1682 = vld [vmem:[%s1506 + $0x1fb8] sm:$0xff]
        %v1683 = vld [vmem:[%s1506 + $0x1fc0] sm:$0xff]
        %v1684 = vld [vmem:[%s1506 + $0x1fc8] sm:$0xff]
        %v1685 = vld [vmem:[%s1506 + $0x1fd0] sm:$0xff]
        %v1686 = vld [vmem:[%s1506 + $0x1fd8] sm:$0xff]
        %v1687 = vld [vmem:[%s1506 + $0x1fe0] sm:$0xff]
        %v1688 = vld [vmem:[%s1506 + $0x1fe8] sm:$0xff]
        %v1689 = vld [vmem:[%s1506 + $0x1ff0] sm:$0xff]
        %v1690 = vld [vmem:[%s1506 + $0x1ff8] sm:$0xff]
        %v1691 = vld [vmem:[%s1506 + $0x2000] sm:$0xff]
        %v1692 = vld [vmem:[%s1506 + $0x2008] sm:$0xff]
        %v1693 = vld [vmem:[%s1506 + $0x2010] sm:$0xff]
        %v1694 = vld [vmem:[%s1506 + $0x2018] sm:$0xff]
        %v1695 = vld [vmem:[%s1506 + $0x2020] sm:$0xff]
        %v1696 = vld [vmem:[%s1506 + $0x2028] sm:$0xff]
        %v1697 = vld [vmem:[%s1506 + $0x2030] sm:$0xff]
        %v1698 = vld [vmem:[%s1506 + $0x2038] sm:$0xff]
        %v1699 = vld [vmem:[%s1506 + $0x2040] sm:$0xff]
        %v1700 = vld [vmem:[%s1506 + $0x2048] sm:$0xff]
        %v1701 = vld [vmem:[%s1506 + $0x2050] sm:$0xff]
        %v1702 = vld [vmem:[%s1506 + $0x2058] sm:$0xff]
        %v1703 = vld [vmem:[%s1506 + $0x2060] sm:$0xff]
        %v1704 = vld [vmem:[%s1506 + $0x2068] sm:$0xff]
        %v1705 = vld [vmem:[%s1506 + $0x2070] sm:$0xff]
        %v1706 = vld [vmem:[%s1506 + $0x2078] sm:$0xff]
        %v1707 = vld [vmem:[%s1506 + $0x2080] sm:$0xff]
        %v1708 = vld [vmem:[%s1506 + $0x2088] sm:$0xff]
        %v1709 = vld [vmem:[%s1506 + $0x2090] sm:$0xff]
        %v1710 = vld [vmem:[%s1506 + $0x2098] sm:$0xff]
        %v1711 = vld [vmem:[%s1506 + $0x20a0] sm:$0xff]
        %v1712 = vld [vmem:[%s1506 + $0x20a8] sm:$0xff]
        %v1713 = vld [vmem:[%s1506 + $0x20b0] sm:$0xff]
        %v1714 = vld [vmem:[%s1506 + $0x20b8] sm:$0xff]
        %v1715 = vld [vmem:[%s1506 + $0x20c0] sm:$0xff]
        %v1716 = vld [vmem:[%s1506 + $0x20c8] sm:$0xff]
        %v1717 = vld [vmem:[%s1506 + $0x20d0] sm:$0xff]
        %v1718 = vld [vmem:[%s1506 + $0x20d8] sm:$0xff]
        %v1719 = vld [vmem:[%s1506 + $0x20e0] sm:$0xff]
        %v1720 = vld [vmem:[%s1506 + $0x20e8] sm:$0xff]
        %v1721 = vld [vmem:[%s1506 + $0x20f0] sm:$0xff]
        %v1722 = vld [vmem:[%s1506 + $0x20f8] sm:$0xff]
        %v1723 = vld [vmem:[%s1506 + $0x2100] sm:$0xff]
        %v1724 = vld [vmem:[%s1506 + $0x2108] sm:$0xff]
        %v1725 = vld [vmem:[%s1506 + $0x2110] sm:$0xff]
        %v1726 = vld [vmem:[%s1506 + $0x2118] sm:$0xff]
        %v1727 = vld [vmem:[%s1506 + $0x2120] sm:$0xff]
        %v1728 = vld [vmem:[%s1506 + $0x2128] sm:$0xff]
        %v1729 = vld [vmem:[%s1506 + $0x2130] sm:$0xff]
        %v1730 = vld [vmem:[%s1506 + $0x2138] sm:$0xff]
        %v1731 = vadd.f32 %v1282, %v1507
        %v1732 = vadd.f32 %v1283, %v1508
        %v1733 = vadd.f32 %v1284, %v1509
        %v1734 = vadd.f32 %v1285, %v1510
        %v1735 = vadd.f32 %v1286, %v1511
        %v1736 = vadd.f32 %v1287, %v1512
        %v1737 = vadd.f32 %v1288, %v1513
        %v1738 = vadd.f32 %v1289, %v1514
        %v1739 = vadd.f32 %v1290, %v1515
        %v1740 = vadd.f32 %v1291, %v1516
        %v1741 = vadd.f32 %v1292, %v1517
        %v1742 = vadd.f32 %v1293, %v1518
        %v1743 = vadd.f32 %v1294, %v1519
        %v1744 = vadd.f32 %v1295, %v1520
        %v1745 = vadd.f32 %v1296, %v1521
        %v1746 = vadd.f32 %v1297, %v1522
        %v1747 = vadd.f32 %v1298, %v1523
        %v1748 = vadd.f32 %v1299, %v1524
        %v1749 = vadd.f32 %v1300, %v1525
        %v1750 = vadd.f32 %v1301, %v1526
        %v1751 = vadd.f32 %v1302, %v1527
        %v1752 = vadd.f32 %v1303, %v1528
        %v1753 = vadd.f32 %v1304, %v1529
        %v1754 = vadd.f32 %v1305, %v1530
        %v1755 = vadd.f32 %v1306, %v1531
        %v1756 = vadd.f32 %v1307, %v1532
        %v1757 = vadd.f32 %v1308, %v1533
        %v1758 = vadd.f32 %v1309, %v1534
        %v1759 = vadd.f32 %v1310, %v1535
        %v1760 = vadd.f32 %v1311, %v1536
        %v1761 = vadd.f32 %v1312, %v1537
        %v1762 = vadd.f32 %v1313, %v1538
        %v1763 = vadd.f32 %v1314, %v1539
        %v1764 = vadd.f32 %v1315, %v1540
        %v1765 = vadd.f32 %v1316, %v1541
        %v1766 = vadd.f32 %v1317, %v1542
        %v1767 = vadd.f32 %v1318, %v1543
        %v1768 = vadd.f32 %v1319, %v1544
        %v1769 = vadd.f32 %v1320, %v1545
        %v1770 = vadd.f32 %v1321, %v1546
        %v1771 = vadd.f32 %v1322, %v1547
        %v1772 = vadd.f32 %v1323, %v1548
        %v1773 = vadd.f32 %v1324, %v1549
        %v1774 = vadd.f32 %v1325, %v1550
        %v1775 = vadd.f32 %v1326, %v1551
        %v1776 = vadd.f32 %v1327, %v1552
        %v1777 = vadd.f32 %v1328, %v1553
        %v1778 = vadd.f32 %v1329, %v1554
        %v1779 = vadd.f32 %v1330, %v1555
        %v1780 = vadd.f32 %v1331, %v1556
        %v1781 = vadd.f32 %v1332, %v1557
        %v1782 = vadd.f32 %v1333, %v1558
        %v1783 = vadd.f32 %v1334, %v1559
        %v1784 = vadd.f32 %v1335, %v1560
        %v1785 = vadd.f32 %v1336, %v1561
        %v1786 = vadd.f32 %v1337, %v1562
        %v1787 = vadd.f32 %v1338, %v1563
        %v1788 = vadd.f32 %v1339, %v1564
        %v1789 = vadd.f32 %v1340, %v1565
        %v1790 = vadd.f32 %v1341, %v1566
        %v1791 = vadd.f32 %v1342, %v1567
        %v1792 = vadd.f32 %v1343, %v1568
        %v1793 = vadd.f32 %v1344, %v1569
        %v1794 = vadd.f32 %v1345, %v1570
        %v1795 = vadd.f32 %v1346, %v1571
        %v1796 = vadd.f32 %v1347, %v1572
        %v1797 = vadd.f32 %v1348, %v1573
        %v1798 = vadd.f32 %v1349, %v1574
        %v1799 = vadd.f32 %v1350, %v1575
        %v1800 = vadd.f32 %v1351, %v1576
        %v1801 = vadd.f32 %v1352, %v1577
        %v1802 = vadd.f32 %v1353, %v1578
        %v1803 = vadd.f32 %v1354, %v1579
        %v1804 = vadd.f32 %v1355, %v1580
        %v1805 = vadd.f32 %v1356, %v1581
        %v1806 = vadd.f32 %v1357, %v1582
        %v1807 = vadd.f32 %v1358, %v1583
        %v1808 = vadd.f32 %v1359, %v1584
        %v1809 = vadd.f32 %v1360, %v1585
        %v1810 = vadd.f32 %v1361, %v1586
        %v1811 = vadd.f32 %v1362, %v1587
        %v1812 = vadd.f32 %v1363, %v1588
        %v1813 = vadd.f32 %v1364, %v1589
        %v1814 = vadd.f32 %v1365, %v1590
        %v1815 = vadd.f32 %v1366, %v1591
        %v1816 = vadd.f32 %v1367, %v1592
        %v1817 = vadd.f32 %v1368, %v1593
        %v1818 = vadd.f32 %v1369, %v1594
        %v1819 = vadd.f32 %v1370, %v1595
        %v1820 = vadd.f32 %v1371, %v1596
        %v1821 = vadd.f32 %v1372, %v1597
        %v1822 = vadd.f32 %v1373, %v1598
        %v1823 = vadd.f32 %v1374, %v1599
        %v1824 = vadd.f32 %v1375, %v1600
        %v1825 = vadd.f32 %v1376, %v1601
        %v1826 = vadd.f32 %v1377, %v1602
        %v1827 = vadd.f32 %v1378, %v1603
        %v1828 = vadd.f32 %v1379, %v1604
        %v1829 = vadd.f32 %v1380, %v1605
        %v1830 = vadd.f32 %v1381, %v1606
        %v1831 = vadd.f32 %v1382, %v1607
        %v1832 = vadd.f32 %v1383, %v1608
        %v1833 = vadd.f32 %v1384, %v1609
        %v1834 = vadd.f32 %v1385, %v1610
        %v1835 = vadd.f32 %v1386, %v1611
        %v1836 = vadd.f32 %v1387, %v1612
        %v1837 = vadd.f32 %v1388, %v1613
        %v1838 = vadd.f32 %v1389, %v1614
        %v1839 = vadd.f32 %v1390, %v1615
        %v1840 = vadd.f32 %v1391, %v1616
        %v1841 = vadd.f32 %v1392, %v1617
        %v1842 = vadd.f32 %v1393, %v1618
        %v1843 = vadd.f32 %v1394, %v1619
        %v1844 = vadd.f32 %v1395, %v1620
        %v1845 = vadd.f32 %v1396, %v1621
        %v1846 = vadd.f32 %v1397, %v1622
        %v1847 = vadd.f32 %v1398, %v1623
        %v1848 = vadd.f32 %v1399, %v1624
        %v1849 = vadd.f32 %v1400, %v1625
        %v1850 = vadd.f32 %v1401, %v1626
        %v1851 = vadd.f32 %v1402, %v1627
        %v1852 = vadd.f32 %v1403, %v1628
        %v1853 = vadd.f32 %v1404, %v1629
        %v1854 = vadd.f32 %v1405, %v1630
        %v1855 = vadd.f32 %v1406, %v1631
        %v1856 = vadd.f32 %v1407, %v1632
        %v1857 = vadd.f32 %v1408, %v1633
        %v1858 = vadd.f32 %v1409, %v1634
        %v1859 = vadd.f32 %v1410, %v1635
        %v1860 = vadd.f32 %v1411, %v1636
        %v1861 = vadd.f32 %v1412, %v1637
        %v1862 = vadd.f32 %v1413, %v1638
        %v1863 = vadd.f32 %v1414, %v1639
        %v1864 = vadd.f32 %v1415, %v1640
        %v1865 = vadd.f32 %v1416, %v1641
        %v1866 = vadd.f32 %v1417, %v1642
        %v1867 = vadd.f32 %v1418, %v1643
        %v1868 = vadd.f32 %v1419, %v1644
        %v1869 = vadd.f32 %v1420, %v1645
        %v1870 = vadd.f32 %v1421, %v1646
        %v1871 = vadd.f32 %v1422, %v1647
        %v1872 = vadd.f32 %v1423, %v1648
        %v1873 = vadd.f32 %v1424, %v1649
        %v1874 = vadd.f32 %v1425, %v1650
        %v1875 = vadd.f32 %v1426, %v1651
        %v1876 = vadd.f32 %v1427, %v1652
        %v1877 = vadd.f32 %v1428, %v1653
        %v1878 = vadd.f32 %v1429, %v1654
        %v1879 = vadd.f32 %v1430, %v1655
        %v1880 = vadd.f32 %v1431, %v1656
        %v1881 = vadd.f32 %v1432, %v1657
        %v1882 = vadd.f32 %v1433, %v1658
        %v1883 = vadd.f32 %v1434, %v1659
        %v1884 = vadd.f32 %v1435, %v1660
        %v1885 = vadd.f32 %v1436, %v1661
        %v1886 = vadd.f32 %v1437, %v1662
        %v1887 = vadd.f32 %v1438, %v1663
        %v1888 = vadd.f32 %v1439, %v1664
        %v1889 = vadd.f32 %v1440, %v1665
        %v1890 = vadd.f32 %v1441, %v1666
        %v1891 = vadd.f32 %v1442, %v1667
        %v1892 = vadd.f32 %v1443, %v1668
        %v1893 = vadd.f32 %v1444, %v1669
        %v1894 = vadd.f32 %v1445, %v1670
        %v1895 = vadd.f32 %v1446, %v1671
        %v1896 = vadd.f32 %v1447, %v1672
        %v1897 = vadd.f32 %v1448, %v1673
        %v1898 = vadd.f32 %v1449, %v1674
        %v1899 = vadd.f32 %v1450, %v1675
        %v1900 = vadd.f32 %v1451, %v1676
        %v1901 = vadd.f32 %v1452, %v1677
        %v1902 = vadd.f32 %v1453, %v1678
        %v1903 = vadd.f32 %v1454, %v1679
        %v1904 = vadd.f32 %v1455, %v1680
        %v1905 = vadd.f32 %v1456, %v1681
        %v1906 = vadd.f32 %v1457, %v1682
        %v1907 = vadd.f32 %v1458, %v1683
        %v1908 = vadd.f32 %v1459, %v1684
        %v1909 = vadd.f32 %v1460, %v1685
        %v1910 = vadd.f32 %v1461, %v1686
        %v1911 = vadd.f32 %v1462, %v1687
        %v1912 = vadd.f32 %v1463, %v1688
        %v1913 = vadd.f32 %v1464, %v1689
        %v1914 = vadd.f32 %v1465, %v1690
        %v1915 = vadd.f32 %v1466, %v1691
        %v1916 = vadd.f32 %v1467, %v1692
        %v1917 = vadd.f32 %v1468, %v1693
        %v1918 = vadd.f32 %v1469, %v1694
        %v1919 = vadd.f32 %v1470, %v1695
        %v1920 = vadd.f32 %v1471, %v1696
        %v1921 = vadd.f32 %v1472, %v1697
        %v1922 = vadd.f32 %v1473, %v1698
        %v1923 = vadd.f32 %v1474, %v1699
        %v1924 = vadd.f32 %v1475, %v1700
        %v1925 = vadd.f32 %v1476, %v1701
        %v1926 = vadd.f32 %v1477, %v1702
        %v1927 = vadd.f32 %v1478, %v1703
        %v1928 = vadd.f32 %v1479, %v1704
        %v1929 = vadd.f32 %v1480, %v1705
        %v1930 = vadd.f32 %v1481, %v1706
        %v1931 = vadd.f32 %v1482, %v1707
        %v1932 = vadd.f32 %v1483, %v1708
        %v1933 = vadd.f32 %v1484, %v1709
        %v1934 = vadd.f32 %v1485, %v1710
        %v1935 = vadd.f32 %v1486, %v1711
        %v1936 = vadd.f32 %v1487, %v1712
        %v1937 = vadd.f32 %v1488, %v1713
        %v1938 = vadd.f32 %v1489, %v1714
        %v1939 = vadd.f32 %v1490, %v1715
        %v1940 = vadd.f32 %v1491, %v1716
        %v1941 = vadd.f32 %v1492, %v1717
        %v1942 = vadd.f32 %v1493, %v1718
        %v1943 = vadd.f32 %v1494, %v1719
        %v1944 = vadd.f32 %v1495, %v1720
        %v1945 = vadd.f32 %v1496, %v1721
        %v1946 = vadd.f32 %v1497, %v1722
        %v1947 = vadd.f32 %v1498, %v1723
        %v1948 = vadd.f32 %v1499, %v1724
        %v1949 = vadd.f32 %v1500, %v1725
        %v1950 = vadd.f32 %v1501, %v1726
        %v1951 = vadd.f32 %v1502, %v1727
        %v1952 = vadd.f32 %v1503, %v1728
        %v1953 = vadd.f32 %v1504, %v1729
        %v1954 = vadd.f32 %v1505, %v1730
        %v1955 = vmul.f32 %v1731, 0.5
        %v1956 = vmul.f32 %v1732, 0.5
        %v1957 = vmul.f32 %v1733, 0.5
        %v1958 = vmul.f32 %v1734, 0.5
        %v1959 = vmul.f32 %v1735, 0.5
        %v1960 = vmul.f32 %v1736, 0.5
        %v1961 = vmul.f32 %v1737, 0.5
        %v1962 = vmul.f32 %v1738, 0.5
        %v1963 = vmul.f32 %v1739, 0.5
        %v1964 = vmul.f32 %v1740, 0.5
        %v1965 = vmul.f32 %v1741, 0.5
        %v1966 = vmul.f32 %v1742, 0.5
        %v1967 = vmul.f32 %v1743, 0.5
        %v1968 = vmul.f32 %v1744, 0.5
        %v1969 = vmul.f32 %v1745, 0.5
        %v1970 = vmul.f32 %v1746, 0.5
        %v1971 = vmul.f32 %v1747, 0.5
        %v1972 = vmul.f32 %v1748, 0.5
        %v1973 = vmul.f32 %v1749, 0.5
        %v1974 = vmul.f32 %v1750, 0.5
        %v1975 = vmul.f32 %v1751, 0.5
        %v1976 = vmul.f32 %v1752, 0.5
        %v1977 = vmul.f32 %v1753, 0.5
        %v1978 = vmul.f32 %v1754, 0.5
        %v1979 = vmul.f32 %v1755, 0.5
        %v1980 = vmul.f32 %v1756, 0.5
        %v1981 = vmul.f32 %v1757, 0.5
        %v1982 = vmul.f32 %v1758, 0.5
        %v1983 = vmul.f32 %v1759, 0.5
        %v1984 = vmul.f32 %v1760, 0.5
        %v1985 = vmul.f32 %v1761, 0.5
        %v1986 = vmul.f32 %v1762, 0.5
        %v1987 = vmul.f32 %v1763, 0.5
        %v1988 = vmul.f32 %v1764, 0.5
        %v1989 = vmul.f32 %v1765, 0.5
        %v1990 = vmul.f32 %v1766, 0.5
        %v1991 = vmul.f32 %v1767, 0.5
        %v1992 = vmul.f32 %v1768, 0.5
        %v1993 = vmul.f32 %v1769, 0.5
        %v1994 = vmul.f32 %v1770, 0.5
        %v1995 = vmul.f32 %v1771, 0.5
        %v1996 = vmul.f32 %v1772, 0.5
        %v1997 = vmul.f32 %v1773, 0.5
        %v1998 = vmul.f32 %v1774, 0.5
        %v1999 = vmul.f32 %v1775, 0.5
        %v2000 = vmul.f32 %v1776, 0.5
        %v2001 = vmul.f32 %v1777, 0.5
        %v2002 = vmul.f32 %v1778, 0.5
        %v2003 = vmul.f32 %v1779, 0.5
        %v2004 = vmul.f32 %v1780, 0.5
        %v2005 = vmul.f32 %v1781, 0.5
        %v2006 = vmul.f32 %v1782, 0.5
        %v2007 = vmul.f32 %v1783, 0.5
        %v2008 = vmul.f32 %v1784, 0.5
        %v2009 = vmul.f32 %v1785, 0.5
        %v2010 = vmul.f32 %v1786, 0.5
        %v2011 = vmul.f32 %v1787, 0.5
        %v2012 = vmul.f32 %v1788, 0.5
        %v2013 = vmul.f32 %v1789, 0.5
        %v2014 = vmul.f32 %v1790, 0.5
        %v2015 = vmul.f32 %v1791, 0.5
        %v2016 = vmul.f32 %v1792, 0.5
        %v2017 = vmul.f32 %v1793, 0.5
        %v2018 = vmul.f32 %v1794, 0.5
        %v2019 = vmul.f32 %v1795, 0.5
        %v2020 = vmul.f32 %v1796, 0.5
        %v2021 = vmul.f32 %v1797, 0.5
        %v2022 = vmul.f32 %v1798, 0.5
        %v2023 = vmul.f32 %v1799, 0.5
        %v2024 = vmul.f32 %v1800, 0.5
        %v2025 = vmul.f32 %v1801, 0.5
        %v2026 = vmul.f32 %v1802, 0.5
        %v2027 = vmul.f32 %v1803, 0.5
        %v2028 = vmul.f32 %v1804, 0.5
        %v2029 = vmul.f32 %v1805, 0.5
        %v2030 = vmul.f32 %v1806, 0.5
        %v2031 = vmul.f32 %v1807, 0.5
        %v2032 = vmul.f32 %v1808, 0.5
        %v2033 = vmul.f32 %v1809, 0.5
        %v2034 = vmul.f32 %v1810, 0.5
        %v2035 = vmul.f32 %v1811, 0.5
        %v2036 = vmul.f32 %v1812, 0.5
        %v2037 = vmul.f32 %v1813, 0.5
        %v2038 = vmul.f32 %v1814, 0.5
        %v2039 = vmul.f32 %v1815, 0.5
        %v2040 = vmul.f32 %v1816, 0.5
        %v2041 = vmul.f32 %v1817, 0.5
        %v2042 = vmul.f32 %v1818, 0.5
        %v2043 = vmul.f32 %v1819, 0.5
        %v2044 = vmul.f32 %v1820, 0.5
        %v2045 = vmul.f32 %v1821, 0.5
        %v2046 = vmul.f32 %v1822, 0.5
        %v2047 = vmul.f32 %v1823, 0.5
        %v2048 = vmul.f32 %v1824, 0.5
        %v2049 = vmul.f32 %v1825, 0.5
        %v2050 = vmul.f32 %v1826, 0.5
        %v2051 = vmul.f32 %v1827, 0.5
        %v2052 = vmul.f32 %v1828, 0.5
        %v2053 = vmul.f32 %v1829, 0.5
        %v2054 = vmul.f32 %v1830, 0.5
        %v2055 = vmul.f32 %v1831, 0.5
        %v2056 = vmul.f32 %v1832, 0.5
        %v2057 = vmul.f32 %v1833, 0.5
        %v2058 = vmul.f32 %v1834, 0.5
        %v2059 = vmul.f32 %v1835, 0.5
        %v2060 = vmul.f32 %v1836, 0.5
        %v2061 = vmul.f32 %v1837, 0.5
        %v2062 = vmul.f32 %v1838, 0.5
        %v2063 = vmul.f32 %v1839, 0.5
        %v2064 = vmul.f32 %v1840, 0.5
        %v2065 = vmul.f32 %v1841, 0.5
        %v2066 = vmul.f32 %v1842, 0.5
        %v2067 = vmul.f32 %v1843, 0.5
        %v2068 = vmul.f32 %v1844, 0.5
        %v2069 = vmul.f32 %v1845, 0.5
        %v2070 = vmul.f32 %v1846, 0.5
        %v2071 = vmul.f32 %v1847, 0.5
        %v2072 = vmul.f32 %v1848, 0.5
        %v2073 = vmul.f32 %v1849, 0.5
        %v2074 = vmul.f32 %v1850, 0.5
        %v2075 = vmul.f32 %v1851, 0.5
        %v2076 = vmul.f32 %v1852, 0.5
        %v2077 = vmul.f32 %v1853, 0.5
        %v2078 = vmul.f32 %v1854, 0.5
        %v2079 = vmul.f32 %v1855, 0.5
        %v2080 = vmul.f32 %v1856, 0.5
        %v2081 = vmul.f32 %v1857, 0.5
        %v2082 = vmul.f32 %v1858, 0.5
        %v2083 = vmul.f32 %v1859, 0.5
        %v2084 = vmul.f32 %v1860, 0.5
        %v2085 = vmul.f32 %v1861, 0.5
        %v2086 = vmul.f32 %v1862, 0.5
        %v2087 = vmul.f32 %v1863, 0.5
        %v2088 = vmul.f32 %v1864, 0.5
        %v2089 = vmul.f32 %v1865, 0.5
        %v2090 = vmul.f32 %v1866, 0.5
        %v2091 = vmul.f32 %v1867, 0.5
        %v2092 = vmul.f32 %v1868, 0.5
        %v2093 = vmul.f32 %v1869, 0.5
        %v2094 = vmul.f32 %v1870, 0.5
        %v2095 = vmul.f32 %v1871, 0.5
        %v2096 = vmul.f32 %v1872, 0.5
        %v2097 = vmul.f32 %v1873, 0.5
        %v2098 = vmul.f32 %v1874, 0.5
        %v2099 = vmul.f32 %v1875, 0.5
        %v2100 = vmul.f32 %v1876, 0.5
        %v2101 = vmul.f32 %v1877, 0.5
        %v2102 = vmul.f32 %v1878, 0.5
        %v2103 = vmul.f32 %v1879, 0.5
        %v2104 = vmul.f32 %v1880, 0.5
        %v2105 = vmul.f32 %v1881, 0.5
        %v2106 = vmul.f32 %v1882, 0.5
        %v2107 = vmul.f32 %v1883, 0.5
        %v2108 = vmul.f32 %v1884, 0.5
        %v2109 = vmul.f32 %v1885, 0.5
        %v2110 = vmul.f32 %v1886, 0.5
        %v2111 = vmul.f32 %v1887, 0.5
        %v2112 = vmul.f32 %v1888, 0.5
        %v2113 = vmul.f32 %v1889, 0.5
        %v2114 = vmul.f32 %v1890, 0.5
        %v2115 = vmul.f32 %v1891, 0.5
        %v2116 = vmul.f32 %v1892, 0.5
        %v2117 = vmul.f32 %v1893, 0.5
        %v2118 = vmul.f32 %v1894, 0.5
        %v2119 = vmul.f32 %v1895, 0.5
        %v2120 = vmul.f32 %v1896, 0.5
        %v2121 = vmul.f32 %v1897, 0.5
        %v2122 = vmul.f32 %v1898, 0.5
        %v2123 = vmul.f32 %v1899, 0.5
        %v2124 = vmul.f32 %v1900, 0.5
        %v2125 = vmul.f32 %v1901, 0.5
        %v2126 = vmul.f32 %v1902, 0.5
        %v2127 = vmul.f32 %v1903, 0.5
        %v2128 = vmul.f32 %v1904, 0.5
        %v2129 = vmul.f32 %v1905, 0.5
        %v2130 = vmul.f32 %v1906, 0.5
        %v2131 = vmul.f32 %v1907, 0.5
        %v2132 = vmul.f32 %v1908, 0.5
        %v2133 = vmul.f32 %v1909, 0.5
        %v2134 = vmul.f32 %v1910, 0.5
        %v2135 = vmul.f32 %v1911, 0.5
        %v2136 = vmul.f32 %v1912, 0.5
        %v2137 = vmul.f32 %v1913, 0.5
        %v2138 = vmul.f32 %v1914, 0.5
        %v2139 = vmul.f32 %v1915, 0.5
        %v2140 = vmul.f32 %v1916, 0.5
        %v2141 = vmul.f32 %v1917, 0.5
        %v2142 = vmul.f32 %v1918, 0.5
        %v2143 = vmul.f32 %v1919, 0.5
        %v2144 = vmul.f32 %v1920, 0.5
        %v2145 = vmul.f32 %v1921, 0.5
        %v2146 = vmul.f32 %v1922, 0.5
        %v2147 = vmul.f32 %v1923, 0.5
        %v2148 = vmul.f32 %v1924, 0.5
        %v2149 = vmul.f32 %v1925, 0.5
        %v2150 = vmul.f32 %v1926, 0.5
        %v2151 = vmul.f32 %v1927, 0.5
        %v2152 = vmul.f32 %v1928, 0.5
        %v2153 = vmul.f32 %v1929, 0.5
        %v2154 = vmul.f32 %v1930, 0.5
        %v2155 = vmul.f32 %v1931, 0.5
        %v2156 = vmul.f32 %v1932, 0.5
        %v2157 = vmul.f32 %v1933, 0.5
        %v2158 = vmul.f32 %v1934, 0.5
        %v2159 = vmul.f32 %v1935, 0.5
        %v2160 = vmul.f32 %v1936, 0.5
        %v2161 = vmul.f32 %v1937, 0.5
        %v2162 = vmul.f32 %v1938, 0.5
        %v2163 = vmul.f32 %v1939, 0.5
        %v2164 = vmul.f32 %v1940, 0.5
        %v2165 = vmul.f32 %v1941, 0.5
        %v2166 = vmul.f32 %v1942, 0.5
        %v2167 = vmul.f32 %v1943, 0.5
        %v2168 = vmul.f32 %v1944, 0.5
        %v2169 = vmul.f32 %v1945, 0.5
        %v2170 = vmul.f32 %v1946, 0.5
        %v2171 = vmul.f32 %v1947, 0.5
        %v2172 = vmul.f32 %v1948, 0.5
        %v2173 = vmul.f32 %v1949, 0.5
        %v2174 = vmul.f32 %v1950, 0.5
        %v2175 = vmul.f32 %v1951, 0.5
        %v2176 = vmul.f32 %v1952, 0.5
        %v2177 = vmul.f32 %v1953, 0.5
        %v2178 = vmul.f32 %v1954, 0.5
        %s2179 = scalar_lea.vmem %s154, 448 [#allocation5]
        %2180 = vst [vmem:[%s2179] sm:$0xff] %v1955
        %2181 = vst.msk [vmem:[%s2179 + $0x8] sm:$0xff] %vm1057, %v1956
        %2182 = vst [vmem:[%s2179 + $0x10] sm:$0xff] %v1957
        %2183 = vst.msk [vmem:[%s2179 + $0x18] sm:$0xff] %vm1057, %v1958
        %2184 = vst [vmem:[%s2179 + $0x20] sm:$0xff] %v1959
        %2185 = vst.msk [vmem:[%s2179 + $0x28] sm:$0xff] %vm1057, %v1960
        %2186 = vst [vmem:[%s2179 + $0x30] sm:$0xff] %v1961
        %2187 = vst.msk [vmem:[%s2179 + $0x38] sm:$0xff] %vm1057, %v1962
        %2188 = vst [vmem:[%s2179 + $0x40] sm:$0xff] %v1963
        %2189 = vst.msk [vmem:[%s2179 + $0x48] sm:$0xff] %vm1057, %v1964
        %2190 = vst [vmem:[%s2179 + $0x50] sm:$0xff] %v1965
        %2191 = vst.msk [vmem:[%s2179 + $0x58] sm:$0xff] %vm1057, %v1966
        %2192 = vst [vmem:[%s2179 + $0x60] sm:$0xff] %v1967
        %2193 = vst.msk [vmem:[%s2179 + $0x68] sm:$0xff] %vm1057, %v1968
        %2194 = vst [vmem:[%s2179 + $0x70] sm:$0xff] %v1969
        %2195 = vst.msk [vmem:[%s2179 + $0x78] sm:$0xff] %vm1057, %v1970
        %2196 = vst [vmem:[%s2179 + $0x80] sm:$0xff] %v1971
        %2197 = vst.msk [vmem:[%s2179 + $0x88] sm:$0xff] %vm1057, %v1972
        %2198 = vst [vmem:[%s2179 + $0x90] sm:$0xff] %v1973
        %2199 = vst.msk [vmem:[%s2179 + $0x98] sm:$0xff] %vm1057, %v1974
        %2200 = vst [vmem:[%s2179 + $0xa0] sm:$0xff] %v1975
        %2201 = vst.msk [vmem:[%s2179 + $0xa8] sm:$0xff] %vm1057, %v1976
        %2202 = vst [vmem:[%s2179 + $0xb0] sm:$0xff] %v1977
        %2203 = vst.msk [vmem:[%s2179 + $0xb8] sm:$0xff] %vm1057, %v1978
        %2204 = vst [vmem:[%s2179 + $0xc0] sm:$0xff] %v1979
        %2205 = vst.msk [vmem:[%s2179 + $0xc8] sm:$0xff] %vm1057, %v1980
        %2206 = vst [vmem:[%s2179 + $0xd0] sm:$0xff] %v1981
        %2207 = vst.msk [vmem:[%s2179 + $0xd8] sm:$0xff] %vm1057, %v1982
        %2208 = vst [vmem:[%s2179 + $0xe0] sm:$0xff] %v1983
        %2209 = vst.msk [vmem:[%s2179 + $0xe8] sm:$0xff] %vm1057, %v1984
        %2210 = vst [vmem:[%s2179 + $0xf0] sm:$0xff] %v1985
        %2211 = vst.msk [vmem:[%s2179 + $0xf8] sm:$0xff] %vm1057, %v1986
        %2212 = vst [vmem:[%s2179 + $0x100] sm:$0xff] %v1987
        %2213 = vst.msk [vmem:[%s2179 + $0x108] sm:$0xff] %vm1057, %v1988
        %2214 = vst [vmem:[%s2179 + $0x110] sm:$0xff] %v1989
        %2215 = vst.msk [vmem:[%s2179 + $0x118] sm:$0xff] %vm1057, %v1990
        %2216 = vst [vmem:[%s2179 + $0x120] sm:$0xff] %v1991
        %2217 = vst.msk [vmem:[%s2179 + $0x128] sm:$0xff] %vm1057, %v1992
        %2218 = vst [vmem:[%s2179 + $0x130] sm:$0xff] %v1993
        %2219 = vst.msk [vmem:[%s2179 + $0x138] sm:$0xff] %vm1057, %v1994
        %2220 = vst [vmem:[%s2179 + $0x140] sm:$0xff] %v1995
        %2221 = vst.msk [vmem:[%s2179 + $0x148] sm:$0xff] %vm1057, %v1996
        %2222 = vst [vmem:[%s2179 + $0x150] sm:$0xff] %v1997
        %2223 = vst.msk [vmem:[%s2179 + $0x158] sm:$0xff] %vm1057, %v1998
        %2224 = vst [vmem:[%s2179 + $0x160] sm:$0xff] %v1999
        %2225 = vst.msk [vmem:[%s2179 + $0x168] sm:$0xff] %vm1057, %v2000
        %2226 = vst [vmem:[%s2179 + $0x170] sm:$0xff] %v2001
        %2227 = vst.msk [vmem:[%s2179 + $0x178] sm:$0xff] %vm1057, %v2002
        %2228 = vst [vmem:[%s2179 + $0x180] sm:$0xff] %v2003
        %2229 = vst.msk [vmem:[%s2179 + $0x188] sm:$0xff] %vm1057, %v2004
        %2230 = vst [vmem:[%s2179 + $0x190] sm:$0xff] %v2005
        %2231 = vst.msk [vmem:[%s2179 + $0x198] sm:$0xff] %vm1057, %v2006
        %2232 = vst [vmem:[%s2179 + $0x1a0] sm:$0xff] %v2007
        %2233 = vst.msk [vmem:[%s2179 + $0x1a8] sm:$0xff] %vm1057, %v2008
        %2234 = vst [vmem:[%s2179 + $0x1b0] sm:$0xff] %v2009
        %2235 = vst.msk [vmem:[%s2179 + $0x1b8] sm:$0xff] %vm1057, %v2010
        %2236 = vst [vmem:[%s2179 + $0x540] sm:$0xff] %v2011
        %2237 = vst.msk [vmem:[%s2179 + $0x548] sm:$0xff] %vm1057, %v2012
        %2238 = vst [vmem:[%s2179 + $0x550] sm:$0xff] %v2013
        %2239 = vst.msk [vmem:[%s2179 + $0x558] sm:$0xff] %vm1057, %v2014
        %2240 = vst [vmem:[%s2179 + $0x560] sm:$0xff] %v2015
        %2241 = vst.msk [vmem:[%s2179 + $0x568] sm:$0xff] %vm1057, %v2016
        %2242 = vst [vmem:[%s2179 + $0x570] sm:$0xff] %v2017
        %2243 = vst.msk [vmem:[%s2179 + $0x578] sm:$0xff] %vm1057, %v2018
        %2244 = vst [vmem:[%s2179 + $0x580] sm:$0xff] %v2019
        %2245 = vst.msk [vmem:[%s2179 + $0x588] sm:$0xff] %vm1057, %v2020
        %2246 = vst [vmem:[%s2179 + $0x590] sm:$0xff] %v2021
        %2247 = vst.msk [vmem:[%s2179 + $0x598] sm:$0xff] %vm1057, %v2022
        %2248 = vst [vmem:[%s2179 + $0x5a0] sm:$0xff] %v2023
        %2249 = vst.msk [vmem:[%s2179 + $0x5a8] sm:$0xff] %vm1057, %v2024
        %2250 = vst [vmem:[%s2179 + $0x5b0] sm:$0xff] %v2025
        %2251 = vst.msk [vmem:[%s2179 + $0x5b8] sm:$0xff] %vm1057, %v2026
        %2252 = vst [vmem:[%s2179 + $0x5c0] sm:$0xff] %v2027
        %2253 = vst.msk [vmem:[%s2179 + $0x5c8] sm:$0xff] %vm1057, %v2028
        %2254 = vst [vmem:[%s2179 + $0x5d0] sm:$0xff] %v2029
        %2255 = vst.msk [vmem:[%s2179 + $0x5d8] sm:$0xff] %vm1057, %v2030
        %2256 = vst [vmem:[%s2179 + $0x5e0] sm:$0xff] %v2031
        %2257 = vst.msk [vmem:[%s2179 + $0x5e8] sm:$0xff] %vm1057, %v2032
        %2258 = vst [vmem:[%s2179 + $0x5f0] sm:$0xff] %v2033
        %2259 = vst.msk [vmem:[%s2179 + $0x5f8] sm:$0xff] %vm1057, %v2034
        %2260 = vst [vmem:[%s2179 + $0x600] sm:$0xff] %v2035
        %2261 = vst.msk [vmem:[%s2179 + $0x608] sm:$0xff] %vm1057, %v2036
        %2262 = vst [vmem:[%s2179 + $0x610] sm:$0xff] %v2037
        %2263 = vst.msk [vmem:[%s2179 + $0x618] sm:$0xff] %vm1057, %v2038
        %2264 = vst [vmem:[%s2179 + $0x620] sm:$0xff] %v2039
        %2265 = vst.msk [vmem:[%s2179 + $0x628] sm:$0xff] %vm1057, %v2040
        %2266 = vst [vmem:[%s2179 + $0x630] sm:$0xff] %v2041
        %2267 = vst.msk [vmem:[%s2179 + $0x638] sm:$0xff] %vm1057, %v2042
        %2268 = vst [vmem:[%s2179 + $0x640] sm:$0xff] %v2043
        %2269 = vst.msk [vmem:[%s2179 + $0x648] sm:$0xff] %vm1057, %v2044
        %2270 = vst [vmem:[%s2179 + $0x650] sm:$0xff] %v2045
        %2271 = vst.msk [vmem:[%s2179 + $0x658] sm:$0xff] %vm1057, %v2046
        %2272 = vst [vmem:[%s2179 + $0x660] sm:$0xff] %v2047
        %2273 = vst.msk [vmem:[%s2179 + $0x668] sm:$0xff] %vm1057, %v2048
        %2274 = vst [vmem:[%s2179 + $0x670] sm:$0xff] %v2049
        %2275 = vst.msk [vmem:[%s2179 + $0x678] sm:$0xff] %vm1057, %v2050
        %2276 = vst [vmem:[%s2179 + $0x680] sm:$0xff] %v2051
        %2277 = vst.msk [vmem:[%s2179 + $0x688] sm:$0xff] %vm1057, %v2052
        %2278 = vst [vmem:[%s2179 + $0x690] sm:$0xff] %v2053
        %2279 = vst.msk [vmem:[%s2179 + $0x698] sm:$0xff] %vm1057, %v2054
        %2280 = vst [vmem:[%s2179 + $0x6a0] sm:$0xff] %v2055
        %2281 = vst.msk [vmem:[%s2179 + $0x6a8] sm:$0xff] %vm1057, %v2056
        %2282 = vst [vmem:[%s2179 + $0x6b0] sm:$0xff] %v2057
        %2283 = vst.msk [vmem:[%s2179 + $0x6b8] sm:$0xff] %vm1057, %v2058
        %2284 = vst [vmem:[%s2179 + $0x6c0] sm:$0xff] %v2059
        %2285 = vst.msk [vmem:[%s2179 + $0x6c8] sm:$0xff] %vm1057, %v2060
        %2286 = vst [vmem:[%s2179 + $0x6d0] sm:$0xff] %v2061
        %2287 = vst.msk [vmem:[%s2179 + $0x6d8] sm:$0xff] %vm1057, %v2062
        %2288 = vst [vmem:[%s2179 + $0x6e0] sm:$0xff] %v2063
        %2289 = vst.msk [vmem:[%s2179 + $0x6e8] sm:$0xff] %vm1057, %v2064
        %2290 = vst [vmem:[%s2179 + $0x6f0] sm:$0xff] %v2065
        %2291 = vst.msk [vmem:[%s2179 + $0x6f8] sm:$0xff] %vm1057, %v2066
        %2292 = vst [vmem:[%s2179 + $0xa80] sm:$0xff] %v2067
        %2293 = vst.msk [vmem:[%s2179 + $0xa88] sm:$0xff] %vm1057, %v2068
        %2294 = vst [vmem:[%s2179 + $0xa90] sm:$0xff] %v2069
        %2295 = vst.msk [vmem:[%s2179 + $0xa98] sm:$0xff] %vm1057, %v2070
        %2296 = vst [vmem:[%s2179 + $0xaa0] sm:$0xff] %v2071
        %2297 = vst.msk [vmem:[%s2179 + $0xaa8] sm:$0xff] %vm1057, %v2072
        %2298 = vst [vmem:[%s2179 + $0xab0] sm:$0xff] %v2073
        %2299 = vst.msk [vmem:[%s2179 + $0xab8] sm:$0xff] %vm1057, %v2074
        %2300 = vst [vmem:[%s2179 + $0xac0] sm:$0xff] %v2075
        %2301 = vst.msk [vmem:[%s2179 + $0xac8] sm:$0xff] %vm1057, %v2076
        %2302 = vst [vmem:[%s2179 + $0xad0] sm:$0xff] %v2077
        %2303 = vst.msk [vmem:[%s2179 + $0xad8] sm:$0xff] %vm1057, %v2078
        %2304 = vst [vmem:[%s2179 + $0xae0] sm:$0xff] %v2079
        %2305 = vst.msk [vmem:[%s2179 + $0xae8] sm:$0xff] %vm1057, %v2080
        %2306 = vst [vmem:[%s2179 + $0xaf0] sm:$0xff] %v2081
        %2307 = vst.msk [vmem:[%s2179 + $0xaf8] sm:$0xff] %vm1057, %v2082
        %2308 = vst [vmem:[%s2179 + $0xb00] sm:$0xff] %v2083
        %2309 = vst.msk [vmem:[%s2179 + $0xb08] sm:$0xff] %vm1057, %v2084
        %2310 = vst [vmem:[%s2179 + $0xb10] sm:$0xff] %v2085
        %2311 = vst.msk [vmem:[%s2179 + $0xb18] sm:$0xff] %vm1057, %v2086
        %2312 = vst [vmem:[%s2179 + $0xb20] sm:$0xff] %v2087
        %2313 = vst.msk [vmem:[%s2179 + $0xb28] sm:$0xff] %vm1057, %v2088
        %2314 = vst [vmem:[%s2179 + $0xb30] sm:$0xff] %v2089
        %2315 = vst.msk [vmem:[%s2179 + $0xb38] sm:$0xff] %vm1057, %v2090
        %2316 = vst [vmem:[%s2179 + $0xb40] sm:$0xff] %v2091
        %2317 = vst.msk [vmem:[%s2179 + $0xb48] sm:$0xff] %vm1057, %v2092
        %2318 = vst [vmem:[%s2179 + $0xb50] sm:$0xff] %v2093
        %2319 = vst.msk [vmem:[%s2179 + $0xb58] sm:$0xff] %vm1057, %v2094
        %2320 = vst [vmem:[%s2179 + $0xb60] sm:$0xff] %v2095
        %2321 = vst.msk [vmem:[%s2179 + $0xb68] sm:$0xff] %vm1057, %v2096
        %2322 = vst [vmem:[%s2179 + $0xb70] sm:$0xff] %v2097
        %2323 = vst.msk [vmem:[%s2179 + $0xb78] sm:$0xff] %vm1057, %v2098
        %2324 = vst [vmem:[%s2179 + $0xb80] sm:$0xff] %v2099
        %2325 = vst.msk [vmem:[%s2179 + $0xb88] sm:$0xff] %vm1057, %v2100
        %2326 = vst [vmem:[%s2179 + $0xb90] sm:$0xff] %v2101
        %2327 = vst.msk [vmem:[%s2179 + $0xb98] sm:$0xff] %vm1057, %v2102
        %2328 = vst [vmem:[%s2179 + $0xba0] sm:$0xff] %v2103
        %2329 = vst.msk [vmem:[%s2179 + $0xba8] sm:$0xff] %vm1057, %v2104
        %2330 = vst [vmem:[%s2179 + $0xbb0] sm:$0xff] %v2105
        %2331 = vst.msk [vmem:[%s2179 + $0xbb8] sm:$0xff] %vm1057, %v2106
        %2332 = vst [vmem:[%s2179 + $0xbc0] sm:$0xff] %v2107
        %2333 = vst.msk [vmem:[%s2179 + $0xbc8] sm:$0xff] %vm1057, %v2108
        %2334 = vst [vmem:[%s2179 + $0xbd0] sm:$0xff] %v2109
        %2335 = vst.msk [vmem:[%s2179 + $0xbd8] sm:$0xff] %vm1057, %v2110
        %2336 = vst [vmem:[%s2179 + $0xbe0] sm:$0xff] %v2111
        %2337 = vst.msk [vmem:[%s2179 + $0xbe8] sm:$0xff] %vm1057, %v2112
        %2338 = vst [vmem:[%s2179 + $0xbf0] sm:$0xff] %v2113
        %2339 = vst.msk [vmem:[%s2179 + $0xbf8] sm:$0xff] %vm1057, %v2114
        %2340 = vst [vmem:[%s2179 + $0xc00] sm:$0xff] %v2115
        %2341 = vst.msk [vmem:[%s2179 + $0xc08] sm:$0xff] %vm1057, %v2116
        %2342 = vst [vmem:[%s2179 + $0xc10] sm:$0xff] %v2117
        %2343 = vst.msk [vmem:[%s2179 + $0xc18] sm:$0xff] %vm1057, %v2118
        %2344 = vst [vmem:[%s2179 + $0xc20] sm:$0xff] %v2119
        %2345 = vst.msk [vmem:[%s2179 + $0xc28] sm:$0xff] %vm1057, %v2120
        %2346 = vst [vmem:[%s2179 + $0xc30] sm:$0xff] %v2121
        %2347 = vst.msk [vmem:[%s2179 + $0xc38] sm:$0xff] %vm1057, %v2122
        %2348 = vst [vmem:[%s2179 + $0xfc0] sm:$0xff] %v2123
        %2349 = vst.msk [vmem:[%s2179 + $0xfc8] sm:$0xff] %vm1057, %v2124
        %2350 = vst [vmem:[%s2179 + $0xfd0] sm:$0xff] %v2125
        %2351 = vst.msk [vmem:[%s2179 + $0xfd8] sm:$0xff] %vm1057, %v2126
        %2352 = vst [vmem:[%s2179 + $0xfe0] sm:$0xff] %v2127
        %2353 = vst.msk [vmem:[%s2179 + $0xfe8] sm:$0xff] %vm1057, %v2128
        %2354 = vst [vmem:[%s2179 + $0xff0] sm:$0xff] %v2129
        %2355 = vst.msk [vmem:[%s2179 + $0xff8] sm:$0xff] %vm1057, %v2130
        %2356 = vst [vmem:[%s2179 + $0x1000] sm:$0xff] %v2131
        %2357 = vst.msk [vmem:[%s2179 + $0x1008] sm:$0xff] %vm1057, %v2132
        %2358 = vst [vmem:[%s2179 + $0x1010] sm:$0xff] %v2133
        %2359 = vst.msk [vmem:[%s2179 + $0x1018] sm:$0xff] %vm1057, %v2134
        %2360 = vst [vmem:[%s2179 + $0x1020] sm:$0xff] %v2135
        %2361 = vst.msk [vmem:[%s2179 + $0x1028] sm:$0xff] %vm1057, %v2136
        %2362 = vst [vmem:[%s2179 + $0x1030] sm:$0xff] %v2137
        %2363 = vst.msk [vmem:[%s2179 + $0x1038] sm:$0xff] %vm1057, %v2138
        %2364 = vst [vmem:[%s2179 + $0x1040] sm:$0xff] %v2139
        %2365 = vst.msk [vmem:[%s2179 + $0x1048] sm:$0xff] %vm1057, %v2140
        %2366 = vst [vmem:[%s2179 + $0x1050] sm:$0xff] %v2141
        %2367 = vst.msk [vmem:[%s2179 + $0x1058] sm:$0xff] %vm1057, %v2142
        %2368 = vst [vmem:[%s2179 + $0x1060] sm:$0xff] %v2143
        %2369 = vst.msk [vmem:[%s2179 + $0x1068] sm:$0xff] %vm1057, %v2144
        %2370 = vst [vmem:[%s2179 + $0x1070] sm:$0xff] %v2145
        %2371 = vst.msk [vmem:[%s2179 + $0x1078] sm:$0xff] %vm1057, %v2146
        %2372 = vst [vmem:[%s2179 + $0x1080] sm:$0xff] %v2147
        %2373 = vst.msk [vmem:[%s2179 + $0x1088] sm:$0xff] %vm1057, %v2148
        %2374 = vst [vmem:[%s2179 + $0x1090] sm:$0xff] %v2149
        %2375 = vst.msk [vmem:[%s2179 + $0x1098] sm:$0xff] %vm1057, %v2150
        %2376 = vst [vmem:[%s2179 + $0x10a0] sm:$0xff] %v2151
        %2377 = vst.msk [vmem:[%s2179 + $0x10a8] sm:$0xff] %vm1057, %v2152
        %2378 = vst [vmem:[%s2179 + $0x10b0] sm:$0xff] %v2153
        %2379 = vst.msk [vmem:[%s2179 + $0x10b8] sm:$0xff] %vm1057, %v2154
        %2380 = vst [vmem:[%s2179 + $0x10c0] sm:$0xff] %v2155
        %2381 = vst.msk [vmem:[%s2179 + $0x10c8] sm:$0xff] %vm1057, %v2156
        %2382 = vst [vmem:[%s2179 + $0x10d0] sm:$0xff] %v2157
        %2383 = vst.msk [vmem:[%s2179 + $0x10d8] sm:$0xff] %vm1057, %v2158
        %2384 = vst [vmem:[%s2179 + $0x10e0] sm:$0xff] %v2159
        %2385 = vst.msk [vmem:[%s2179 + $0x10e8] sm:$0xff] %vm1057, %v2160
        %2386 = vst [vmem:[%s2179 + $0x10f0] sm:$0xff] %v2161
        %2387 = vst.msk [vmem:[%s2179 + $0x10f8] sm:$0xff] %vm1057, %v2162
        %2388 = vst [vmem:[%s2179 + $0x1100] sm:$0xff] %v2163
        %2389 = vst.msk [vmem:[%s2179 + $0x1108] sm:$0xff] %vm1057, %v2164
        %2390 = vst [vmem:[%s2179 + $0x1110] sm:$0xff] %v2165
        %2391 = vst.msk [vmem:[%s2179 + $0x1118] sm:$0xff] %vm1057, %v2166
        %2392 = vst [vmem:[%s2179 + $0x1120] sm:$0xff] %v2167
        %2393 = vst.msk [vmem:[%s2179 + $0x1128] sm:$0xff] %vm1057, %v2168
        %2394 = vst [vmem:[%s2179 + $0x1130] sm:$0xff] %v2169
        %2395 = vst.msk [vmem:[%s2179 + $0x1138] sm:$0xff] %vm1057, %v2170
        %2396 = vst [vmem:[%s2179 + $0x1140] sm:$0xff] %v2171
        %2397 = vst.msk [vmem:[%s2179 + $0x1148] sm:$0xff] %vm1057, %v2172
        %2398 = vst [vmem:[%s2179 + $0x1150] sm:$0xff] %v2173
        %2399 = vst.msk [vmem:[%s2179 + $0x1158] sm:$0xff] %vm1057, %v2174
        %2400 = vst [vmem:[%s2179 + $0x1160] sm:$0xff] %v2175
        %2401 = vst.msk [vmem:[%s2179 + $0x1168] sm:$0xff] %vm1057, %v2176
        %2402 = vst [vmem:[%s2179 + $0x1170] sm:$0xff] %v2177
        %2403 = vst.msk [vmem:[%s2179 + $0x1178] sm:$0xff] %vm1057, %v2178
        %s2404 = scalar_lea.vmem %s136, 1792 [#allocation2]
        %v2405 = vld [vmem:[%s2404] sm:$0xff]
        %v2406 = vld [vmem:[%s2404 + $0x8] sm:$0xff]
        %v2407 = vld [vmem:[%s2404 + $0x10] sm:$0xff]
        %v2408 = vld [vmem:[%s2404 + $0x18] sm:$0xff]
        %v2409 = vld [vmem:[%s2404 + $0x20] sm:$0xff]
        %v2410 = vld [vmem:[%s2404 + $0x28] sm:$0xff]
        %v2411 = vld [vmem:[%s2404 + $0x30] sm:$0xff]
        %v2412 = vld [vmem:[%s2404 + $0x38] sm:$0xff]
        %v2413 = vld [vmem:[%s2404 + $0x40] sm:$0xff]
        %v2414 = vld [vmem:[%s2404 + $0x48] sm:$0xff]
        %v2415 = vld [vmem:[%s2404 + $0x50] sm:$0xff]
        %v2416 = vld [vmem:[%s2404 + $0x58] sm:$0xff]
        %v2417 = vld [vmem:[%s2404 + $0x60] sm:$0xff]
        %v2418 = vld [vmem:[%s2404 + $0x68] sm:$0xff]
        %v2419 = vld [vmem:[%s2404 + $0x70] sm:$0xff]
        %v2420 = vld [vmem:[%s2404 + $0x78] sm:$0xff]
        %v2421 = vld [vmem:[%s2404 + $0x80] sm:$0xff]
        %v2422 = vld [vmem:[%s2404 + $0x88] sm:$0xff]
        %v2423 = vld [vmem:[%s2404 + $0x90] sm:$0xff]
        %v2424 = vld [vmem:[%s2404 + $0x98] sm:$0xff]
        %v2425 = vld [vmem:[%s2404 + $0xa0] sm:$0xff]
        %v2426 = vld [vmem:[%s2404 + $0xa8] sm:$0xff]
        %v2427 = vld [vmem:[%s2404 + $0xb0] sm:$0xff]
        %v2428 = vld [vmem:[%s2404 + $0xb8] sm:$0xff]
        %v2429 = vld [vmem:[%s2404 + $0xc0] sm:$0xff]
        %v2430 = vld [vmem:[%s2404 + $0xc8] sm:$0xff]
        %v2431 = vld [vmem:[%s2404 + $0xd0] sm:$0xff]
        %v2432 = vld [vmem:[%s2404 + $0xd8] sm:$0xff]
        %v2433 = vld [vmem:[%s2404 + $0xe0] sm:$0xff]
        %v2434 = vld [vmem:[%s2404 + $0xe8] sm:$0xff]
        %v2435 = vld [vmem:[%s2404 + $0xf0] sm:$0xff]
        %v2436 = vld [vmem:[%s2404 + $0xf8] sm:$0xff]
        %v2437 = vld [vmem:[%s2404 + $0x100] sm:$0xff]
        %v2438 = vld [vmem:[%s2404 + $0x108] sm:$0xff]
        %v2439 = vld [vmem:[%s2404 + $0x110] sm:$0xff]
        %v2440 = vld [vmem:[%s2404 + $0x118] sm:$0xff]
        %v2441 = vld [vmem:[%s2404 + $0x120] sm:$0xff]
        %v2442 = vld [vmem:[%s2404 + $0x128] sm:$0xff]
        %v2443 = vld [vmem:[%s2404 + $0x130] sm:$0xff]
        %v2444 = vld [vmem:[%s2404 + $0x138] sm:$0xff]
        %v2445 = vld [vmem:[%s2404 + $0x140] sm:$0xff]
        %v2446 = vld [vmem:[%s2404 + $0x148] sm:$0xff]
        %v2447 = vld [vmem:[%s2404 + $0x150] sm:$0xff]
        %v2448 = vld [vmem:[%s2404 + $0x158] sm:$0xff]
        %v2449 = vld [vmem:[%s2404 + $0x160] sm:$0xff]
        %v2450 = vld [vmem:[%s2404 + $0x168] sm:$0xff]
        %v2451 = vld [vmem:[%s2404 + $0x170] sm:$0xff]
        %v2452 = vld [vmem:[%s2404 + $0x178] sm:$0xff]
        %v2453 = vld [vmem:[%s2404 + $0x180] sm:$0xff]
        %v2454 = vld [vmem:[%s2404 + $0x188] sm:$0xff]
        %v2455 = vld [vmem:[%s2404 + $0x190] sm:$0xff]
        %v2456 = vld [vmem:[%s2404 + $0x198] sm:$0xff]
        %v2457 = vld [vmem:[%s2404 + $0x1a0] sm:$0xff]
        %v2458 = vld [vmem:[%s2404 + $0x1a8] sm:$0xff]
        %v2459 = vld [vmem:[%s2404 + $0x1b0] sm:$0xff]
        %v2460 = vld [vmem:[%s2404 + $0x1b8] sm:$0xff]
        %v2461 = vld [vmem:[%s2404 + $0xa80] sm:$0xff]
        %v2462 = vld [vmem:[%s2404 + $0xa88] sm:$0xff]
        %v2463 = vld [vmem:[%s2404 + $0xa90] sm:$0xff]
        %v2464 = vld [vmem:[%s2404 + $0xa98] sm:$0xff]
        %v2465 = vld [vmem:[%s2404 + $0xaa0] sm:$0xff]
        %v2466 = vld [vmem:[%s2404 + $0xaa8] sm:$0xff]
        %v2467 = vld [vmem:[%s2404 + $0xab0] sm:$0xff]
        %v2468 = vld [vmem:[%s2404 + $0xab8] sm:$0xff]
        %v2469 = vld [vmem:[%s2404 + $0xac0] sm:$0xff]
        %v2470 = vld [vmem:[%s2404 + $0xac8] sm:$0xff]
        %v2471 = vld [vmem:[%s2404 + $0xad0] sm:$0xff]
        %v2472 = vld [vmem:[%s2404 + $0xad8] sm:$0xff]
        %v2473 = vld [vmem:[%s2404 + $0xae0] sm:$0xff]
        %v2474 = vld [vmem:[%s2404 + $0xae8] sm:$0xff]
        %v2475 = vld [vmem:[%s2404 + $0xaf0] sm:$0xff]
        %v2476 = vld [vmem:[%s2404 + $0xaf8] sm:$0xff]
        %v2477 = vld [vmem:[%s2404 + $0xb00] sm:$0xff]
        %v2478 = vld [vmem:[%s2404 + $0xb08] sm:$0xff]
        %v2479 = vld [vmem:[%s2404 + $0xb10] sm:$0xff]
        %v2480 = vld [vmem:[%s2404 + $0xb18] sm:$0xff]
        %v2481 = vld [vmem:[%s2404 + $0xb20] sm:$0xff]
        %v2482 = vld [vmem:[%s2404 + $0xb28] sm:$0xff]
        %v2483 = vld [vmem:[%s2404 + $0xb30] sm:$0xff]
        %v2484 = vld [vmem:[%s2404 + $0xb38] sm:$0xff]
        %v2485 = vld [vmem:[%s2404 + $0xb40] sm:$0xff]
        %v2486 = vld [vmem:[%s2404 + $0xb48] sm:$0xff]
        %v2487 = vld [vmem:[%s2404 + $0xb50] sm:$0xff]
        %v2488 = vld [vmem:[%s2404 + $0xb58] sm:$0xff]
        %v2489 = vld [vmem:[%s2404 + $0xb60] sm:$0xff]
        %v2490 = vld [vmem:[%s2404 + $0xb68] sm:$0xff]
        %v2491 = vld [vmem:[%s2404 + $0xb70] sm:$0xff]
        %v2492 = vld [vmem:[%s2404 + $0xb78] sm:$0xff]
        %v2493 = vld [vmem:[%s2404 + $0xb80] sm:$0xff]
        %v2494 = vld [vmem:[%s2404 + $0xb88] sm:$0xff]
        %v2495 = vld [vmem:[%s2404 + $0xb90] sm:$0xff]
        %v2496 = vld [vmem:[%s2404 + $0xb98] sm:$0xff]
        %v2497 = vld [vmem:[%s2404 + $0xba0] sm:$0xff]
        %v2498 = vld [vmem:[%s2404 + $0xba8] sm:$0xff]
        %v2499 = vld [vmem:[%s2404 + $0xbb0] sm:$0xff]
        %v2500 = vld [vmem:[%s2404 + $0xbb8] sm:$0xff]
        %v2501 = vld [vmem:[%s2404 + $0xbc0] sm:$0xff]
        %v2502 = vld [vmem:[%s2404 + $0xbc8] sm:$0xff]
        %v2503 = vld [vmem:[%s2404 + $0xbd0] sm:$0xff]
        %v2504 = vld [vmem:[%s2404 + $0xbd8] sm:$0xff]
        %v2505 = vld [vmem:[%s2404 + $0xbe0] sm:$0xff]
        %v2506 = vld [vmem:[%s2404 + $0xbe8] sm:$0xff]
        %v2507 = vld [vmem:[%s2404 + $0xbf0] sm:$0xff]
        %v2508 = vld [vmem:[%s2404 + $0xbf8] sm:$0xff]
        %v2509 = vld [vmem:[%s2404 + $0xc00] sm:$0xff]
        %v2510 = vld [vmem:[%s2404 + $0xc08] sm:$0xff]
        %v2511 = vld [vmem:[%s2404 + $0xc10] sm:$0xff]
        %v2512 = vld [vmem:[%s2404 + $0xc18] sm:$0xff]
        %v2513 = vld [vmem:[%s2404 + $0xc20] sm:$0xff]
        %v2514 = vld [vmem:[%s2404 + $0xc28] sm:$0xff]
        %v2515 = vld [vmem:[%s2404 + $0xc30] sm:$0xff]
        %v2516 = vld [vmem:[%s2404 + $0xc38] sm:$0xff]
        %v2517 = vld [vmem:[%s2404 + $0x1500] sm:$0xff]
        %v2518 = vld [vmem:[%s2404 + $0x1508] sm:$0xff]
        %v2519 = vld [vmem:[%s2404 + $0x1510] sm:$0xff]
        %v2520 = vld [vmem:[%s2404 + $0x1518] sm:$0xff]
        %v2521 = vld [vmem:[%s2404 + $0x1520] sm:$0xff]
        %v2522 = vld [vmem:[%s2404 + $0x1528] sm:$0xff]
        %v2523 = vld [vmem:[%s2404 + $0x1530] sm:$0xff]
        %v2524 = vld [vmem:[%s2404 + $0x1538] sm:$0xff]
        %v2525 = vld [vmem:[%s2404 + $0x1540] sm:$0xff]
        %v2526 = vld [vmem:[%s2404 + $0x1548] sm:$0xff]
        %v2527 = vld [vmem:[%s2404 + $0x1550] sm:$0xff]
        %v2528 = vld [vmem:[%s2404 + $0x1558] sm:$0xff]
        %v2529 = vld [vmem:[%s2404 + $0x1560] sm:$0xff]
        %v2530 = vld [vmem:[%s2404 + $0x1568] sm:$0xff]
        %v2531 = vld [vmem:[%s2404 + $0x1570] sm:$0xff]
        %v2532 = vld [vmem:[%s2404 + $0x1578] sm:$0xff]
        %v2533 = vld [vmem:[%s2404 + $0x1580] sm:$0xff]
        %v2534 = vld [vmem:[%s2404 + $0x1588] sm:$0xff]
        %v2535 = vld [vmem:[%s2404 + $0x1590] sm:$0xff]
        %v2536 = vld [vmem:[%s2404 + $0x1598] sm:$0xff]
        %v2537 = vld [vmem:[%s2404 + $0x15a0] sm:$0xff]
        %v2538 = vld [vmem:[%s2404 + $0x15a8] sm:$0xff]
        %v2539 = vld [vmem:[%s2404 + $0x15b0] sm:$0xff]
        %v2540 = vld [vmem:[%s2404 + $0x15b8] sm:$0xff]
        %v2541 = vld [vmem:[%s2404 + $0x15c0] sm:$0xff]
        %v2542 = vld [vmem:[%s2404 + $0x15c8] sm:$0xff]
        %v2543 = vld [vmem:[%s2404 + $0x15d0] sm:$0xff]
        %v2544 = vld [vmem:[%s2404 + $0x15d8] sm:$0xff]
        %v2545 = vld [vmem:[%s2404 + $0x15e0] sm:$0xff]
        %v2546 = vld [vmem:[%s2404 + $0x15e8] sm:$0xff]
        %v2547 = vld [vmem:[%s2404 + $0x15f0] sm:$0xff]
        %v2548 = vld [vmem:[%s2404 + $0x15f8] sm:$0xff]
        %v2549 = vld [vmem:[%s2404 + $0x1600] sm:$0xff]
        %v2550 = vld [vmem:[%s2404 + $0x1608] sm:$0xff]
        %v2551 = vld [vmem:[%s2404 + $0x1610] sm:$0xff]
        %v2552 = vld [vmem:[%s2404 + $0x1618] sm:$0xff]
        %v2553 = vld [vmem:[%s2404 + $0x1620] sm:$0xff]
        %v2554 = vld [vmem:[%s2404 + $0x1628] sm:$0xff]
        %v2555 = vld [vmem:[%s2404 + $0x1630] sm:$0xff]
        %v2556 = vld [vmem:[%s2404 + $0x1638] sm:$0xff]
        %v2557 = vld [vmem:[%s2404 + $0x1640] sm:$0xff]
        %v2558 = vld [vmem:[%s2404 + $0x1648] sm:$0xff]
        %v2559 = vld [vmem:[%s2404 + $0x1650] sm:$0xff]
        %v2560 = vld [vmem:[%s2404 + $0x1658] sm:$0xff]
        %v2561 = vld [vmem:[%s2404 + $0x1660] sm:$0xff]
        %v2562 = vld [vmem:[%s2404 + $0x1668] sm:$0xff]
        %v2563 = vld [vmem:[%s2404 + $0x1670] sm:$0xff]
        %v2564 = vld [vmem:[%s2404 + $0x1678] sm:$0xff]
        %v2565 = vld [vmem:[%s2404 + $0x1680] sm:$0xff]
        %v2566 = vld [vmem:[%s2404 + $0x1688] sm:$0xff]
        %v2567 = vld [vmem:[%s2404 + $0x1690] sm:$0xff]
        %v2568 = vld [vmem:[%s2404 + $0x1698] sm:$0xff]
        %v2569 = vld [vmem:[%s2404 + $0x16a0] sm:$0xff]
        %v2570 = vld [vmem:[%s2404 + $0x16a8] sm:$0xff]
        %v2571 = vld [vmem:[%s2404 + $0x16b0] sm:$0xff]
        %v2572 = vld [vmem:[%s2404 + $0x16b8] sm:$0xff]
        %v2573 = vld [vmem:[%s2404 + $0x1f80] sm:$0xff]
        %v2574 = vld [vmem:[%s2404 + $0x1f88] sm:$0xff]
        %v2575 = vld [vmem:[%s2404 + $0x1f90] sm:$0xff]
        %v2576 = vld [vmem:[%s2404 + $0x1f98] sm:$0xff]
        %v2577 = vld [vmem:[%s2404 + $0x1fa0] sm:$0xff]
        %v2578 = vld [vmem:[%s2404 + $0x1fa8] sm:$0xff]
        %v2579 = vld [vmem:[%s2404 + $0x1fb0] sm:$0xff]
        %v2580 = vld [vmem:[%s2404 + $0x1fb8] sm:$0xff]
        %v2581 = vld [vmem:[%s2404 + $0x1fc0] sm:$0xff]
        %v2582 = vld [vmem:[%s2404 + $0x1fc8] sm:$0xff]
        %v2583 = vld [vmem:[%s2404 + $0x1fd0] sm:$0xff]
        %v2584 = vld [vmem:[%s2404 + $0x1fd8] sm:$0xff]
        %v2585 = vld [vmem:[%s2404 + $0x1fe0] sm:$0xff]
        %v2586 = vld [vmem:[%s2404 + $0x1fe8] sm:$0xff]
        %v2587 = vld [vmem:[%s2404 + $0x1ff0] sm:$0xff]
        %v2588 = vld [vmem:[%s2404 + $0x1ff8] sm:$0xff]
        %v2589 = vld [vmem:[%s2404 + $0x2000] sm:$0xff]
        %v2590 = vld [vmem:[%s2404 + $0x2008] sm:$0xff]
        %v2591 = vld [vmem:[%s2404 + $0x2010] sm:$0xff]
        %v2592 = vld [vmem:[%s2404 + $0x2018] sm:$0xff]
        %v2593 = vld [vmem:[%s2404 + $0x2020] sm:$0xff]
        %v2594 = vld [vmem:[%s2404 + $0x2028] sm:$0xff]
        %v2595 = vld [vmem:[%s2404 + $0x2030] sm:$0xff]
        %v2596 = vld [vmem:[%s2404 + $0x2038] sm:$0xff]
        %v2597 = vld [vmem:[%s2404 + $0x2040] sm:$0xff]
        %v2598 = vld [vmem:[%s2404 + $0x2048] sm:$0xff]
        %v2599 = vld [vmem:[%s2404 + $0x2050] sm:$0xff]
        %v2600 = vld [vmem:[%s2404 + $0x2058] sm:$0xff]
        %v2601 = vld [vmem:[%s2404 + $0x2060] sm:$0xff]
        %v2602 = vld [vmem:[%s2404 + $0x2068] sm:$0xff]
        %v2603 = vld [vmem:[%s2404 + $0x2070] sm:$0xff]
        %v2604 = vld [vmem:[%s2404 + $0x2078] sm:$0xff]
        %v2605 = vld [vmem:[%s2404 + $0x2080] sm:$0xff]
        %v2606 = vld [vmem:[%s2404 + $0x2088] sm:$0xff]
        %v2607 = vld [vmem:[%s2404 + $0x2090] sm:$0xff]
        %v2608 = vld [vmem:[%s2404 + $0x2098] sm:$0xff]
        %v2609 = vld [vmem:[%s2404 + $0x20a0] sm:$0xff]
        %v2610 = vld [vmem:[%s2404 + $0x20a8] sm:$0xff]
        %v2611 = vld [vmem:[%s2404 + $0x20b0] sm:$0xff]
        %v2612 = vld [vmem:[%s2404 + $0x20b8] sm:$0xff]
        %v2613 = vld [vmem:[%s2404 + $0x20c0] sm:$0xff]
        %v2614 = vld [vmem:[%s2404 + $0x20c8] sm:$0xff]
        %v2615 = vld [vmem:[%s2404 + $0x20d0] sm:$0xff]
        %v2616 = vld [vmem:[%s2404 + $0x20d8] sm:$0xff]
        %v2617 = vld [vmem:[%s2404 + $0x20e0] sm:$0xff]
        %v2618 = vld [vmem:[%s2404 + $0x20e8] sm:$0xff]
        %v2619 = vld [vmem:[%s2404 + $0x20f0] sm:$0xff]
        %v2620 = vld [vmem:[%s2404 + $0x20f8] sm:$0xff]
        %v2621 = vld [vmem:[%s2404 + $0x2100] sm:$0xff]
        %v2622 = vld [vmem:[%s2404 + $0x2108] sm:$0xff]
        %v2623 = vld [vmem:[%s2404 + $0x2110] sm:$0xff]
        %v2624 = vld [vmem:[%s2404 + $0x2118] sm:$0xff]
        %v2625 = vld [vmem:[%s2404 + $0x2120] sm:$0xff]
        %v2626 = vld [vmem:[%s2404 + $0x2128] sm:$0xff]
        %v2627 = vld [vmem:[%s2404 + $0x2130] sm:$0xff]
        %v2628 = vld [vmem:[%s2404 + $0x2138] sm:$0xff]
        %s2629 = scalar_lea.vmem %s136, 2240 [#allocation2]
        %v2630 = vld [vmem:[%s2629] sm:$0xff]
        %v2631 = vld [vmem:[%s2629 + $0x8] sm:$0xff]
        %v2632 = vld [vmem:[%s2629 + $0x10] sm:$0xff]
        %v2633 = vld [vmem:[%s2629 + $0x18] sm:$0xff]
        %v2634 = vld [vmem:[%s2629 + $0x20] sm:$0xff]
        %v2635 = vld [vmem:[%s2629 + $0x28] sm:$0xff]
        %v2636 = vld [vmem:[%s2629 + $0x30] sm:$0xff]
        %v2637 = vld [vmem:[%s2629 + $0x38] sm:$0xff]
        %v2638 = vld [vmem:[%s2629 + $0x40] sm:$0xff]
        %v2639 = vld [vmem:[%s2629 + $0x48] sm:$0xff]
        %v2640 = vld [vmem:[%s2629 + $0x50] sm:$0xff]
        %v2641 = vld [vmem:[%s2629 + $0x58] sm:$0xff]
        %v2642 = vld [vmem:[%s2629 + $0x60] sm:$0xff]
        %v2643 = vld [vmem:[%s2629 + $0x68] sm:$0xff]
        %v2644 = vld [vmem:[%s2629 + $0x70] sm:$0xff]
        %v2645 = vld [vmem:[%s2629 + $0x78] sm:$0xff]
        %v2646 = vld [vmem:[%s2629 + $0x80] sm:$0xff]
        %v2647 = vld [vmem:[%s2629 + $0x88] sm:$0xff]
        %v2648 = vld [vmem:[%s2629 + $0x90] sm:$0xff]
        %v2649 = vld [vmem:[%s2629 + $0x98] sm:$0xff]
        %v2650 = vld [vmem:[%s2629 + $0xa0] sm:$0xff]
        %v2651 = vld [vmem:[%s2629 + $0xa8] sm:$0xff]
        %v2652 = vld [vmem:[%s2629 + $0xb0] sm:$0xff]
        %v2653 = vld [vmem:[%s2629 + $0xb8] sm:$0xff]
        %v2654 = vld [vmem:[%s2629 + $0xc0] sm:$0xff]
        %v2655 = vld [vmem:[%s2629 + $0xc8] sm:$0xff]
        %v2656 = vld [vmem:[%s2629 + $0xd0] sm:$0xff]
        %v2657 = vld [vmem:[%s2629 + $0xd8] sm:$0xff]
        %v2658 = vld [vmem:[%s2629 + $0xe0] sm:$0xff]
        %v2659 = vld [vmem:[%s2629 + $0xe8] sm:$0xff]
        %v2660 = vld [vmem:[%s2629 + $0xf0] sm:$0xff]
        %v2661 = vld [vmem:[%s2629 + $0xf8] sm:$0xff]
        %v2662 = vld [vmem:[%s2629 + $0x100] sm:$0xff]
        %v2663 = vld [vmem:[%s2629 + $0x108] sm:$0xff]
        %v2664 = vld [vmem:[%s2629 + $0x110] sm:$0xff]
        %v2665 = vld [vmem:[%s2629 + $0x118] sm:$0xff]
        %v2666 = vld [vmem:[%s2629 + $0x120] sm:$0xff]
        %v2667 = vld [vmem:[%s2629 + $0x128] sm:$0xff]
        %v2668 = vld [vmem:[%s2629 + $0x130] sm:$0xff]
        %v2669 = vld [vmem:[%s2629 + $0x138] sm:$0xff]
        %v2670 = vld [vmem:[%s2629 + $0x140] sm:$0xff]
        %v2671 = vld [vmem:[%s2629 + $0x148] sm:$0xff]
        %v2672 = vld [vmem:[%s2629 + $0x150] sm:$0xff]
        %v2673 = vld [vmem:[%s2629 + $0x158] sm:$0xff]
        %v2674 = vld [vmem:[%s2629 + $0x160] sm:$0xff]
        %v2675 = vld [vmem:[%s2629 + $0x168] sm:$0xff]
        %v2676 = vld [vmem:[%s2629 + $0x170] sm:$0xff]
        %v2677 = vld [vmem:[%s2629 + $0x178] sm:$0xff]
        %v2678 = vld [vmem:[%s2629 + $0x180] sm:$0xff]
        %v2679 = vld [vmem:[%s2629 + $0x188] sm:$0xff]
        %v2680 = vld [vmem:[%s2629 + $0x190] sm:$0xff]
        %v2681 = vld [vmem:[%s2629 + $0x198] sm:$0xff]
        %v2682 = vld [vmem:[%s2629 + $0x1a0] sm:$0xff]
        %v2683 = vld [vmem:[%s2629 + $0x1a8] sm:$0xff]
        %v2684 = vld [vmem:[%s2629 + $0x1b0] sm:$0xff]
        %v2685 = vld [vmem:[%s2629 + $0x1b8] sm:$0xff]
        %v2686 = vld [vmem:[%s2629 + $0xa80] sm:$0xff]
        %v2687 = vld [vmem:[%s2629 + $0xa88] sm:$0xff]
        %v2688 = vld [vmem:[%s2629 + $0xa90] sm:$0xff]
        %v2689 = vld [vmem:[%s2629 + $0xa98] sm:$0xff]
        %v2690 = vld [vmem:[%s2629 + $0xaa0] sm:$0xff]
        %v2691 = vld [vmem:[%s2629 + $0xaa8] sm:$0xff]
        %v2692 = vld [vmem:[%s2629 + $0xab0] sm:$0xff]
        %v2693 = vld [vmem:[%s2629 + $0xab8] sm:$0xff]
        %v2694 = vld [vmem:[%s2629 + $0xac0] sm:$0xff]
        %v2695 = vld [vmem:[%s2629 + $0xac8] sm:$0xff]
        %v2696 = vld [vmem:[%s2629 + $0xad0] sm:$0xff]
        %v2697 = vld [vmem:[%s2629 + $0xad8] sm:$0xff]
        %v2698 = vld [vmem:[%s2629 + $0xae0] sm:$0xff]
        %v2699 = vld [vmem:[%s2629 + $0xae8] sm:$0xff]
        %v2700 = vld [vmem:[%s2629 + $0xaf0] sm:$0xff]
        %v2701 = vld [vmem:[%s2629 + $0xaf8] sm:$0xff]
        %v2702 = vld [vmem:[%s2629 + $0xb00] sm:$0xff]
        %v2703 = vld [vmem:[%s2629 + $0xb08] sm:$0xff]
        %v2704 = vld [vmem:[%s2629 + $0xb10] sm:$0xff]
        %v2705 = vld [vmem:[%s2629 + $0xb18] sm:$0xff]
        %v2706 = vld [vmem:[%s2629 + $0xb20] sm:$0xff]
        %v2707 = vld [vmem:[%s2629 + $0xb28] sm:$0xff]
        %v2708 = vld [vmem:[%s2629 + $0xb30] sm:$0xff]
        %v2709 = vld [vmem:[%s2629 + $0xb38] sm:$0xff]
        %v2710 = vld [vmem:[%s2629 + $0xb40] sm:$0xff]
        %v2711 = vld [vmem:[%s2629 + $0xb48] sm:$0xff]
        %v2712 = vld [vmem:[%s2629 + $0xb50] sm:$0xff]
        %v2713 = vld [vmem:[%s2629 + $0xb58] sm:$0xff]
        %v2714 = vld [vmem:[%s2629 + $0xb60] sm:$0xff]
        %v2715 = vld [vmem:[%s2629 + $0xb68] sm:$0xff]
        %v2716 = vld [vmem:[%s2629 + $0xb70] sm:$0xff]
        %v2717 = vld [vmem:[%s2629 + $0xb78] sm:$0xff]
        %v2718 = vld [vmem:[%s2629 + $0xb80] sm:$0xff]
        %v2719 = vld [vmem:[%s2629 + $0xb88] sm:$0xff]
        %v2720 = vld [vmem:[%s2629 + $0xb90] sm:$0xff]
        %v2721 = vld [vmem:[%s2629 + $0xb98] sm:$0xff]
        %v2722 = vld [vmem:[%s2629 + $0xba0] sm:$0xff]
        %v2723 = vld [vmem:[%s2629 + $0xba8] sm:$0xff]
        %v2724 = vld [vmem:[%s2629 + $0xbb0] sm:$0xff]
        %v2725 = vld [vmem:[%s2629 + $0xbb8] sm:$0xff]
        %v2726 = vld [vmem:[%s2629 + $0xbc0] sm:$0xff]
        %v2727 = vld [vmem:[%s2629 + $0xbc8] sm:$0xff]
        %v2728 = vld [vmem:[%s2629 + $0xbd0] sm:$0xff]
        %v2729 = vld [vmem:[%s2629 + $0xbd8] sm:$0xff]
        %v2730 = vld [vmem:[%s2629 + $0xbe0] sm:$0xff]
        %v2731 = vld [vmem:[%s2629 + $0xbe8] sm:$0xff]
        %v2732 = vld [vmem:[%s2629 + $0xbf0] sm:$0xff]
        %v2733 = vld [vmem:[%s2629 + $0xbf8] sm:$0xff]
        %v2734 = vld [vmem:[%s2629 + $0xc00] sm:$0xff]
        %v2735 = vld [vmem:[%s2629 + $0xc08] sm:$0xff]
        %v2736 = vld [vmem:[%s2629 + $0xc10] sm:$0xff]
        %v2737 = vld [vmem:[%s2629 + $0xc18] sm:$0xff]
        %v2738 = vld [vmem:[%s2629 + $0xc20] sm:$0xff]
        %v2739 = vld [vmem:[%s2629 + $0xc28] sm:$0xff]
        %v2740 = vld [vmem:[%s2629 + $0xc30] sm:$0xff]
        %v2741 = vld [vmem:[%s2629 + $0xc38] sm:$0xff]
        %v2742 = vld [vmem:[%s2629 + $0x1500] sm:$0xff]
        %v2743 = vld [vmem:[%s2629 + $0x1508] sm:$0xff]
        %v2744 = vld [vmem:[%s2629 + $0x1510] sm:$0xff]
        %v2745 = vld [vmem:[%s2629 + $0x1518] sm:$0xff]
        %v2746 = vld [vmem:[%s2629 + $0x1520] sm:$0xff]
        %v2747 = vld [vmem:[%s2629 + $0x1528] sm:$0xff]
        %v2748 = vld [vmem:[%s2629 + $0x1530] sm:$0xff]
        %v2749 = vld [vmem:[%s2629 + $0x1538] sm:$0xff]
        %v2750 = vld [vmem:[%s2629 + $0x1540] sm:$0xff]
        %v2751 = vld [vmem:[%s2629 + $0x1548] sm:$0xff]
        %v2752 = vld [vmem:[%s2629 + $0x1550] sm:$0xff]
        %v2753 = vld [vmem:[%s2629 + $0x1558] sm:$0xff]
        %v2754 = vld [vmem:[%s2629 + $0x1560] sm:$0xff]
        %v2755 = vld [vmem:[%s2629 + $0x1568] sm:$0xff]
        %v2756 = vld [vmem:[%s2629 + $0x1570] sm:$0xff]
        %v2757 = vld [vmem:[%s2629 + $0x1578] sm:$0xff]
        %v2758 = vld [vmem:[%s2629 + $0x1580] sm:$0xff]
        %v2759 = vld [vmem:[%s2629 + $0x1588] sm:$0xff]
        %v2760 = vld [vmem:[%s2629 + $0x1590] sm:$0xff]
        %v2761 = vld [vmem:[%s2629 + $0x1598] sm:$0xff]
        %v2762 = vld [vmem:[%s2629 + $0x15a0] sm:$0xff]
        %v2763 = vld [vmem:[%s2629 + $0x15a8] sm:$0xff]
        %v2764 = vld [vmem:[%s2629 + $0x15b0] sm:$0xff]
        %v2765 = vld [vmem:[%s2629 + $0x15b8] sm:$0xff]
        %v2766 = vld [vmem:[%s2629 + $0x15c0] sm:$0xff]
        %v2767 = vld [vmem:[%s2629 + $0x15c8] sm:$0xff]
        %v2768 = vld [vmem:[%s2629 + $0x15d0] sm:$0xff]
        %v2769 = vld [vmem:[%s2629 + $0x15d8] sm:$0xff]
        %v2770 = vld [vmem:[%s2629 + $0x15e0] sm:$0xff]
        %v2771 = vld [vmem:[%s2629 + $0x15e8] sm:$0xff]
        %v2772 = vld [vmem:[%s2629 + $0x15f0] sm:$0xff]
        %v2773 = vld [vmem:[%s2629 + $0x15f8] sm:$0xff]
        %v2774 = vld [vmem:[%s2629 + $0x1600] sm:$0xff]
        %v2775 = vld [vmem:[%s2629 + $0x1608] sm:$0xff]
        %v2776 = vld [vmem:[%s2629 + $0x1610] sm:$0xff]
        %v2777 = vld [vmem:[%s2629 + $0x1618] sm:$0xff]
        %v2778 = vld [vmem:[%s2629 + $0x1620] sm:$0xff]
        %v2779 = vld [vmem:[%s2629 + $0x1628] sm:$0xff]
        %v2780 = vld [vmem:[%s2629 + $0x1630] sm:$0xff]
        %v2781 = vld [vmem:[%s2629 + $0x1638] sm:$0xff]
        %v2782 = vld [vmem:[%s2629 + $0x1640] sm:$0xff]
        %v2783 = vld [vmem:[%s2629 + $0x1648] sm:$0xff]
        %v2784 = vld [vmem:[%s2629 + $0x1650] sm:$0xff]
        %v2785 = vld [vmem:[%s2629 + $0x1658] sm:$0xff]
        %v2786 = vld [vmem:[%s2629 + $0x1660] sm:$0xff]
        %v2787 = vld [vmem:[%s2629 + $0x1668] sm:$0xff]
        %v2788 = vld [vmem:[%s2629 + $0x1670] sm:$0xff]
        %v2789 = vld [vmem:[%s2629 + $0x1678] sm:$0xff]
        %v2790 = vld [vmem:[%s2629 + $0x1680] sm:$0xff]
        %v2791 = vld [vmem:[%s2629 + $0x1688] sm:$0xff]
        %v2792 = vld [vmem:[%s2629 + $0x1690] sm:$0xff]
        %v2793 = vld [vmem:[%s2629 + $0x1698] sm:$0xff]
        %v2794 = vld [vmem:[%s2629 + $0x16a0] sm:$0xff]
        %v2795 = vld [vmem:[%s2629 + $0x16a8] sm:$0xff]
        %v2796 = vld [vmem:[%s2629 + $0x16b0] sm:$0xff]
        %v2797 = vld [vmem:[%s2629 + $0x16b8] sm:$0xff]
        %v2798 = vld [vmem:[%s2629 + $0x1f80] sm:$0xff]
        %v2799 = vld [vmem:[%s2629 + $0x1f88] sm:$0xff]
        %v2800 = vld [vmem:[%s2629 + $0x1f90] sm:$0xff]
        %v2801 = vld [vmem:[%s2629 + $0x1f98] sm:$0xff]
        %v2802 = vld [vmem:[%s2629 + $0x1fa0] sm:$0xff]
        %v2803 = vld [vmem:[%s2629 + $0x1fa8] sm:$0xff]
        %v2804 = vld [vmem:[%s2629 + $0x1fb0] sm:$0xff]
        %v2805 = vld [vmem:[%s2629 + $0x1fb8] sm:$0xff]
        %v2806 = vld [vmem:[%s2629 + $0x1fc0] sm:$0xff]
        %v2807 = vld [vmem:[%s2629 + $0x1fc8] sm:$0xff]
        %v2808 = vld [vmem:[%s2629 + $0x1fd0] sm:$0xff]
        %v2809 = vld [vmem:[%s2629 + $0x1fd8] sm:$0xff]
        %v2810 = vld [vmem:[%s2629 + $0x1fe0] sm:$0xff]
        %v2811 = vld [vmem:[%s2629 + $0x1fe8] sm:$0xff]
        %v2812 = vld [vmem:[%s2629 + $0x1ff0] sm:$0xff]
        %v2813 = vld [vmem:[%s2629 + $0x1ff8] sm:$0xff]
        %v2814 = vld [vmem:[%s2629 + $0x2000] sm:$0xff]
        %v2815 = vld [vmem:[%s2629 + $0x2008] sm:$0xff]
        %v2816 = vld [vmem:[%s2629 + $0x2010] sm:$0xff]
        %v2817 = vld [vmem:[%s2629 + $0x2018] sm:$0xff]
        %v2818 = vld [vmem:[%s2629 + $0x2020] sm:$0xff]
        %v2819 = vld [vmem:[%s2629 + $0x2028] sm:$0xff]
        %v2820 = vld [vmem:[%s2629 + $0x2030] sm:$0xff]
        %v2821 = vld [vmem:[%s2629 + $0x2038] sm:$0xff]
        %v2822 = vld [vmem:[%s2629 + $0x2040] sm:$0xff]
        %v2823 = vld [vmem:[%s2629 + $0x2048] sm:$0xff]
        %v2824 = vld [vmem:[%s2629 + $0x2050] sm:$0xff]
        %v2825 = vld [vmem:[%s2629 + $0x2058] sm:$0xff]
        %v2826 = vld [vmem:[%s2629 + $0x2060] sm:$0xff]
        %v2827 = vld [vmem:[%s2629 + $0x2068] sm:$0xff]
        %v2828 = vld [vmem:[%s2629 + $0x2070] sm:$0xff]
        %v2829 = vld [vmem:[%s2629 + $0x2078] sm:$0xff]
        %v2830 = vld [vmem:[%s2629 + $0x2080] sm:$0xff]
        %v2831 = vld [vmem:[%s2629 + $0x2088] sm:$0xff]
        %v2832 = vld [vmem:[%s2629 + $0x2090] sm:$0xff]
        %v2833 = vld [vmem:[%s2629 + $0x2098] sm:$0xff]
        %v2834 = vld [vmem:[%s2629 + $0x20a0] sm:$0xff]
        %v2835 = vld [vmem:[%s2629 + $0x20a8] sm:$0xff]
        %v2836 = vld [vmem:[%s2629 + $0x20b0] sm:$0xff]
        %v2837 = vld [vmem:[%s2629 + $0x20b8] sm:$0xff]
        %v2838 = vld [vmem:[%s2629 + $0x20c0] sm:$0xff]
        %v2839 = vld [vmem:[%s2629 + $0x20c8] sm:$0xff]
        %v2840 = vld [vmem:[%s2629 + $0x20d0] sm:$0xff]
        %v2841 = vld [vmem:[%s2629 + $0x20d8] sm:$0xff]
        %v2842 = vld [vmem:[%s2629 + $0x20e0] sm:$0xff]
        %v2843 = vld [vmem:[%s2629 + $0x20e8] sm:$0xff]
        %v2844 = vld [vmem:[%s2629 + $0x20f0] sm:$0xff]
        %v2845 = vld [vmem:[%s2629 + $0x20f8] sm:$0xff]
        %v2846 = vld [vmem:[%s2629 + $0x2100] sm:$0xff]
        %v2847 = vld [vmem:[%s2629 + $0x2108] sm:$0xff]
        %v2848 = vld [vmem:[%s2629 + $0x2110] sm:$0xff]
        %v2849 = vld [vmem:[%s2629 + $0x2118] sm:$0xff]
        %v2850 = vld [vmem:[%s2629 + $0x2120] sm:$0xff]
        %v2851 = vld [vmem:[%s2629 + $0x2128] sm:$0xff]
        %v2852 = vld [vmem:[%s2629 + $0x2130] sm:$0xff]
        %v2853 = vld [vmem:[%s2629 + $0x2138] sm:$0xff]
        %v2854 = vadd.f32 %v2405, %v2630
        %v2855 = vadd.f32 %v2406, %v2631
        %v2856 = vadd.f32 %v2407, %v2632
        %v2857 = vadd.f32 %v2408, %v2633
        %v2858 = vadd.f32 %v2409, %v2634
        %v2859 = vadd.f32 %v2410, %v2635
        %v2860 = vadd.f32 %v2411, %v2636
        %v2861 = vadd.f32 %v2412, %v2637
        %v2862 = vadd.f32 %v2413, %v2638
        %v2863 = vadd.f32 %v2414, %v2639
        %v2864 = vadd.f32 %v2415, %v2640
        %v2865 = vadd.f32 %v2416, %v2641
        %v2866 = vadd.f32 %v2417, %v2642
        %v2867 = vadd.f32 %v2418, %v2643
        %v2868 = vadd.f32 %v2419, %v2644
        %v2869 = vadd.f32 %v2420, %v2645
        %v2870 = vadd.f32 %v2421, %v2646
        %v2871 = vadd.f32 %v2422, %v2647
        %v2872 = vadd.f32 %v2423, %v2648
        %v2873 = vadd.f32 %v2424, %v2649
        %v2874 = vadd.f32 %v2425, %v2650
        %v2875 = vadd.f32 %v2426, %v2651
        %v2876 = vadd.f32 %v2427, %v2652
        %v2877 = vadd.f32 %v2428, %v2653
        %v2878 = vadd.f32 %v2429, %v2654
        %v2879 = vadd.f32 %v2430, %v2655
        %v2880 = vadd.f32 %v2431, %v2656
        %v2881 = vadd.f32 %v2432, %v2657
        %v2882 = vadd.f32 %v2433, %v2658
        %v2883 = vadd.f32 %v2434, %v2659
        %v2884 = vadd.f32 %v2435, %v2660
        %v2885 = vadd.f32 %v2436, %v2661
        %v2886 = vadd.f32 %v2437, %v2662
        %v2887 = vadd.f32 %v2438, %v2663
        %v2888 = vadd.f32 %v2439, %v2664
        %v2889 = vadd.f32 %v2440, %v2665
        %v2890 = vadd.f32 %v2441, %v2666
        %v2891 = vadd.f32 %v2442, %v2667
        %v2892 = vadd.f32 %v2443, %v2668
        %v2893 = vadd.f32 %v2444, %v2669
        %v2894 = vadd.f32 %v2445, %v2670
        %v2895 = vadd.f32 %v2446, %v2671
        %v2896 = vadd.f32 %v2447, %v2672
        %v2897 = vadd.f32 %v2448, %v2673
        %v2898 = vadd.f32 %v2449, %v2674
        %v2899 = vadd.f32 %v2450, %v2675
        %v2900 = vadd.f32 %v2451, %v2676
        %v2901 = vadd.f32 %v2452, %v2677
        %v2902 = vadd.f32 %v2453, %v2678
        %v2903 = vadd.f32 %v2454, %v2679
        %v2904 = vadd.f32 %v2455, %v2680
        %v2905 = vadd.f32 %v2456, %v2681
        %v2906 = vadd.f32 %v2457, %v2682
        %v2907 = vadd.f32 %v2458, %v2683
        %v2908 = vadd.f32 %v2459, %v2684
        %v2909 = vadd.f32 %v2460, %v2685
        %v2910 = vadd.f32 %v2461, %v2686
        %v2911 = vadd.f32 %v2462, %v2687
        %v2912 = vadd.f32 %v2463, %v2688
        %v2913 = vadd.f32 %v2464, %v2689
        %v2914 = vadd.f32 %v2465, %v2690
        %v2915 = vadd.f32 %v2466, %v2691
        %v2916 = vadd.f32 %v2467, %v2692
        %v2917 = vadd.f32 %v2468, %v2693
        %v2918 = vadd.f32 %v2469, %v2694
        %v2919 = vadd.f32 %v2470, %v2695
        %v2920 = vadd.f32 %v2471, %v2696
        %v2921 = vadd.f32 %v2472, %v2697
        %v2922 = vadd.f32 %v2473, %v2698
        %v2923 = vadd.f32 %v2474, %v2699
        %v2924 = vadd.f32 %v2475, %v2700
        %v2925 = vadd.f32 %v2476, %v2701
        %v2926 = vadd.f32 %v2477, %v2702
        %v2927 = vadd.f32 %v2478, %v2703
        %v2928 = vadd.f32 %v2479, %v2704
        %v2929 = vadd.f32 %v2480, %v2705
        %v2930 = vadd.f32 %v2481, %v2706
        %v2931 = vadd.f32 %v2482, %v2707
        %v2932 = vadd.f32 %v2483, %v2708
        %v2933 = vadd.f32 %v2484, %v2709
        %v2934 = vadd.f32 %v2485, %v2710
        %v2935 = vadd.f32 %v2486, %v2711
        %v2936 = vadd.f32 %v2487, %v2712
        %v2937 = vadd.f32 %v2488, %v2713
        %v2938 = vadd.f32 %v2489, %v2714
        %v2939 = vadd.f32 %v2490, %v2715
        %v2940 = vadd.f32 %v2491, %v2716
        %v2941 = vadd.f32 %v2492, %v2717
        %v2942 = vadd.f32 %v2493, %v2718
        %v2943 = vadd.f32 %v2494, %v2719
        %v2944 = vadd.f32 %v2495, %v2720
        %v2945 = vadd.f32 %v2496, %v2721
        %v2946 = vadd.f32 %v2497, %v2722
        %v2947 = vadd.f32 %v2498, %v2723
        %v2948 = vadd.f32 %v2499, %v2724
        %v2949 = vadd.f32 %v2500, %v2725
        %v2950 = vadd.f32 %v2501, %v2726
        %v2951 = vadd.f32 %v2502, %v2727
        %v2952 = vadd.f32 %v2503, %v2728
        %v2953 = vadd.f32 %v2504, %v2729
        %v2954 = vadd.f32 %v2505, %v2730
        %v2955 = vadd.f32 %v2506, %v2731
        %v2956 = vadd.f32 %v2507, %v2732
        %v2957 = vadd.f32 %v2508, %v2733
        %v2958 = vadd.f32 %v2509, %v2734
        %v2959 = vadd.f32 %v2510, %v2735
        %v2960 = vadd.f32 %v2511, %v2736
        %v2961 = vadd.f32 %v2512, %v2737
        %v2962 = vadd.f32 %v2513, %v2738
        %v2963 = vadd.f32 %v2514, %v2739
        %v2964 = vadd.f32 %v2515, %v2740
        %v2965 = vadd.f32 %v2516, %v2741
        %v2966 = vadd.f32 %v2517, %v2742
        %v2967 = vadd.f32 %v2518, %v2743
        %v2968 = vadd.f32 %v2519, %v2744
        %v2969 = vadd.f32 %v2520, %v2745
        %v2970 = vadd.f32 %v2521, %v2746
        %v2971 = vadd.f32 %v2522, %v2747
        %v2972 = vadd.f32 %v2523, %v2748
        %v2973 = vadd.f32 %v2524, %v2749
        %v2974 = vadd.f32 %v2525, %v2750
        %v2975 = vadd.f32 %v2526, %v2751
        %v2976 = vadd.f32 %v2527, %v2752
        %v2977 = vadd.f32 %v2528, %v2753
        %v2978 = vadd.f32 %v2529, %v2754
        %v2979 = vadd.f32 %v2530, %v2755
        %v2980 = vadd.f32 %v2531, %v2756
        %v2981 = vadd.f32 %v2532, %v2757
        %v2982 = vadd.f32 %v2533, %v2758
        %v2983 = vadd.f32 %v2534, %v2759
        %v2984 = vadd.f32 %v2535, %v2760
        %v2985 = vadd.f32 %v2536, %v2761
        %v2986 = vadd.f32 %v2537, %v2762
        %v2987 = vadd.f32 %v2538, %v2763
        %v2988 = vadd.f32 %v2539, %v2764
        %v2989 = vadd.f32 %v2540, %v2765
        %v2990 = vadd.f32 %v2541, %v2766
        %v2991 = vadd.f32 %v2542, %v2767
        %v2992 = vadd.f32 %v2543, %v2768
        %v2993 = vadd.f32 %v2544, %v2769
        %v2994 = vadd.f32 %v2545, %v2770
        %v2995 = vadd.f32 %v2546, %v2771
        %v2996 = vadd.f32 %v2547, %v2772
        %v2997 = vadd.f32 %v2548, %v2773
        %v2998 = vadd.f32 %v2549, %v2774
        %v2999 = vadd.f32 %v2550, %v2775
        %v3000 = vadd.f32 %v2551, %v2776
        %v3001 = vadd.f32 %v2552, %v2777
        %v3002 = vadd.f32 %v2553, %v2778
        %v3003 = vadd.f32 %v2554, %v2779
        %v3004 = vadd.f32 %v2555, %v2780
        %v3005 = vadd.f32 %v2556, %v2781
        %v3006 = vadd.f32 %v2557, %v2782
        %v3007 = vadd.f32 %v2558, %v2783
        %v3008 = vadd.f32 %v2559, %v2784
        %v3009 = vadd.f32 %v2560, %v2785
        %v3010 = vadd.f32 %v2561, %v2786
        %v3011 = vadd.f32 %v2562, %v2787
        %v3012 = vadd.f32 %v2563, %v2788
        %v3013 = vadd.f32 %v2564, %v2789
        %v3014 = vadd.f32 %v2565, %v2790
        %v3015 = vadd.f32 %v2566, %v2791
        %v3016 = vadd.f32 %v2567, %v2792
        %v3017 = vadd.f32 %v2568, %v2793
        %v3018 = vadd.f32 %v2569, %v2794
        %v3019 = vadd.f32 %v2570, %v2795
        %v3020 = vadd.f32 %v2571, %v2796
        %v3021 = vadd.f32 %v2572, %v2797
        %v3022 = vadd.f32 %v2573, %v2798
        %v3023 = vadd.f32 %v2574, %v2799
        %v3024 = vadd.f32 %v2575, %v2800
        %v3025 = vadd.f32 %v2576, %v2801
        %v3026 = vadd.f32 %v2577, %v2802
        %v3027 = vadd.f32 %v2578, %v2803
        %v3028 = vadd.f32 %v2579, %v2804
        %v3029 = vadd.f32 %v2580, %v2805
        %v3030 = vadd.f32 %v2581, %v2806
        %v3031 = vadd.f32 %v2582, %v2807
        %v3032 = vadd.f32 %v2583, %v2808
        %v3033 = vadd.f32 %v2584, %v2809
        %v3034 = vadd.f32 %v2585, %v2810
        %v3035 = vadd.f32 %v2586, %v2811
        %v3036 = vadd.f32 %v2587, %v2812
        %v3037 = vadd.f32 %v2588, %v2813
        %v3038 = vadd.f32 %v2589, %v2814
        %v3039 = vadd.f32 %v2590, %v2815
        %v3040 = vadd.f32 %v2591, %v2816
        %v3041 = vadd.f32 %v2592, %v2817
        %v3042 = vadd.f32 %v2593, %v2818
        %v3043 = vadd.f32 %v2594, %v2819
        %v3044 = vadd.f32 %v2595, %v2820
        %v3045 = vadd.f32 %v2596, %v2821
        %v3046 = vadd.f32 %v2597, %v2822
        %v3047 = vadd.f32 %v2598, %v2823
        %v3048 = vadd.f32 %v2599, %v2824
        %v3049 = vadd.f32 %v2600, %v2825
        %v3050 = vadd.f32 %v2601, %v2826
        %v3051 = vadd.f32 %v2602, %v2827
        %v3052 = vadd.f32 %v2603, %v2828
        %v3053 = vadd.f32 %v2604, %v2829
        %v3054 = vadd.f32 %v2605, %v2830
        %v3055 = vadd.f32 %v2606, %v2831
        %v3056 = vadd.f32 %v2607, %v2832
        %v3057 = vadd.f32 %v2608, %v2833
        %v3058 = vadd.f32 %v2609, %v2834
        %v3059 = vadd.f32 %v2610, %v2835
        %v3060 = vadd.f32 %v2611, %v2836
        %v3061 = vadd.f32 %v2612, %v2837
        %v3062 = vadd.f32 %v2613, %v2838
        %v3063 = vadd.f32 %v2614, %v2839
        %v3064 = vadd.f32 %v2615, %v2840
        %v3065 = vadd.f32 %v2616, %v2841
        %v3066 = vadd.f32 %v2617, %v2842
        %v3067 = vadd.f32 %v2618, %v2843
        %v3068 = vadd.f32 %v2619, %v2844
        %v3069 = vadd.f32 %v2620, %v2845
        %v3070 = vadd.f32 %v2621, %v2846
        %v3071 = vadd.f32 %v2622, %v2847
        %v3072 = vadd.f32 %v2623, %v2848
        %v3073 = vadd.f32 %v2624, %v2849
        %v3074 = vadd.f32 %v2625, %v2850
        %v3075 = vadd.f32 %v2626, %v2851
        %v3076 = vadd.f32 %v2627, %v2852
        %v3077 = vadd.f32 %v2628, %v2853
        %v3078 = vmul.f32 %v2854, 0.5
        %v3079 = vmul.f32 %v2855, 0.5
        %v3080 = vmul.f32 %v2856, 0.5
        %v3081 = vmul.f32 %v2857, 0.5
        %v3082 = vmul.f32 %v2858, 0.5
        %v3083 = vmul.f32 %v2859, 0.5
        %v3084 = vmul.f32 %v2860, 0.5
        %v3085 = vmul.f32 %v2861, 0.5
        %v3086 = vmul.f32 %v2862, 0.5
        %v3087 = vmul.f32 %v2863, 0.5
        %v3088 = vmul.f32 %v2864, 0.5
        %v3089 = vmul.f32 %v2865, 0.5
        %v3090 = vmul.f32 %v2866, 0.5
        %v3091 = vmul.f32 %v2867, 0.5
        %v3092 = vmul.f32 %v2868, 0.5
        %v3093 = vmul.f32 %v2869, 0.5
        %v3094 = vmul.f32 %v2870, 0.5
        %v3095 = vmul.f32 %v2871, 0.5
        %v3096 = vmul.f32 %v2872, 0.5
        %v3097 = vmul.f32 %v2873, 0.5
        %v3098 = vmul.f32 %v2874, 0.5
        %v3099 = vmul.f32 %v2875, 0.5
        %v3100 = vmul.f32 %v2876, 0.5
        %v3101 = vmul.f32 %v2877, 0.5
        %v3102 = vmul.f32 %v2878, 0.5
        %v3103 = vmul.f32 %v2879, 0.5
        %v3104 = vmul.f32 %v2880, 0.5
        %v3105 = vmul.f32 %v2881, 0.5
        %v3106 = vmul.f32 %v2882, 0.5
        %v3107 = vmul.f32 %v2883, 0.5
        %v3108 = vmul.f32 %v2884, 0.5
        %v3109 = vmul.f32 %v2885, 0.5
        %v3110 = vmul.f32 %v2886, 0.5
        %v3111 = vmul.f32 %v2887, 0.5
        %v3112 = vmul.f32 %v2888, 0.5
        %v3113 = vmul.f32 %v2889, 0.5
        %v3114 = vmul.f32 %v2890, 0.5
        %v3115 = vmul.f32 %v2891, 0.5
        %v3116 = vmul.f32 %v2892, 0.5
        %v3117 = vmul.f32 %v2893, 0.5
        %v3118 = vmul.f32 %v2894, 0.5
        %v3119 = vmul.f32 %v2895, 0.5
        %v3120 = vmul.f32 %v2896, 0.5
        %v3121 = vmul.f32 %v2897, 0.5
        %v3122 = vmul.f32 %v2898, 0.5
        %v3123 = vmul.f32 %v2899, 0.5
        %v3124 = vmul.f32 %v2900, 0.5
        %v3125 = vmul.f32 %v2901, 0.5
        %v3126 = vmul.f32 %v2902, 0.5
        %v3127 = vmul.f32 %v2903, 0.5
        %v3128 = vmul.f32 %v2904, 0.5
        %v3129 = vmul.f32 %v2905, 0.5
        %v3130 = vmul.f32 %v2906, 0.5
        %v3131 = vmul.f32 %v2907, 0.5
        %v3132 = vmul.f32 %v2908, 0.5
        %v3133 = vmul.f32 %v2909, 0.5
        %v3134 = vmul.f32 %v2910, 0.5
        %v3135 = vmul.f32 %v2911, 0.5
        %v3136 = vmul.f32 %v2912, 0.5
        %v3137 = vmul.f32 %v2913, 0.5
        %v3138 = vmul.f32 %v2914, 0.5
        %v3139 = vmul.f32 %v2915, 0.5
        %v3140 = vmul.f32 %v2916, 0.5
        %v3141 = vmul.f32 %v2917, 0.5
        %v3142 = vmul.f32 %v2918, 0.5
        %v3143 = vmul.f32 %v2919, 0.5
        %v3144 = vmul.f32 %v2920, 0.5
        %v3145 = vmul.f32 %v2921, 0.5
        %v3146 = vmul.f32 %v2922, 0.5
        %v3147 = vmul.f32 %v2923, 0.5
        %v3148 = vmul.f32 %v2924, 0.5
        %v3149 = vmul.f32 %v2925, 0.5
        %v3150 = vmul.f32 %v2926, 0.5
        %v3151 = vmul.f32 %v2927, 0.5
        %v3152 = vmul.f32 %v2928, 0.5
        %v3153 = vmul.f32 %v2929, 0.5
        %v3154 = vmul.f32 %v2930, 0.5
        %v3155 = vmul.f32 %v2931, 0.5
        %v3156 = vmul.f32 %v2932, 0.5
        %v3157 = vmul.f32 %v2933, 0.5
        %v3158 = vmul.f32 %v2934, 0.5
        %v3159 = vmul.f32 %v2935, 0.5
        %v3160 = vmul.f32 %v2936, 0.5
        %v3161 = vmul.f32 %v2937, 0.5
        %v3162 = vmul.f32 %v2938, 0.5
        %v3163 = vmul.f32 %v2939, 0.5
        %v3164 = vmul.f32 %v2940, 0.5
        %v3165 = vmul.f32 %v2941, 0.5
        %v3166 = vmul.f32 %v2942, 0.5
        %v3167 = vmul.f32 %v2943, 0.5
        %v3168 = vmul.f32 %v2944, 0.5
        %v3169 = vmul.f32 %v2945, 0.5
        %v3170 = vmul.f32 %v2946, 0.5
        %v3171 = vmul.f32 %v2947, 0.5
        %v3172 = vmul.f32 %v2948, 0.5
        %v3173 = vmul.f32 %v2949, 0.5
        %v3174 = vmul.f32 %v2950, 0.5
        %v3175 = vmul.f32 %v2951, 0.5
        %v3176 = vmul.f32 %v2952, 0.5
        %v3177 = vmul.f32 %v2953, 0.5
        %v3178 = vmul.f32 %v2954, 0.5
        %v3179 = vmul.f32 %v2955, 0.5
        %v3180 = vmul.f32 %v2956, 0.5
        %v3181 = vmul.f32 %v2957, 0.5
        %v3182 = vmul.f32 %v2958, 0.5
        %v3183 = vmul.f32 %v2959, 0.5
        %v3184 = vmul.f32 %v2960, 0.5
        %v3185 = vmul.f32 %v2961, 0.5
        %v3186 = vmul.f32 %v2962, 0.5
        %v3187 = vmul.f32 %v2963, 0.5
        %v3188 = vmul.f32 %v2964, 0.5
        %v3189 = vmul.f32 %v2965, 0.5
        %v3190 = vmul.f32 %v2966, 0.5
        %v3191 = vmul.f32 %v2967, 0.5
        %v3192 = vmul.f32 %v2968, 0.5
        %v3193 = vmul.f32 %v2969, 0.5
        %v3194 = vmul.f32 %v2970, 0.5
        %v3195 = vmul.f32 %v2971, 0.5
        %v3196 = vmul.f32 %v2972, 0.5
        %v3197 = vmul.f32 %v2973, 0.5
        %v3198 = vmul.f32 %v2974, 0.5
        %v3199 = vmul.f32 %v2975, 0.5
        %v3200 = vmul.f32 %v2976, 0.5
        %v3201 = vmul.f32 %v2977, 0.5
        %v3202 = vmul.f32 %v2978, 0.5
        %v3203 = vmul.f32 %v2979, 0.5
        %v3204 = vmul.f32 %v2980, 0.5
        %v3205 = vmul.f32 %v2981, 0.5
        %v3206 = vmul.f32 %v2982, 0.5
        %v3207 = vmul.f32 %v2983, 0.5
        %v3208 = vmul.f32 %v2984, 0.5
        %v3209 = vmul.f32 %v2985, 0.5
        %v3210 = vmul.f32 %v2986, 0.5
        %v3211 = vmul.f32 %v2987, 0.5
        %v3212 = vmul.f32 %v2988, 0.5
        %v3213 = vmul.f32 %v2989, 0.5
        %v3214 = vmul.f32 %v2990, 0.5
        %v3215 = vmul.f32 %v2991, 0.5
        %v3216 = vmul.f32 %v2992, 0.5
        %v3217 = vmul.f32 %v2993, 0.5
        %v3218 = vmul.f32 %v2994, 0.5
        %v3219 = vmul.f32 %v2995, 0.5
        %v3220 = vmul.f32 %v2996, 0.5
        %v3221 = vmul.f32 %v2997, 0.5
        %v3222 = vmul.f32 %v2998, 0.5
        %v3223 = vmul.f32 %v2999, 0.5
        %v3224 = vmul.f32 %v3000, 0.5
        %v3225 = vmul.f32 %v3001, 0.5
        %v3226 = vmul.f32 %v3002, 0.5
        %v3227 = vmul.f32 %v3003, 0.5
        %v3228 = vmul.f32 %v3004, 0.5
        %v3229 = vmul.f32 %v3005, 0.5
        %v3230 = vmul.f32 %v3006, 0.5
        %v3231 = vmul.f32 %v3007, 0.5
        %v3232 = vmul.f32 %v3008, 0.5
        %v3233 = vmul.f32 %v3009, 0.5
        %v3234 = vmul.f32 %v3010, 0.5
        %v3235 = vmul.f32 %v3011, 0.5
        %v3236 = vmul.f32 %v3012, 0.5
        %v3237 = vmul.f32 %v3013, 0.5
        %v3238 = vmul.f32 %v3014, 0.5
        %v3239 = vmul.f32 %v3015, 0.5
        %v3240 = vmul.f32 %v3016, 0.5
        %v3241 = vmul.f32 %v3017, 0.5
        %v3242 = vmul.f32 %v3018, 0.5
        %v3243 = vmul.f32 %v3019, 0.5
        %v3244 = vmul.f32 %v3020, 0.5
        %v3245 = vmul.f32 %v3021, 0.5
        %v3246 = vmul.f32 %v3022, 0.5
        %v3247 = vmul.f32 %v3023, 0.5
        %v3248 = vmul.f32 %v3024, 0.5
        %v3249 = vmul.f32 %v3025, 0.5
        %v3250 = vmul.f32 %v3026, 0.5
        %v3251 = vmul.f32 %v3027, 0.5
        %v3252 = vmul.f32 %v3028, 0.5
        %v3253 = vmul.f32 %v3029, 0.5
        %v3254 = vmul.f32 %v3030, 0.5
        %v3255 = vmul.f32 %v3031, 0.5
        %v3256 = vmul.f32 %v3032, 0.5
        %v3257 = vmul.f32 %v3033, 0.5
        %v3258 = vmul.f32 %v3034, 0.5
        %v3259 = vmul.f32 %v3035, 0.5
        %v3260 = vmul.f32 %v3036, 0.5
        %v3261 = vmul.f32 %v3037, 0.5
        %v3262 = vmul.f32 %v3038, 0.5
        %v3263 = vmul.f32 %v3039, 0.5
        %v3264 = vmul.f32 %v3040, 0.5
        %v3265 = vmul.f32 %v3041, 0.5
        %v3266 = vmul.f32 %v3042, 0.5
        %v3267 = vmul.f32 %v3043, 0.5
        %v3268 = vmul.f32 %v3044, 0.5
        %v3269 = vmul.f32 %v3045, 0.5
        %v3270 = vmul.f32 %v3046, 0.5
        %v3271 = vmul.f32 %v3047, 0.5
        %v3272 = vmul.f32 %v3048, 0.5
        %v3273 = vmul.f32 %v3049, 0.5
        %v3274 = vmul.f32 %v3050, 0.5
        %v3275 = vmul.f32 %v3051, 0.5
        %v3276 = vmul.f32 %v3052, 0.5
        %v3277 = vmul.f32 %v3053, 0.5
        %v3278 = vmul.f32 %v3054, 0.5
        %v3279 = vmul.f32 %v3055, 0.5
        %v3280 = vmul.f32 %v3056, 0.5
        %v3281 = vmul.f32 %v3057, 0.5
        %v3282 = vmul.f32 %v3058, 0.5
        %v3283 = vmul.f32 %v3059, 0.5
        %v3284 = vmul.f32 %v3060, 0.5
        %v3285 = vmul.f32 %v3061, 0.5
        %v3286 = vmul.f32 %v3062, 0.5
        %v3287 = vmul.f32 %v3063, 0.5
        %v3288 = vmul.f32 %v3064, 0.5
        %v3289 = vmul.f32 %v3065, 0.5
        %v3290 = vmul.f32 %v3066, 0.5
        %v3291 = vmul.f32 %v3067, 0.5
        %v3292 = vmul.f32 %v3068, 0.5
        %v3293 = vmul.f32 %v3069, 0.5
        %v3294 = vmul.f32 %v3070, 0.5
        %v3295 = vmul.f32 %v3071, 0.5
        %v3296 = vmul.f32 %v3072, 0.5
        %v3297 = vmul.f32 %v3073, 0.5
        %v3298 = vmul.f32 %v3074, 0.5
        %v3299 = vmul.f32 %v3075, 0.5
        %v3300 = vmul.f32 %v3076, 0.5
        %v3301 = vmul.f32 %v3077, 0.5
        %s3302 = scalar_lea.vmem %s154, 896 [#allocation5]
        %3303 = vst [vmem:[%s3302] sm:$0xff] %v3078
        %3304 = vst.msk [vmem:[%s3302 + $0x8] sm:$0xff] %vm1057, %v3079
        %3305 = vst [vmem:[%s3302 + $0x10] sm:$0xff] %v3080
        %3306 = vst.msk [vmem:[%s3302 + $0x18] sm:$0xff] %vm1057, %v3081
        %3307 = vst [vmem:[%s3302 + $0x20] sm:$0xff] %v3082
        %3308 = vst.msk [vmem:[%s3302 + $0x28] sm:$0xff] %vm1057, %v3083
        %3309 = vst [vmem:[%s3302 + $0x30] sm:$0xff] %v3084
        %3310 = vst.msk [vmem:[%s3302 + $0x38] sm:$0xff] %vm1057, %v3085
        %3311 = vst [vmem:[%s3302 + $0x40] sm:$0xff] %v3086
        %3312 = vst.msk [vmem:[%s3302 + $0x48] sm:$0xff] %vm1057, %v3087
        %3313 = vst [vmem:[%s3302 + $0x50] sm:$0xff] %v3088
        %3314 = vst.msk [vmem:[%s3302 + $0x58] sm:$0xff] %vm1057, %v3089
        %3315 = vst [vmem:[%s3302 + $0x60] sm:$0xff] %v3090
        %3316 = vst.msk [vmem:[%s3302 + $0x68] sm:$0xff] %vm1057, %v3091
        %3317 = vst [vmem:[%s3302 + $0x70] sm:$0xff] %v3092
        %3318 = vst.msk [vmem:[%s3302 + $0x78] sm:$0xff] %vm1057, %v3093
        %3319 = vst [vmem:[%s3302 + $0x80] sm:$0xff] %v3094
        %3320 = vst.msk [vmem:[%s3302 + $0x88] sm:$0xff] %vm1057, %v3095
        %3321 = vst [vmem:[%s3302 + $0x90] sm:$0xff] %v3096
        %3322 = vst.msk [vmem:[%s3302 + $0x98] sm:$0xff] %vm1057, %v3097
        %3323 = vst [vmem:[%s3302 + $0xa0] sm:$0xff] %v3098
        %3324 = vst.msk [vmem:[%s3302 + $0xa8] sm:$0xff] %vm1057, %v3099
        %3325 = vst [vmem:[%s3302 + $0xb0] sm:$0xff] %v3100
        %3326 = vst.msk [vmem:[%s3302 + $0xb8] sm:$0xff] %vm1057, %v3101
        %3327 = vst [vmem:[%s3302 + $0xc0] sm:$0xff] %v3102
        %3328 = vst.msk [vmem:[%s3302 + $0xc8] sm:$0xff] %vm1057, %v3103
        %3329 = vst [vmem:[%s3302 + $0xd0] sm:$0xff] %v3104
        %3330 = vst.msk [vmem:[%s3302 + $0xd8] sm:$0xff] %vm1057, %v3105
        %3331 = vst [vmem:[%s3302 + $0xe0] sm:$0xff] %v3106
        %3332 = vst.msk [vmem:[%s3302 + $0xe8] sm:$0xff] %vm1057, %v3107
        %3333 = vst [vmem:[%s3302 + $0xf0] sm:$0xff] %v3108
        %3334 = vst.msk [vmem:[%s3302 + $0xf8] sm:$0xff] %vm1057, %v3109
        %3335 = vst [vmem:[%s3302 + $0x100] sm:$0xff] %v3110
        %3336 = vst.msk [vmem:[%s3302 + $0x108] sm:$0xff] %vm1057, %v3111
        %3337 = vst [vmem:[%s3302 + $0x110] sm:$0xff] %v3112
        %3338 = vst.msk [vmem:[%s3302 + $0x118] sm:$0xff] %vm1057, %v3113
        %3339 = vst [vmem:[%s3302 + $0x120] sm:$0xff] %v3114
        %3340 = vst.msk [vmem:[%s3302 + $0x128] sm:$0xff] %vm1057, %v3115
        %3341 = vst [vmem:[%s3302 + $0x130] sm:$0xff] %v3116
        %3342 = vst.msk [vmem:[%s3302 + $0x138] sm:$0xff] %vm1057, %v3117
        %3343 = vst [vmem:[%s3302 + $0x140] sm:$0xff] %v3118
        %3344 = vst.msk [vmem:[%s3302 + $0x148] sm:$0xff] %vm1057, %v3119
        %3345 = vst [vmem:[%s3302 + $0x150] sm:$0xff] %v3120
        %3346 = vst.msk [vmem:[%s3302 + $0x158] sm:$0xff] %vm1057, %v3121
        %3347 = vst [vmem:[%s3302 + $0x160] sm:$0xff] %v3122
        %3348 = vst.msk [vmem:[%s3302 + $0x168] sm:$0xff] %vm1057, %v3123
        %3349 = vst [vmem:[%s3302 + $0x170] sm:$0xff] %v3124
        %3350 = vst.msk [vmem:[%s3302 + $0x178] sm:$0xff] %vm1057, %v3125
        %3351 = vst [vmem:[%s3302 + $0x180] sm:$0xff] %v3126
        %3352 = vst.msk [vmem:[%s3302 + $0x188] sm:$0xff] %vm1057, %v3127
        %3353 = vst [vmem:[%s3302 + $0x190] sm:$0xff] %v3128
        %3354 = vst.msk [vmem:[%s3302 + $0x198] sm:$0xff] %vm1057, %v3129
        %3355 = vst [vmem:[%s3302 + $0x1a0] sm:$0xff] %v3130
        %3356 = vst.msk [vmem:[%s3302 + $0x1a8] sm:$0xff] %vm1057, %v3131
        %3357 = vst [vmem:[%s3302 + $0x1b0] sm:$0xff] %v3132
        %3358 = vst.msk [vmem:[%s3302 + $0x1b8] sm:$0xff] %vm1057, %v3133
        %3359 = vst [vmem:[%s3302 + $0x540] sm:$0xff] %v3134
        %3360 = vst.msk [vmem:[%s3302 + $0x548] sm:$0xff] %vm1057, %v3135
        %3361 = vst [vmem:[%s3302 + $0x550] sm:$0xff] %v3136
        %3362 = vst.msk [vmem:[%s3302 + $0x558] sm:$0xff] %vm1057, %v3137
        %3363 = vst [vmem:[%s3302 + $0x560] sm:$0xff] %v3138
        %3364 = vst.msk [vmem:[%s3302 + $0x568] sm:$0xff] %vm1057, %v3139
        %3365 = vst [vmem:[%s3302 + $0x570] sm:$0xff] %v3140
        %3366 = vst.msk [vmem:[%s3302 + $0x578] sm:$0xff] %vm1057, %v3141
        %3367 = vst [vmem:[%s3302 + $0x580] sm:$0xff] %v3142
        %3368 = vst.msk [vmem:[%s3302 + $0x588] sm:$0xff] %vm1057, %v3143
        %3369 = vst [vmem:[%s3302 + $0x590] sm:$0xff] %v3144
        %3370 = vst.msk [vmem:[%s3302 + $0x598] sm:$0xff] %vm1057, %v3145
        %3371 = vst [vmem:[%s3302 + $0x5a0] sm:$0xff] %v3146
        %3372 = vst.msk [vmem:[%s3302 + $0x5a8] sm:$0xff] %vm1057, %v3147
        %3373 = vst [vmem:[%s3302 + $0x5b0] sm:$0xff] %v3148
        %3374 = vst.msk [vmem:[%s3302 + $0x5b8] sm:$0xff] %vm1057, %v3149
        %3375 = vst [vmem:[%s3302 + $0x5c0] sm:$0xff] %v3150
        %3376 = vst.msk [vmem:[%s3302 + $0x5c8] sm:$0xff] %vm1057, %v3151
        %3377 = vst [vmem:[%s3302 + $0x5d0] sm:$0xff] %v3152
        %3378 = vst.msk [vmem:[%s3302 + $0x5d8] sm:$0xff] %vm1057, %v3153
        %3379 = vst [vmem:[%s3302 + $0x5e0] sm:$0xff] %v3154
        %3380 = vst.msk [vmem:[%s3302 + $0x5e8] sm:$0xff] %vm1057, %v3155
        %3381 = vst [vmem:[%s3302 + $0x5f0] sm:$0xff] %v3156
        %3382 = vst.msk [vmem:[%s3302 + $0x5f8] sm:$0xff] %vm1057, %v3157
        %3383 = vst [vmem:[%s3302 + $0x600] sm:$0xff] %v3158
        %3384 = vst.msk [vmem:[%s3302 + $0x608] sm:$0xff] %vm1057, %v3159
        %3385 = vst [vmem:[%s3302 + $0x610] sm:$0xff] %v3160
        %3386 = vst.msk [vmem:[%s3302 + $0x618] sm:$0xff] %vm1057, %v3161
        %3387 = vst [vmem:[%s3302 + $0x620] sm:$0xff] %v3162
        %3388 = vst.msk [vmem:[%s3302 + $0x628] sm:$0xff] %vm1057, %v3163
        %3389 = vst [vmem:[%s3302 + $0x630] sm:$0xff] %v3164
        %3390 = vst.msk [vmem:[%s3302 + $0x638] sm:$0xff] %vm1057, %v3165
        %3391 = vst [vmem:[%s3302 + $0x640] sm:$0xff] %v3166
        %3392 = vst.msk [vmem:[%s3302 + $0x648] sm:$0xff] %vm1057, %v3167
        %3393 = vst [vmem:[%s3302 + $0x650] sm:$0xff] %v3168
        %3394 = vst.msk [vmem:[%s3302 + $0x658] sm:$0xff] %vm1057, %v3169
        %3395 = vst [vmem:[%s3302 + $0x660] sm:$0xff] %v3170
        %3396 = vst.msk [vmem:[%s3302 + $0x668] sm:$0xff] %vm1057, %v3171
        %3397 = vst [vmem:[%s3302 + $0x670] sm:$0xff] %v3172
        %3398 = vst.msk [vmem:[%s3302 + $0x678] sm:$0xff] %vm1057, %v3173
        %3399 = vst [vmem:[%s3302 + $0x680] sm:$0xff] %v3174
        %3400 = vst.msk [vmem:[%s3302 + $0x688] sm:$0xff] %vm1057, %v3175
        %3401 = vst [vmem:[%s3302 + $0x690] sm:$0xff] %v3176
        %3402 = vst.msk [vmem:[%s3302 + $0x698] sm:$0xff] %vm1057, %v3177
        %3403 = vst [vmem:[%s3302 + $0x6a0] sm:$0xff] %v3178
        %3404 = vst.msk [vmem:[%s3302 + $0x6a8] sm:$0xff] %vm1057, %v3179
        %3405 = vst [vmem:[%s3302 + $0x6b0] sm:$0xff] %v3180
        %3406 = vst.msk [vmem:[%s3302 + $0x6b8] sm:$0xff] %vm1057, %v3181
        %3407 = vst [vmem:[%s3302 + $0x6c0] sm:$0xff] %v3182
        %3408 = vst.msk [vmem:[%s3302 + $0x6c8] sm:$0xff] %vm1057, %v3183
        %3409 = vst [vmem:[%s3302 + $0x6d0] sm:$0xff] %v3184
        %3410 = vst.msk [vmem:[%s3302 + $0x6d8] sm:$0xff] %vm1057, %v3185
        %3411 = vst [vmem:[%s3302 + $0x6e0] sm:$0xff] %v3186
        %3412 = vst.msk [vmem:[%s3302 + $0x6e8] sm:$0xff] %vm1057, %v3187
        %3413 = vst [vmem:[%s3302 + $0x6f0] sm:$0xff] %v3188
        %3414 = vst.msk [vmem:[%s3302 + $0x6f8] sm:$0xff] %vm1057, %v3189
        %3415 = vst [vmem:[%s3302 + $0xa80] sm:$0xff] %v3190
        %3416 = vst.msk [vmem:[%s3302 + $0xa88] sm:$0xff] %vm1057, %v3191
        %3417 = vst [vmem:[%s3302 + $0xa90] sm:$0xff] %v3192
        %3418 = vst.msk [vmem:[%s3302 + $0xa98] sm:$0xff] %vm1057, %v3193
        %3419 = vst [vmem:[%s3302 + $0xaa0] sm:$0xff] %v3194
        %3420 = vst.msk [vmem:[%s3302 + $0xaa8] sm:$0xff] %vm1057, %v3195
        %3421 = vst [vmem:[%s3302 + $0xab0] sm:$0xff] %v3196
        %3422 = vst.msk [vmem:[%s3302 + $0xab8] sm:$0xff] %vm1057, %v3197
        %3423 = vst [vmem:[%s3302 + $0xac0] sm:$0xff] %v3198
        %3424 = vst.msk [vmem:[%s3302 + $0xac8] sm:$0xff] %vm1057, %v3199
        %3425 = vst [vmem:[%s3302 + $0xad0] sm:$0xff] %v3200
        %3426 = vst.msk [vmem:[%s3302 + $0xad8] sm:$0xff] %vm1057, %v3201
        %3427 = vst [vmem:[%s3302 + $0xae0] sm:$0xff] %v3202
        %3428 = vst.msk [vmem:[%s3302 + $0xae8] sm:$0xff] %vm1057, %v3203
        %3429 = vst [vmem:[%s3302 + $0xaf0] sm:$0xff] %v3204
        %3430 = vst.msk [vmem:[%s3302 + $0xaf8] sm:$0xff] %vm1057, %v3205
        %3431 = vst [vmem:[%s3302 + $0xb00] sm:$0xff] %v3206
        %3432 = vst.msk [vmem:[%s3302 + $0xb08] sm:$0xff] %vm1057, %v3207
        %3433 = vst [vmem:[%s3302 + $0xb10] sm:$0xff] %v3208
        %3434 = vst.msk [vmem:[%s3302 + $0xb18] sm:$0xff] %vm1057, %v3209
        %3435 = vst [vmem:[%s3302 + $0xb20] sm:$0xff] %v3210
        %3436 = vst.msk [vmem:[%s3302 + $0xb28] sm:$0xff] %vm1057, %v3211
        %3437 = vst [vmem:[%s3302 + $0xb30] sm:$0xff] %v3212
        %3438 = vst.msk [vmem:[%s3302 + $0xb38] sm:$0xff] %vm1057, %v3213
        %3439 = vst [vmem:[%s3302 + $0xb40] sm:$0xff] %v3214
        %3440 = vst.msk [vmem:[%s3302 + $0xb48] sm:$0xff] %vm1057, %v3215
        %3441 = vst [vmem:[%s3302 + $0xb50] sm:$0xff] %v3216
        %3442 = vst.msk [vmem:[%s3302 + $0xb58] sm:$0xff] %vm1057, %v3217
        %3443 = vst [vmem:[%s3302 + $0xb60] sm:$0xff] %v3218
        %3444 = vst.msk [vmem:[%s3302 + $0xb68] sm:$0xff] %vm1057, %v3219
        %3445 = vst [vmem:[%s3302 + $0xb70] sm:$0xff] %v3220
        %3446 = vst.msk [vmem:[%s3302 + $0xb78] sm:$0xff] %vm1057, %v3221
        %3447 = vst [vmem:[%s3302 + $0xb80] sm:$0xff] %v3222
        %3448 = vst.msk [vmem:[%s3302 + $0xb88] sm:$0xff] %vm1057, %v3223
        %3449 = vst [vmem:[%s3302 + $0xb90] sm:$0xff] %v3224
        %3450 = vst.msk [vmem:[%s3302 + $0xb98] sm:$0xff] %vm1057, %v3225
        %3451 = vst [vmem:[%s3302 + $0xba0] sm:$0xff] %v3226
        %3452 = vst.msk [vmem:[%s3302 + $0xba8] sm:$0xff] %vm1057, %v3227
        %3453 = vst [vmem:[%s3302 + $0xbb0] sm:$0xff] %v3228
        %3454 = vst.msk [vmem:[%s3302 + $0xbb8] sm:$0xff] %vm1057, %v3229
        %3455 = vst [vmem:[%s3302 + $0xbc0] sm:$0xff] %v3230
        %3456 = vst.msk [vmem:[%s3302 + $0xbc8] sm:$0xff] %vm1057, %v3231
        %3457 = vst [vmem:[%s3302 + $0xbd0] sm:$0xff] %v3232
        %3458 = vst.msk [vmem:[%s3302 + $0xbd8] sm:$0xff] %vm1057, %v3233
        %3459 = vst [vmem:[%s3302 + $0xbe0] sm:$0xff] %v3234
        %3460 = vst.msk [vmem:[%s3302 + $0xbe8] sm:$0xff] %vm1057, %v3235
        %3461 = vst [vmem:[%s3302 + $0xbf0] sm:$0xff] %v3236
        %3462 = vst.msk [vmem:[%s3302 + $0xbf8] sm:$0xff] %vm1057, %v3237
        %3463 = vst [vmem:[%s3302 + $0xc00] sm:$0xff] %v3238
        %3464 = vst.msk [vmem:[%s3302 + $0xc08] sm:$0xff] %vm1057, %v3239
        %3465 = vst [vmem:[%s3302 + $0xc10] sm:$0xff] %v3240
        %3466 = vst.msk [vmem:[%s3302 + $0xc18] sm:$0xff] %vm1057, %v3241
        %3467 = vst [vmem:[%s3302 + $0xc20] sm:$0xff] %v3242
        %3468 = vst.msk [vmem:[%s3302 + $0xc28] sm:$0xff] %vm1057, %v3243
        %3469 = vst [vmem:[%s3302 + $0xc30] sm:$0xff] %v3244
        %3470 = vst.msk [vmem:[%s3302 + $0xc38] sm:$0xff] %vm1057, %v3245
        %3471 = vst [vmem:[%s3302 + $0xfc0] sm:$0xff] %v3246
        %3472 = vst.msk [vmem:[%s3302 + $0xfc8] sm:$0xff] %vm1057, %v3247
        %3473 = vst [vmem:[%s3302 + $0xfd0] sm:$0xff] %v3248
        %3474 = vst.msk [vmem:[%s3302 + $0xfd8] sm:$0xff] %vm1057, %v3249
        %3475 = vst [vmem:[%s3302 + $0xfe0] sm:$0xff] %v3250
        %3476 = vst.msk [vmem:[%s3302 + $0xfe8] sm:$0xff] %vm1057, %v3251
        %3477 = vst [vmem:[%s3302 + $0xff0] sm:$0xff] %v3252
        %3478 = vst.msk [vmem:[%s3302 + $0xff8] sm:$0xff] %vm1057, %v3253
        %3479 = vst [vmem:[%s3302 + $0x1000] sm:$0xff] %v3254
        %3480 = vst.msk [vmem:[%s3302 + $0x1008] sm:$0xff] %vm1057, %v3255
        %3481 = vst [vmem:[%s3302 + $0x1010] sm:$0xff] %v3256
        %3482 = vst.msk [vmem:[%s3302 + $0x1018] sm:$0xff] %vm1057, %v3257
        %3483 = vst [vmem:[%s3302 + $0x1020] sm:$0xff] %v3258
        %3484 = vst.msk [vmem:[%s3302 + $0x1028] sm:$0xff] %vm1057, %v3259
        %3485 = vst [vmem:[%s3302 + $0x1030] sm:$0xff] %v3260
        %3486 = vst.msk [vmem:[%s3302 + $0x1038] sm:$0xff] %vm1057, %v3261
        %3487 = vst [vmem:[%s3302 + $0x1040] sm:$0xff] %v3262
        %3488 = vst.msk [vmem:[%s3302 + $0x1048] sm:$0xff] %vm1057, %v3263
        %3489 = vst [vmem:[%s3302 + $0x1050] sm:$0xff] %v3264
        %3490 = vst.msk [vmem:[%s3302 + $0x1058] sm:$0xff] %vm1057, %v3265
        %3491 = vst [vmem:[%s3302 + $0x1060] sm:$0xff] %v3266
        %3492 = vst.msk [vmem:[%s3302 + $0x1068] sm:$0xff] %vm1057, %v3267
        %3493 = vst [vmem:[%s3302 + $0x1070] sm:$0xff] %v3268
        %3494 = vst.msk [vmem:[%s3302 + $0x1078] sm:$0xff] %vm1057, %v3269
        %3495 = vst [vmem:[%s3302 + $0x1080] sm:$0xff] %v3270
        %3496 = vst.msk [vmem:[%s3302 + $0x1088] sm:$0xff] %vm1057, %v3271
        %3497 = vst [vmem:[%s3302 + $0x1090] sm:$0xff] %v3272
        %3498 = vst.msk [vmem:[%s3302 + $0x1098] sm:$0xff] %vm1057, %v3273
        %3499 = vst [vmem:[%s3302 + $0x10a0] sm:$0xff] %v3274
        %3500 = vst.msk [vmem:[%s3302 + $0x10a8] sm:$0xff] %vm1057, %v3275
        %3501 = vst [vmem:[%s3302 + $0x10b0] sm:$0xff] %v3276
        %3502 = vst.msk [vmem:[%s3302 + $0x10b8] sm:$0xff] %vm1057, %v3277
        %3503 = vst [vmem:[%s3302 + $0x10c0] sm:$0xff] %v3278
        %3504 = vst.msk [vmem:[%s3302 + $0x10c8] sm:$0xff] %vm1057, %v3279
        %3505 = vst [vmem:[%s3302 + $0x10d0] sm:$0xff] %v3280
        %3506 = vst.msk [vmem:[%s3302 + $0x10d8] sm:$0xff] %vm1057, %v3281
        %3507 = vst [vmem:[%s3302 + $0x10e0] sm:$0xff] %v3282
        %3508 = vst.msk [vmem:[%s3302 + $0x10e8] sm:$0xff] %vm1057, %v3283
        %3509 = vst [vmem:[%s3302 + $0x10f0] sm:$0xff] %v3284
        %3510 = vst.msk [vmem:[%s3302 + $0x10f8] sm:$0xff] %vm1057, %v3285
        %3511 = vst [vmem:[%s3302 + $0x1100] sm:$0xff] %v3286
        %3512 = vst.msk [vmem:[%s3302 + $0x1108] sm:$0xff] %vm1057, %v3287
        %3513 = vst [vmem:[%s3302 + $0x1110] sm:$0xff] %v3288
        %3514 = vst.msk [vmem:[%s3302 + $0x1118] sm:$0xff] %vm1057, %v3289
        %3515 = vst [vmem:[%s3302 + $0x1120] sm:$0xff] %v3290
        %3516 = vst.msk [vmem:[%s3302 + $0x1128] sm:$0xff] %vm1057, %v3291
        %3517 = vst [vmem:[%s3302 + $0x1130] sm:$0xff] %v3292
        %3518 = vst.msk [vmem:[%s3302 + $0x1138] sm:$0xff] %vm1057, %v3293
        %3519 = vst [vmem:[%s3302 + $0x1140] sm:$0xff] %v3294
        %3520 = vst.msk [vmem:[%s3302 + $0x1148] sm:$0xff] %vm1057, %v3295
        %3521 = vst [vmem:[%s3302 + $0x1150] sm:$0xff] %v3296
        %3522 = vst.msk [vmem:[%s3302 + $0x1158] sm:$0xff] %vm1057, %v3297
        %3523 = vst [vmem:[%s3302 + $0x1160] sm:$0xff] %v3298
        %3524 = vst.msk [vmem:[%s3302 + $0x1168] sm:$0xff] %vm1057, %v3299
        %3525 = vst [vmem:[%s3302 + $0x1170] sm:$0xff] %v3300
        %3526 = vst.msk [vmem:[%s3302 + $0x1178] sm:$0xff] %vm1057, %v3301
        %s3527 = sand.u32 %s68, 1
        %s3528 = scalar_lea.sflag [#allocation4], %s3527
        %s3529 = sand.u32 %s68, 1
        %s3530 = smul.addr %s3529, 5376
        %s3531 = scalar_lea.vmem [#allocation5], %s3530
        // Predicated region
        $region29: #{tpu_custom_call.1} parent=23 // pred_check
          %p3532 = pneg %p78
        $region30: #{tpu_custom_call.1} parent=23 // pred_check_branch
          %3534 = sbr.rel (%p3532) target = $region32
        $region31: #{tpu_custom_call.1} parent=23 // pred_region
          %s3535 = smul.u32 4, %s22
          %s3536 = smul.u32 3, %s23
          %s3538 = ssub.s32 86016, 86016
          %3539 = vsyncadd %s3528, %s3538
          %s3540 = smul.addr %s3536, 56
          %s3541 = smul.addr %s3535, 168
          %s3542 = sadd.s32 %s3540, %s3541
          %s3543 = smul.addr %s3542, 128
          %s3544 = scalar_lea.hbm %s1, %s3543
          %s3545 = sshll.u32 %s3531, 4
          %s3546 = int_to_ptr.vmem [resolvable:$true] %s3545
          %3551 = dma.vmem_to_hbm [thread:$0]  %s3546, 86016, %s3544, %s3528, 256, 256, 16
        $region32: #{tpu_custom_call.1} parent=23 // pred_fallthru
          _
      $region24: #{tpu_custom_call.1} parent=5 // pred_fallthru
        _
      %p3552 = scmp.le.s32.totalorder 2, %s13
      // Predicated region
      $region33: #{tpu_custom_call.1} parent=5 // pred_check
        %p3553 = pneg %p3552
      $region34: #{tpu_custom_call.1} parent=5 // pred_check_branch
        %3555 = sbr.rel (%p3553) target = $region36
      $region35: #{tpu_custom_call.1} parent=5 // pred_region
        %s3556 = ssub.s32 %s13, 2
        // Predicated region
        $region37: #{tpu_custom_call.1} parent=35 // pred_check
          %p3557 = pneg %p84
        $region38: #{tpu_custom_call.1} parent=35 // pred_check_branch
          %3559 = sbr.rel (%p3557) target = $region40
        $region39: #{tpu_custom_call.1} parent=35 // pred_region
          %s3560 = sand.u32 %s69, 1
          %s3561 = scalar_lea.sflag [#allocation4], %s3560
          %s3562 = sand.u32 %s69, 1
          %s3563 = smul.addr %s3562, 5376
          %s3564 = scalar_lea.vmem [#allocation5], %s3563
          %3565 = dma.done %s3561, 86016
        $region40: #{tpu_custom_call.1} parent=35 // pred_fallthru
          _
      $region36: #{tpu_custom_call.1} parent=5 // pred_fallthru
        _
    $region6: #{tpu_custom_call.1} parent=1 // loop_footer
      %s17 = sadd.s32 1, %s13
    $region7: #{tpu_custom_call.1} parent=1 // loop_footer_branch
      %12 = sbr.rel target = $region3
    $region8: #{tpu_custom_call.1} parent=1 // loop_exit
      _
    %3566 = vsyncpa [#allocation3], 1
    %s3567 = scalar_lea.sflag [#allocation3], 1
    %3568 = vsyncpa %s3567, 1
    %3569 = vsyncpa [#allocation4], 1
    %s3570 = scalar_lea.sflag [#allocation4], 1
    %3571 = vsyncpa %s3570, 1

</llo_original>
